<compile_context>
chip_gen: v7x
topology: tpu7x:2x2x1
jax: 0.10.0
libtpu: 0.0.40
codegen_flags: <defaults>
</compile_context>

<pallas_src>
import functools

import jax
import jax.numpy as jnp
from jax.experimental import pallas as pl
from jax.experimental.pallas import tpu as pltpu

LANE = 128


def _round_up(x, m):
    return ((x + m - 1) // m) * m


# ----------------------------------------------------------------------------
# Fused kernel: 1x1 conv -> BN(bias) -> SiLU -> 3x3 conv -> BN(bias) -> SiLU
#               -> (+ residual), one image per grid step.
# ----------------------------------------------------------------------------
def _bottleneck_kernel(x_ref, w1_ref, b1_ref, w2_ref, b2_ref, o_ref, slab_ref,
                       *, use_add):
    H, W, cin_p = x_ref.shape          # leading N dim squeezed by BlockSpec
    chid_p = w1_ref.shape[1]
    cout_p = o_ref.shape[-1]
    k3 = 3 * chid_p                    # fat K for the 3x3 matmuls

    # ---- conv1: 1x1 conv (BN scale pre-folded into w1) + bias + SiLU -------
    x2d = x_ref[...].reshape(H * W, cin_p)                         # bf16
    h = jnp.dot(x2d, w1_ref[...], preferred_element_type=jnp.float32)
    h = h + b1_ref[...]                                            # f32 bias
    h = h * jax.nn.sigmoid(h)                                      # SiLU (f32)
    h3 = h.reshape(H, W, chid_p)                                   # (H, W, Chid)

    # ---- im2col column slab: [hid(:, w-1) | hid(:, w) | hid(:, w+1)] -------
    # Column shift is done ONCE per tile here (2 shifted copies), instead of
    # materializing 9 strided windows later.
    zcol = jnp.zeros((H, 1, chid_p), jnp.float32)
    left = jnp.concatenate([zcol, h3[:, :W - 1, :]], axis=1)       # hid[w-1]
    right = jnp.concatenate([h3[:, 1:, :], zcol], axis=1)          # hid[w+1]
    slab = jnp.concatenate([left, h3, right], axis=-1).astype(jnp.bfloat16)

    # Zero only the 2 halo rows (top/bottom); interior overwritten each step.
    zrow = jnp.zeros((1, W, k3), jnp.bfloat16)
    slab_ref[0:1, :, :] = zrow
    slab_ref[H + 1:H + 2, :, :] = zrow
    slab_ref[1:H + 1, :, :] = slab

    # ---- conv2: 3x3 conv as 3 matmuls (K = 3*Chid), sliced only along H ----
    acc = jnp.zeros((H * W, cout_p), jnp.float32)
    for dy in range(3):                                            # static unroll
        lhs = slab_ref[dy:dy + H, :, :].reshape(H * W, k3)         # aligned slice
        acc = acc + jnp.dot(lhs, w2_ref[dy],
                            preferred_element_type=jnp.float32)

    z = acc + b2_ref[...]                                          # BN bias (scale folded)
    z = z * jax.nn.sigmoid(z)                                      # SiLU (f32)
    z = z.reshape(H, W, cout_p)
    if use_add:                                                    # residual shortcut
        z = z + x_ref[...].astype(jnp.float32)
    o_ref[...] = z.astype(o_ref.dtype)


# ----------------------------------------------------------------------------
# Wrapper: NCHW boundary (like PyTorch), NHWC + padded channels inside.
# ----------------------------------------------------------------------------
def bottleneck_forward(x_nchw, params, *, shortcut=True):
    w1, s1, b1, w2, s2, b2 = params
    cin = x_nchw.shape[1]
    hidden = w1.shape[1]
    cout = w2.shape[3]
    use_add = bool(shortcut and cin == cout)
    out_dtype = x_nchw.dtype

    # Fold eval-mode BN scale into the conv weights (per output channel).
    w1f = w1 * s1                                   # (cin, hidden)
    w2f = w2 * s2.reshape(1, 1, 1, cout)            # (3, 3, hidden, cout)

    # Lane-friendly channel padding.
    cin_p = _round_up(cin, LANE)
    chid_p = _round_up(hidden, LANE)
    cout_p = _round_up(cout, LANE)

    # NCHW -> NHWC.  TODO(synk): keep the surrounding model NHWC end-to-end so
    # this transpose (an extra HBM pass) disappears from the hot path.
    x = jnp.transpose(x_nchw, (0, 2, 3, 1))
    N, H, W, _ = x.shape
    x_p = jnp.pad(x, ((0, 0), (0, 0), (0, 0), (0, cin_p - cin))).astype(jnp.bfloat16)

    w1_p = jnp.pad(w1f, ((0, cin_p - cin), (0, chid_p - hidden))).astype(jnp.bfloat16)
    b1_p = jnp.pad(b1, ((0, 0), (0, chid_p - hidden))).astype(jnp.float32)
    # (3,3,Chid,Cout) -> (3, 3*Chid, Cout); K axis blocks are [dx=0 | dx=1 | dx=2],
    # matching the [left | center | right] layout of the in-kernel slab.
    w2_p = jnp.pad(w2f, ((0, 0), (0, 0), (0, chid_p - hidden), (0, cout_p - cout)))
    w2_r = w2_p.reshape(3, 3 * chid_p, cout_p).astype(jnp.bfloat16)
    b2_p = jnp.pad(b2, ((0, 0), (0, cout_p - cout))).astype(jnp.float32)

    kernel = functools.partial(_bottleneck_kernel, use_add=use_add)

    out_p = pl.pallas_call(
        kernel,
        out_shape=jax.ShapeDtypeStruct((N, H, W, cout_p), out_dtype),
        grid_spec=pltpu.PrefetchScalarGridSpec(
            num_scalar_prefetch=0,
            # TODO(synk): for very large feature maps (v7x 64 MiB VMEM) tile the
            # grid as (N, H//TH) with a 1-row recomputed halo for more megacore
            # steps and bounded per-step VMEM.
            grid=(N,),
            in_specs=[
                pl.BlockSpec((None, H, W, cin_p), lambda n: (n, 0, 0, 0)),
                pl.BlockSpec((cin_p, chid_p), lambda n: (0, 0)),
                pl.BlockSpec((1, chid_p), lambda n: (0, 0)),
                pl.BlockSpec((3, 3 * chid_p, cout_p), lambda n: (0, 0, 0)),
                pl.BlockSpec((1, cout_p), lambda n: (0, 0)),
            ],
            out_specs=pl.BlockSpec((None, H, W, cout_p), lambda n: (n, 0, 0, 0)),
            scratch_shapes=[pltpu.VMEM((H + 2, W, 3 * chid_p), jnp.bfloat16)],
        ),
        compiler_params=pltpu.CompilerParams(
            dimension_semantics=("parallel",),
            vmem_limit_bytes=64 * 1024 * 1024,
        ),
    )(x_p, w1_p, b1_p, w2_r, b2_p)

    out = out_p[..., :cout]                          # drop channel padding
    return jnp.transpose(out, (0, 3, 1, 2))          # NHWC -> NCHW


# ----------------------------------------------------------------------------
# Pure-JAX f32 reference (for the in-script sanity check)
# ----------------------------------------------------------------------------
def _ref_forward(x_nchw, params, *, shortcut=True):
    w1, s1, b1, w2, s2, b2 = params
    x = jnp.transpose(x_nchw, (0, 2, 3, 1))
    y = jnp.einsum("nhwc,cd->nhwd", x, w1) * s1[0] + b1[0]
    y = y * jax.nn.sigmoid(y)
    N, H, W, _ = y.shape
    yp = jnp.pad(y, ((0, 0), (1, 1), (1, 1), (0, 0)))
    z = jnp.zeros((N, H, W, w2.shape[3]), jnp.float32)
    for dy in range(3):
        for dx in range(3):
            z = z + jnp.einsum("nhwc,cd->nhwd",
                               yp[:, dy:dy + H, dx:dx + W, :], w2[dy, dx])
    z = z * s2[0] + b2[0]
    z = z * jax.nn.sigmoid(z)
    if shortcut and x.shape[-1] == z.shape[-1]:
        z = z + x
    return jnp.transpose(z, (0, 3, 1, 2))


# ----------------------------------------------------------------------------
# Deterministic parameter construction (mirrors the PyTorch module shapes)
# ----------------------------------------------------------------------------
def make_params(key, in_channels, out_channels, expansion=0.5):
    hidden = int(out_channels * expansion)
    eps = 1e-5
    ks = jax.random.split(key, 10)

    def bn_affine(kg, kb, km, kv, c):
        gamma = 1.0 + 0.1 * jax.random.normal(kg, (c,), jnp.float32)
        beta = 0.1 * jax.random.normal(kb, (c,), jnp.float32)
        mean = 0.1 * jax.random.normal(km, (c,), jnp.float32)
        var = jax.random.uniform(kv, (c,), jnp.float32, 0.5, 1.5)
        scale = gamma / jnp.sqrt(var + eps)
        shift = beta - mean * scale
        return scale.reshape(1, c), shift.reshape(1, c)

    # conv1: PyTorch weight (hidden, in, 1, 1) -> matmul weight (in, hidden)
    w1 = (0.5 * jax.random.normal(ks[0], (hidden, in_channels), jnp.float32)).T
    s1, b1 = bn_affine(ks[1], ks[2], ks[3], ks[4], hidden)

    # conv2: PyTorch weight (out, hidden, 3, 3) -> HWIO (3, 3, hidden, out)
    w2_t = 0.5 * jax.random.normal(ks[5], (out_channels, hidden, 3, 3), jnp.float32)
    w2 = jnp.transpose(w2_t, (2, 3, 1, 0))
    s2, b2 = bn_affine(ks[6], ks[7], ks[8], ks[9], out_channels)

    return (w1, s1, b1, w2, s2, b2)


if __name__ == "__main__":
    key = jax.random.PRNGKey(0)
    k_x, k_p = jax.random.split(key)

    in_channels, out_channels = 4, 4
    N, H, W = 2, 16, 16
    x = jax.random.normal(k_x, (N, in_channels, H, W), jnp.float32)   # NCHW input
    params = make_params(k_p, in_channels, out_channels)

    fwd = jax.jit(functools.partial(bottleneck_forward, shortcut=True))
    out = jax.block_until_ready(fwd(x, params))
    ref = jax.block_until_ready(_ref_forward(x, params, shortcut=True))

    assert out.shape == (N, out_channels, H, W)
    # bf16 matmul operands (f32 accumulation) -> loosened tolerance vs f32 ref.
    assert jnp.allclose(out, ref, rtol=5e-2, atol=5e-2), "mismatch vs reference"

    print("KERNEL_OK")
</pallas_src>

<mosaic_0001>
module attributes {stable_mosaic.version = 11 : i64} {
  func.func @_bottleneck_kernel(%arg0: i32, %arg1: memref<1x16x16x128xbf16, #tpu.memory_space<vmem>>, %arg2: memref<128x128xbf16, #tpu.memory_space<vmem>>, %arg3: memref<1x128xf32, #tpu.memory_space<vmem>>, %arg4: memref<3x384x128xbf16, #tpu.memory_space<vmem>>, %arg5: memref<1x128xf32, #tpu.memory_space<vmem>>, %arg6: memref<1x16x16x128xf32, #tpu.memory_space<vmem>>, %arg7: memref<18x16x384xbf16, #tpu.memory_space<vmem>>) attributes {dimension_semantics = [#tpu.dimension_semantics<parallel>], iteration_bounds = array<i64: 2>, scalar_prefetch = 0 : i64, scratch_operands = 1 : i64, tpu.core_type = #tpu.core_type<tc>, window_params = [{transform_indices = @transform_0, window_bounds = array<i64: 1, 16, 16, 128>}, {pipeline_mode = #tpu.pipeline_mode<synchronous>, transform_indices = @transform_1, window_bounds = array<i64: 128, 128>}, {pipeline_mode = #tpu.pipeline_mode<synchronous>, transform_indices = @transform_2, window_bounds = array<i64: 1, 128>}, {pipeline_mode = #tpu.pipeline_mode<synchronous>, transform_indices = @transform_3, window_bounds = array<i64: 3, 384, 128>}, {pipeline_mode = #tpu.pipeline_mode<synchronous>, transform_indices = @transform_4, window_bounds = array<i64: 1, 128>}, {transform_indices = @transform_5, window_bounds = array<i64: 1, 16, 16, 128>}]} {
    %c0 = arith.constant 0 : index
    %c0_0 = arith.constant 0 : index
    %c0_1 = arith.constant 0 : index
    %c0_2 = arith.constant 0 : index
    %0 = vector.load %arg1[%c0, %c0_0, %c0_1, %c0_2] : memref<1x16x16x128xbf16, #tpu.memory_space<vmem>>, vector<1x16x16x128xbf16>
    %1 = vector.shape_cast %0 : vector<1x16x16x128xbf16> to vector<16x16x128xbf16>
    %2 = vector.shape_cast %1 : vector<16x16x128xbf16> to vector<256x128xbf16>
    %c0_3 = arith.constant 0 : index
    %c0_4 = arith.constant 0 : index
    %3 = vector.load %arg2[%c0_3, %c0_4] : memref<128x128xbf16, #tpu.memory_space<vmem>>, vector<128x128xbf16>
    %cst = arith.constant dense<0.000000e+00> : vector<256x128xf32>
    %4 = tpu.matmul %2, %3, %cst {dimension_numbers = #tpu.dot_dimension_numbers<[1], [0], [0], [1], [0, 0, 1, 1], [], []>} : vector<256x128xbf16>, vector<128x128xbf16>, vector<256x128xf32> -> vector<256x128xf32>
    %c0_5 = arith.constant 0 : index
    %c0_6 = arith.constant 0 : index
    %5 = vector.load %arg3[%c0_5, %c0_6] : memref<1x128xf32, #tpu.memory_space<vmem>>, vector<1x128xf32>
    %6 = vector.broadcast %5 : vector<1x128xf32> to vector<256x128xf32>
    %7 = arith.addf %4, %6 : vector<256x128xf32>
    %8 = arith.negf %7 : vector<256x128xf32>
    %9 = math.exp %8 : vector<256x128xf32>
    %cst_7 = arith.constant 1.000000e+00 : f32
    %10 = vector.broadcast %cst_7 : f32 to vector<256x128xf32>
    %11 = arith.addf %10, %9 : vector<256x128xf32>
    %12 = arith.divf %10, %11 : vector<256x128xf32>
    %13 = arith.mulf %7, %12 : vector<256x128xf32>
    %14 = vector.shape_cast %13 : vector<256x128xf32> to vector<16x16x128xf32>
    %cst_8 = arith.constant 0.000000e+00 : f32
    %15 = vector.broadcast %cst_8 : f32 to vector<16x1x128xf32>
    %16 = vector.extract_strided_slice %14 {offsets = [0, 0, 0], sizes = [16, 15, 128], strides = [1, 1, 1]} : vector<16x16x128xf32> to vector<16x15x128xf32>
    %17 = tpu.concatenate %15, %16 in 1 : vector<16x1x128xf32>, vector<16x15x128xf32> -> vector<16x16x128xf32>
    %18 = vector.extract_strided_slice %14 {offsets = [0, 1, 0], sizes = [16, 15, 128], strides = [1, 1, 1]} : vector<16x16x128xf32> to vector<16x15x128xf32>
    %19 = tpu.concatenate %18, %15 in 1 : vector<16x15x128xf32>, vector<16x1x128xf32> -> vector<16x16x128xf32>
    %20 = tpu.concatenate %17, %14, %19 in 2 : vector<16x16x128xf32>, vector<16x16x128xf32>, vector<16x16x128xf32> -> vector<16x16x384xf32>
    %21 = arith.truncf %20 : vector<16x16x384xf32> to vector<16x16x384xbf16>
    %cst_9 = arith.constant 0.000000e+00 : bf16
    %22 = vector.broadcast %cst_9 : bf16 to vector<1x16x384xbf16>
    %c0_10 = arith.constant 0 : index
    %c0_11 = arith.constant 0 : index
    %c0_12 = arith.constant 0 : index
    %23 = vector.load %arg7[%c0_10, %c0_11, %c0_12] : memref<18x16x384xbf16, #tpu.memory_space<vmem>>, vector<1x16x384xbf16>
    tpu.vector_store %arg7[%c0_10, %c0_11, %c0_12], %22 {strides = array<i32>} : memref<18x16x384xbf16, #tpu.memory_space<vmem>>, vector<1x16x384xbf16>,
    %c17 = arith.constant 17 : index
    %c0_13 = arith.constant 0 : index
    %c0_14 = arith.constant 0 : index
    %24 = vector.load %arg7[%c17, %c0_13, %c0_14] : memref<18x16x384xbf16, #tpu.memory_space<vmem>>, vector<1x16x384xbf16>
    tpu.vector_store %arg7[%c17, %c0_13, %c0_14], %22 {strides = array<i32>} : memref<18x16x384xbf16, #tpu.memory_space<vmem>>, vector<1x16x384xbf16>,
    %c1 = arith.constant 1 : index
    %c0_15 = arith.constant 0 : index
    %c0_16 = arith.constant 0 : index
    %25 = vector.load %arg7[%c1, %c0_15, %c0_16] : memref<18x16x384xbf16, #tpu.memory_space<vmem>>, vector<16x16x384xbf16>
    tpu.vector_store %arg7[%c1, %c0_15, %c0_16], %21 {strides = array<i32>} : memref<18x16x384xbf16, #tpu.memory_space<vmem>>, vector<16x16x384xbf16>,
    %cst_17 = arith.constant 0.000000e+00 : f32
    %26 = vector.broadcast %cst_17 : f32 to vector<256x128xf32>
    %c0_18 = arith.constant 0 : index
    %c0_19 = arith.constant 0 : index
    %c0_20 = arith.constant 0 : index
    %27 = vector.load %arg7[%c0_18, %c0_19, %c0_20] : memref<18x16x384xbf16, #tpu.memory_space<vmem>>, vector<16x16x384xbf16>
    %28 = vector.shape_cast %27 : vector<16x16x384xbf16> to vector<256x384xbf16>
    %c0_21 = arith.constant 0 : index
    %c0_22 = arith.constant 0 : index
    %c0_23 = arith.constant 0 : index
    %29 = vector.load %arg4[%c0_21, %c0_22, %c0_23] : memref<3x384x128xbf16, #tpu.memory_space<vmem>>, vector<1x384x128xbf16>
    %30 = vector.shape_cast %29 : vector<1x384x128xbf16> to vector<384x128xbf16>
    %cst_24 = arith.constant dense<0.000000e+00> : vector<256x128xf32>
    %31 = tpu.matmul %28, %30, %cst_24 {dimension_numbers = #tpu.dot_dimension_numbers<[1], [0], [0], [1], [0, 0, 1, 1], [], []>} : vector<256x384xbf16>, vector<384x128xbf16>, vector<256x128xf32> -> vector<256x128xf32>
    %32 = arith.addf %26, %31 : vector<256x128xf32>
    %c1_25 = arith.constant 1 : index
    %c0_26 = arith.constant 0 : index
    %c0_27 = arith.constant 0 : index
    %33 = vector.load %arg7[%c1_25, %c0_26, %c0_27] : memref<18x16x384xbf16, #tpu.memory_space<vmem>>, vector<16x16x384xbf16>
    %34 = vector.shape_cast %33 : vector<16x16x384xbf16> to vector<256x384xbf16>
    %c1_28 = arith.constant 1 : index
    %c0_29 = arith.constant 0 : index
    %c0_30 = arith.constant 0 : index
    %35 = vector.load %arg4[%c1_28, %c0_29, %c0_30] : memref<3x384x128xbf16, #tpu.memory_space<vmem>>, vector<1x384x128xbf16>
    %36 = vector.shape_cast %35 : vector<1x384x128xbf16> to vector<384x128xbf16>
    %cst_31 = arith.constant dense<0.000000e+00> : vector<256x128xf32>
    %37 = tpu.matmul %34, %36, %cst_31 {dimension_numbers = #tpu.dot_dimension_numbers<[1], [0], [0], [1], [0, 0, 1, 1], [], []>} : vector<256x384xbf16>, vector<384x128xbf16>, vector<256x128xf32> -> vector<256x128xf32>
    %38 = arith.addf %32, %37 : vector<256x128xf32>
    %c2 = arith.constant 2 : index
    %c0_32 = arith.constant 0 : index
    %c0_33 = arith.constant 0 : index
    %39 = vector.load %arg7[%c2, %c0_32, %c0_33] : memref<18x16x384xbf16, #tpu.memory_space<vmem>>, vector<16x16x384xbf16>
    %40 = vector.shape_cast %39 : vector<16x16x384xbf16> to vector<256x384xbf16>
    %c2_34 = arith.constant 2 : index
    %c0_35 = arith.constant 0 : index
    %c0_36 = arith.constant 0 : index
    %41 = vector.load %arg4[%c2_34, %c0_35, %c0_36] : memref<3x384x128xbf16, #tpu.memory_space<vmem>>, vector<1x384x128xbf16>
    %42 = vector.shape_cast %41 : vector<1x384x128xbf16> to vector<384x128xbf16>
    %cst_37 = arith.constant dense<0.000000e+00> : vector<256x128xf32>
    %43 = tpu.matmul %40, %42, %cst_37 {dimension_numbers = #tpu.dot_dimension_numbers<[1], [0], [0], [1], [0, 0, 1, 1], [], []>} : vector<256x384xbf16>, vector<384x128xbf16>, vector<256x128xf32> -> vector<256x128xf32>
    %44 = arith.addf %38, %43 : vector<256x128xf32>
    %c0_38 = arith.constant 0 : index
    %c0_39 = arith.constant 0 : index
    %45 = vector.load %arg5[%c0_38, %c0_39] : memref<1x128xf32, #tpu.memory_space<vmem>>, vector<1x128xf32>
    %46 = vector.broadcast %45 : vector<1x128xf32> to vector<256x128xf32>
    %47 = arith.addf %44, %46 : vector<256x128xf32>
    %48 = arith.negf %47 : vector<256x128xf32>
    %49 = math.exp %48 : vector<256x128xf32>
    %cst_40 = arith.constant 1.000000e+00 : f32
    %50 = vector.broadcast %cst_40 : f32 to vector<256x128xf32>
    %51 = arith.addf %50, %49 : vector<256x128xf32>
    %52 = arith.divf %50, %51 : vector<256x128xf32>
    %53 = arith.mulf %47, %52 : vector<256x128xf32>
    %54 = vector.shape_cast %53 : vector<256x128xf32> to vector<16x16x128xf32>
    %c0_41 = arith.constant 0 : index
    %c0_42 = arith.constant 0 : index
    %c0_43 = arith.constant 0 : index
    %c0_44 = arith.constant 0 : index
    %55 = vector.load %arg1[%c0_41, %c0_42, %c0_43, %c0_44] : memref<1x16x16x128xbf16, #tpu.memory_space<vmem>>, vector<1x16x16x128xbf16>
    %56 = vector.shape_cast %55 : vector<1x16x16x128xbf16> to vector<16x16x128xbf16>
    %57 = arith.extf %56 : vector<16x16x128xbf16> to vector<16x16x128xf32>
    %58 = arith.addf %54, %57 : vector<16x16x128xf32>
    %c0_45 = arith.constant 0 : index
    %c0_46 = arith.constant 0 : index
    %c0_47 = arith.constant 0 : index
    %c0_48 = arith.constant 0 : index
    %59 = vector.load %arg6[%c0_45, %c0_46, %c0_47, %c0_48] : memref<1x16x16x128xf32, #tpu.memory_space<vmem>>, vector<1x16x16x128xf32>
    %60 = vector.shape_cast %59 : vector<1x16x16x128xf32> to vector<16x16x128xf32>
    %61 = vector.shape_cast %58 : vector<16x16x128xf32> to vector<1x16x16x128xf32>
    tpu.vector_store %arg6[%c0_45, %c0_46, %c0_47, %c0_48], %61 {strides = array<i32>} : memref<1x16x16x128xf32, #tpu.memory_space<vmem>>, vector<1x16x16x128xf32>,
    return
  }
  func.func @transform_0(%arg0: i32) -> (i32, i32, i32, i32) {
    %c0_i32 = arith.constant 0 : i32
    %c0_i32_0 = arith.constant 0 : i32
    %c0_i32_1 = arith.constant 0 : i32
    %c0_i32_2 = arith.constant 0 : i32
    return %arg0, %c0_i32, %c0_i32_0, %c0_i32_1 : i32, i32, i32, i32
  }
  func.func @transform_1(%arg0: i32) -> (i32, i32) {
    %c0_i32 = arith.constant 0 : i32
    %c0_i32_0 = arith.constant 0 : i32
    %c0_i32_1 = arith.constant 0 : i32
    return %c0_i32, %c0_i32_0 : i32, i32
  }
  func.func @transform_2(%arg0: i32) -> (i32, i32) {
    %c0_i32 = arith.constant 0 : i32
    %c0_i32_0 = arith.constant 0 : i32
    %c0_i32_1 = arith.constant 0 : i32
    return %c0_i32, %c0_i32_0 : i32, i32
  }
  func.func @transform_3(%arg0: i32) -> (i32, i32, i32) {
    %c0_i32 = arith.constant 0 : i32
    %c0_i32_0 = arith.constant 0 : i32
    %c0_i32_1 = arith.constant 0 : i32
    %c0_i32_2 = arith.constant 0 : i32
    return %c0_i32, %c0_i32_0, %c0_i32_1 : i32, i32, i32
  }
  func.func @transform_4(%arg0: i32) -> (i32, i32) {
    %c0_i32 = arith.constant 0 : i32
    %c0_i32_0 = arith.constant 0 : i32
    %c0_i32_1 = arith.constant 0 : i32
    return %c0_i32, %c0_i32_0 : i32, i32
  }
  func.func @transform_5(%arg0: i32) -> (i32, i32, i32, i32) {
    %c0_i32 = arith.constant 0 : i32
    %c0_i32_0 = arith.constant 0 : i32
    %c0_i32_1 = arith.constant 0 : i32
    %c0_i32_2 = arith.constant 0 : i32
    return %arg0, %c0_i32, %c0_i32_0, %c0_i32_1 : i32, i32, i32, i32
  }
}

</mosaic_0001>

<llo_original>
// kernel: bottleneck_forward.1
$region0: #{bottleneck_forward.1}
  #allocation0 [shape = 'u32[]', space=smem, size = 0x4, offset = 0x4, fixed_abs, tag = 'smem constant byte address 0x4 - core index']
  #allocation1 [shape = 'u32[144,128]{1,0:T(1,128)}', space=vmem, size = 0x12000, scoped, tag = 'internal scratch']
  #allocation2 [shape = 'bf16[18,16,384]{2,1,0:T(16,128)(2,1)}', space=vmem, size = 0x36000, scoped, tag = 'scratch operand']
  %s0 = inlined_call_operand.hbm [shape: bf16[2,16,16,128], index: 0, kind: input, shape index: {}]
  %s1 = inlined_call_operand.hbm [shape: bf16[128,128], index: 1, kind: input, shape index: {}]
  %s2 = inlined_call_operand.hbm [shape: f32[1,128], index: 2, kind: input, shape index: {}]
  %s3 = inlined_call_operand.hbm [shape: bf16[3,384,128], index: 3, kind: input, shape index: {}]
  %s4 = inlined_call_operand.hbm [shape: f32[1,128], index: 4, kind: input, shape index: {}]
  %s5 = inlined_call_operand.hbm [shape: f32[2,16,16,128], index: 5, kind: output, shape index: {}]
  %s6 = sld [smem:[#allocation0]]
  $region73: #{bottleneck_forward.1} parent=0
    _
  %s8 = ssub.s32 1, %s6
  %s9 = scalar_select 0, %s8, %s6
  $region1: #{bottleneck_forward.1} parent=0
    #allocation3 [shape = 'u8[131072]{0}', space=vmem, size = 0x20000, scoped, tag = 'input window, operand 0']
    #allocation4 [shape = 's32[2]{0}', space=sflag, size = 0x8, scoped, tag = 'scoped memory for bottleneck_forward.1']
    #allocation5 [shape = 's32[2]{0}', space=sflag, size = 0x8, scoped, tag = 'scoped memory for bottleneck_forward.1']
    #allocation6 [shape = 'u8[32768]{0}', space=vmem, size = 0x8000, scoped, tag = 'input window, operand 1, single buffered']
    #allocation7 [shape = 's32[1]{0}', space=sflag, size = 0x4, scoped, tag = 'scoped memory for bottleneck_forward.1']
    #allocation8 [shape = 'u8[512]{0}', space=vmem, size = 0x400, scoped, tag = 'input window, operand 2, single buffered']
    #allocation9 [shape = 'u8[294912]{0}', space=vmem, size = 0x48000, scoped, tag = 'input window, operand 3, single buffered']
    #allocation10 [shape = 's32[1]{0}', space=sflag, size = 0x4, scoped, tag = 'scoped memory for bottleneck_forward.1']
    #allocation11 [shape = 'u8[512]{0}', space=vmem, size = 0x400, scoped, tag = 'input window, operand 4, single buffered']
    #allocation12 [shape = 'u8[262144]{0}', space=vmem, size = 0x40000, scoped, tag = 'output window, operand 0']
    %10 = vsyncpa [#allocation4], 0
    %s11 = scalar_lea.sflag [#allocation4], 1
    %12 = vsyncpa %s11, 0
    %13 = vsyncpa [#allocation7], 0
    %14 = vsyncpa [#allocation10], 0
    %15 = vsyncpa [#allocation5], 0
    %s16 = scalar_lea.sflag [#allocation5], 1
    %17 = vsyncpa %s16, 0
    loop: start=0, step=1, limit=4
    $region2: #{bottleneck_forward.1} parent=1 // loop_pre_header
      _
    $region3: #{bottleneck_forward.1} parent=1 // loop_header
      %s19 = sphi 0, %s23
      %p20 = scmp.ge.s32.totalorder %s19, 4
      %s29 = sphi 0, %s31
      %s32 = sphi 0, %s29
      %s33 = sphi 0, %s32
      %s49 = sphi 0, %s33
      %s53 = sphi 0, %s53
      %s55 = sphi 0, %s53
      %s56 = sphi 0, %s55
      %s70 = sphi 0, %s56
      %s74 = sphi 0, %s74
      %s76 = sphi 0, %s74
      %s77 = sphi 0, %s76
      %s91 = sphi 0, %s77
      %s95 = sphi 0, %s95
      %s97 = sphi 0, %s95
      %s98 = sphi 0, %s97
      %s112 = sphi 0, %s98
      %s116 = sphi 0, %s116
      %s118 = sphi 0, %s116
      %s119 = sphi 0, %s118
      %s133 = sphi 0, %s119
      %s139 = sphi 0, %s141
      %s142 = sphi 0, %s139
      %s143 = sphi 0, %s142
      %s159 = sphi 0, %s143
    $region4: #{bottleneck_forward.1} parent=1 // loop_header_branch
      %22 = sbr.rel (%p20) target = $region8
    $region5: #{bottleneck_forward.1} parent=1 // loop_body
      %s24 = ssub.s32 %s19, 1
      %s25 = ssub.s32 %s19, 2
      %s26 = sadd.s32 %s19, 1
      %s27 = ssub.s32 %s19, %s26
      %p28 = scmp.eq.s32.totalorder %s27, 0
      %s30 = sadd.s32 %s29, 1
      %s31 = scalar_select %p28, %s29, %s30
      %p34 = pneg %p28
      %p35 = scmp.eq.s32.totalorder %s19, 1
      %p36 = por %p34, %p35
      %p37 = scmp.ne.s32.totalorder %s29, %s32
      %p38 = scmp.eq.s32.totalorder %s19, 0
      %p39 = por %p37, %p38
      %p40 = scmp.ne.s32.totalorder %s29, %s32
      %p41 = scmp.eq.s32.totalorder %s24, 1
      %p42 = por %p40, %p41
      %p43 = scmp.ne.s32.totalorder %s32, %s33
      %p44 = scmp.eq.s32.totalorder %s24, 0
      %p45 = por %p43, %p44
      %p46 = scmp.ne.s32.totalorder %s32, %s33
      %p47 = scmp.eq.s32.totalorder %s25, 1
      %p48 = por %p46, %p47
      %p50 = scmp.ne.s32.totalorder %s33, %s49
      %p51 = scmp.eq.s32.totalorder %s25, 0
      %p52 = por %p50, %p51
      %s54 = sadd.s32 %s53, 1
      %p57 = scmp.eq.s32.totalorder %s19, 1
      %p58 = scmp.ne.s32.totalorder %s53, %s55
      %p59 = scmp.eq.s32.totalorder %s19, 0
      %p60 = por %p58, %p59
      %p61 = scmp.ne.s32.totalorder %s53, %s55
      %p62 = scmp.eq.s32.totalorder %s24, 1
      %p63 = por %p61, %p62
      %p64 = scmp.ne.s32.totalorder %s55, %s56
      %p65 = scmp.eq.s32.totalorder %s24, 0
      %p66 = por %p64, %p65
      %p67 = scmp.ne.s32.totalorder %s55, %s56
      %p68 = scmp.eq.s32.totalorder %s25, 1
      %p69 = por %p67, %p68
      %p71 = scmp.ne.s32.totalorder %s56, %s70
      %p72 = scmp.eq.s32.totalorder %s25, 0
      %p73 = por %p71, %p72
      %s75 = sadd.s32 %s74, 1
      %p78 = scmp.eq.s32.totalorder %s19, 1
      %p79 = scmp.ne.s32.totalorder %s74, %s76
      %p80 = scmp.eq.s32.totalorder %s19, 0
      %p81 = por %p79, %p80
      %p82 = scmp.ne.s32.totalorder %s74, %s76
      %p83 = scmp.eq.s32.totalorder %s24, 1
      %p84 = por %p82, %p83
      %p85 = scmp.ne.s32.totalorder %s76, %s77
      %p86 = scmp.eq.s32.totalorder %s24, 0
      %p87 = por %p85, %p86
      %p88 = scmp.ne.s32.totalorder %s76, %s77
      %p89 = scmp.eq.s32.totalorder %s25, 1
      %p90 = por %p88, %p89
      %p92 = scmp.ne.s32.totalorder %s77, %s91
      %p93 = scmp.eq.s32.totalorder %s25, 0
      %p94 = por %p92, %p93
      %s96 = sadd.s32 %s95, 1
      %p99 = scmp.eq.s32.totalorder %s19, 1
      %p100 = scmp.ne.s32.totalorder %s95, %s97
      %p101 = scmp.eq.s32.totalorder %s19, 0
      %p102 = por %p100, %p101
      %p103 = scmp.ne.s32.totalorder %s95, %s97
      %p104 = scmp.eq.s32.totalorder %s24, 1
      %p105 = por %p103, %p104
      %p106 = scmp.ne.s32.totalorder %s97, %s98
      %p107 = scmp.eq.s32.totalorder %s24, 0
      %p108 = por %p106, %p107
      %p109 = scmp.ne.s32.totalorder %s97, %s98
      %p110 = scmp.eq.s32.totalorder %s25, 1
      %p111 = por %p109, %p110
      %p113 = scmp.ne.s32.totalorder %s98, %s112
      %p114 = scmp.eq.s32.totalorder %s25, 0
      %p115 = por %p113, %p114
      %s117 = sadd.s32 %s116, 1
      %p120 = scmp.eq.s32.totalorder %s19, 1
      %p121 = scmp.ne.s32.totalorder %s116, %s118
      %p122 = scmp.eq.s32.totalorder %s19, 0
      %p123 = por %p121, %p122
      %p124 = scmp.ne.s32.totalorder %s116, %s118
      %p125 = scmp.eq.s32.totalorder %s24, 1
      %p126 = por %p124, %p125
      %p127 = scmp.ne.s32.totalorder %s118, %s119
      %p128 = scmp.eq.s32.totalorder %s24, 0
      %p129 = por %p127, %p128
      %p130 = scmp.ne.s32.totalorder %s118, %s119
      %p131 = scmp.eq.s32.totalorder %s25, 1
      %p132 = por %p130, %p131
      %p134 = scmp.ne.s32.totalorder %s119, %s133
      %p135 = scmp.eq.s32.totalorder %s25, 0
      %p136 = por %p134, %p135
      %s137 = ssub.s32 %s19, %s26
      %p138 = scmp.eq.s32.totalorder %s137, 0
      %s140 = sadd.s32 %s139, 1
      %s141 = scalar_select %p138, %s139, %s140
      %p144 = pneg %p138
      %p145 = scmp.eq.s32.totalorder %s19, 1
      %p146 = por %p144, %p145
      %p147 = scmp.ne.s32.totalorder %s139, %s142
      %p148 = scmp.eq.s32.totalorder %s19, 0
      %p149 = por %p147, %p148
      %p150 = scmp.ne.s32.totalorder %s139, %s142
      %p151 = scmp.eq.s32.totalorder %s24, 1
      %p152 = por %p150, %p151
      %p153 = scmp.ne.s32.totalorder %s142, %s143
      %p154 = scmp.eq.s32.totalorder %s24, 0
      %p155 = por %p153, %p154
      %p156 = scmp.ne.s32.totalorder %s142, %s143
      %p157 = scmp.eq.s32.totalorder %s25, 1
      %p158 = por %p156, %p157
      %p160 = scmp.ne.s32.totalorder %s143, %s159
      %p161 = scmp.eq.s32.totalorder %s25, 0
      %p162 = por %p160, %p161
      %p163 = scmp.le.s32.totalorder 1, %s19
      %p164 = scmp.lt.s32.totalorder %s19, 3
      %p165 = pnand %p163, %p164
      %p166 = pneg %p165
      // Predicated region
      $region9: #{bottleneck_forward.1} parent=5 // pred_check
        _
      $region10: #{bottleneck_forward.1} parent=5 // pred_check_branch
        %168 = sbr.rel (%p165) target = $region12
      $region11: #{bottleneck_forward.1} parent=5 // pred_region
        %s169 = ssub.s32 %s19, 1
        // Predicated region
        $region13: #{bottleneck_forward.1} parent=11 // pred_check
          %p170 = pneg %p66
        $region14: #{bottleneck_forward.1} parent=11 // pred_check_branch
          %172 = sbr.rel (%p170) target = $region16
        $region15: #{bottleneck_forward.1} parent=11 // pred_region
          %s174 = ssub.s32 1024, 1024
          %175 = vsyncadd [#allocation7], %s174
          %s176 = sshll.u32 [#allocation6], 4
          %s177 = int_to_ptr.vmem [resolvable:$true] %s176
          %182 = dma.hbm_to_vmem [thread:$0]  %s1, 1024, %s177, [#allocation7], 64, 64, 4
        $region16: #{bottleneck_forward.1} parent=11 // pred_fallthru
          _
        // Predicated region
        $region17: #{bottleneck_forward.1} parent=11 // pred_check
          %p183 = pneg %p87
        $region18: #{bottleneck_forward.1} parent=11 // pred_check_branch
          %185 = sbr.rel (%p183) target = $region20
        $region19: #{bottleneck_forward.1} parent=11 // pred_region
          %s187 = ssub.s32 16, 16
          %188 = vsyncadd [#allocation7], %s187
          %s190 = sshll.u32 [#allocation8], 4
          %s191 = int_to_ptr.vmem [resolvable:$true] %s190
          %193 = dma.hbm_to_vmem [thread:$0]  %s2, 16, %s191, [#allocation7]
        $region20: #{bottleneck_forward.1} parent=11 // pred_fallthru
          _
        // Predicated region
        $region21: #{bottleneck_forward.1} parent=11 // pred_check
          %p194 = pneg %p108
        $region22: #{bottleneck_forward.1} parent=11 // pred_check_branch
          %196 = sbr.rel (%p194) target = $region24
        $region23: #{bottleneck_forward.1} parent=11 // pred_region
          %s198 = ssub.s32 9216, 9216
          %199 = vsyncadd [#allocation10], %s198
          %s200 = sshll.u32 [#allocation9], 4
          %s201 = int_to_ptr.vmem [resolvable:$true] %s200
          %206 = dma.hbm_to_vmem [thread:$0]  %s3, 9216, %s201, [#allocation10], 64, 64, 4
        $region24: #{bottleneck_forward.1} parent=11 // pred_fallthru
          _
        // Predicated region
        $region25: #{bottleneck_forward.1} parent=11 // pred_check
          %p207 = pneg %p129
        $region26: #{bottleneck_forward.1} parent=11 // pred_check_branch
          %209 = sbr.rel (%p207) target = $region28
        $region27: #{bottleneck_forward.1} parent=11 // pred_region
          %s211 = ssub.s32 16, 16
          %212 = vsyncadd [#allocation10], %s211
          %s214 = sshll.u32 [#allocation11], 4
          %s215 = int_to_ptr.vmem [resolvable:$true] %s214
          %217 = dma.hbm_to_vmem [thread:$0]  %s4, 16, %s215, [#allocation10]
        $region28: #{bottleneck_forward.1} parent=11 // pred_fallthru
          _
      $region12: #{bottleneck_forward.1} parent=5 // pred_fallthru
        _
      %p218 = scmp.lt.s32.totalorder %s19, 2
      // Predicated region
      $region29: #{bottleneck_forward.1} parent=5 // pred_check
        %p219 = pneg %p218
      $region30: #{bottleneck_forward.1} parent=5 // pred_check_branch
        %221 = sbr.rel (%p219) target = $region32
      $region31: #{bottleneck_forward.1} parent=5 // pred_region
        // Predicated region
        $region33: #{bottleneck_forward.1} parent=31 // pred_check
          %p222 = pneg %p39
        $region34: #{bottleneck_forward.1} parent=31 // pred_check_branch
          %224 = sbr.rel (%p222) target = $region36
        $region35: #{bottleneck_forward.1} parent=31 // pred_region
          %s225 = sand.u32 %s29, 1
          %s226 = scalar_lea.sflag [#allocation4], %s225
          %s227 = sand.u32 %s29, 1
          %s228 = smul.addr %s227, 128
          %s229 = scalar_lea.vmem [#allocation3], %s228
          %s231 = ssub.s32 2048, 2048
          %232 = vsyncadd %s226, %s231
          %s233 = smul.addr %s19, 32
          %s234 = smul.addr %s233, 64
          %s235 = scalar_lea.hbm %s0, %s234
          %s236 = sshll.u32 %s229, 4
          %s237 = int_to_ptr.vmem [resolvable:$true] %s236
          %242 = dma.hbm_to_vmem [thread:$0]  %s235, 2048, %s237, %s226, 64, 64, 4
        $region36: #{bottleneck_forward.1} parent=31 // pred_fallthru
          _
      $region32: #{bottleneck_forward.1} parent=5 // pred_fallthru
        _
      %p243 = scmp.le.s32.totalorder 1, %s19
      %p244 = scmp.lt.s32.totalorder %s19, 3
      %p245 = pnand %p243, %p244
      %p246 = pneg %p245
      // Predicated region
      $region37: #{bottleneck_forward.1} parent=5 // pred_check
        _
      $region38: #{bottleneck_forward.1} parent=5 // pred_check_branch
        %248 = sbr.rel (%p245) target = $region40
      $region39: #{bottleneck_forward.1} parent=5 // pred_region
        %s249 = ssub.s32 %s19, 1
        %s250 = sand.u32 %s32, 1
        %s251 = scalar_lea.sflag [#allocation4], %s250
        %s252 = sand.u32 %s32, 1
        %s253 = smul.addr %s252, 128
        %s254 = scalar_lea.vmem [#allocation3], %s253
        // Predicated region
        $region41: #{bottleneck_forward.1} parent=39 // pred_check
          %p255 = pneg %p45
        $region42: #{bottleneck_forward.1} parent=39 // pred_check_branch
          %257 = sbr.rel (%p255) target = $region44
        $region43: #{bottleneck_forward.1} parent=39 // pred_region
          %258 = dma.done %s251, 2048
        $region44: #{bottleneck_forward.1} parent=39 // pred_fallthru
          _
        // Predicated region
        $region45: #{bottleneck_forward.1} parent=39 // pred_check
          %p259 = pneg %p66
        $region46: #{bottleneck_forward.1} parent=39 // pred_check_branch
          %261 = sbr.rel (%p259) target = $region48
        $region47: #{bottleneck_forward.1} parent=39 // pred_region
          %262 = dma.done [#allocation7], 1024
        $region48: #{bottleneck_forward.1} parent=39 // pred_fallthru
          _
        // Predicated region
        $region49: #{bottleneck_forward.1} parent=39 // pred_check
          %p263 = pneg %p87
        $region50: #{bottleneck_forward.1} parent=39 // pred_check_branch
          %265 = sbr.rel (%p263) target = $region52
        $region51: #{bottleneck_forward.1} parent=39 // pred_region
          %266 = dma.done [#allocation7], 16
        $region52: #{bottleneck_forward.1} parent=39 // pred_fallthru
          _
        // Predicated region
        $region53: #{bottleneck_forward.1} parent=39 // pred_check
          %p267 = pneg %p108
        $region54: #{bottleneck_forward.1} parent=39 // pred_check_branch
          %269 = sbr.rel (%p267) target = $region56
        $region55: #{bottleneck_forward.1} parent=39 // pred_region
          %270 = dma.done [#allocation10], 9216
        $region56: #{bottleneck_forward.1} parent=39 // pred_fallthru
          _
        // Predicated region
        $region57: #{bottleneck_forward.1} parent=39 // pred_check
          %p271 = pneg %p129
        $region58: #{bottleneck_forward.1} parent=39 // pred_check_branch
          %273 = sbr.rel (%p271) target = $region60
        $region59: #{bottleneck_forward.1} parent=39 // pred_region
          %274 = dma.done [#allocation10], 16
        $region60: #{bottleneck_forward.1} parent=39 // pred_fallthru
          _
        %s275 = sand.u32 %s32, 1
        %s276 = scalar_lea.sflag [#allocation4], %s275
        %s277 = sand.u32 %s32, 1
        %s278 = smul.addr %s277, 128
        %s279 = scalar_lea.vmem [#allocation3], %s278
        %p280 = pneg %p45
        %p281 = pneg %p42
        %p282 = pneg %p66
        %p283 = pneg %p63
        %p284 = pneg %p87
        %p285 = pneg %p84
        %p286 = pneg %p108
        %p287 = pneg %p105
        %p288 = pneg %p129
        %p289 = pneg %p126
        %p290 = pneg %p155
        %p291 = pneg %p152
        %s292 = sand.u32 %s142, 1
        %s293 = scalar_lea.sflag [#allocation5], %s292
        %s294 = sand.u32 %s142, 1
        %s295 = smul.addr %s294, 256
        %s296 = scalar_lea.vmem [#allocation12], %s295
        %v298 = vld [vmem:[%s254] sm:$0xf]
        %v299 = vld [vmem:[%s254 + $0x4] sm:$0xf]
        %v300 = vld [vmem:[%s254 + $0x8] sm:$0xf]
        %v301 = vld [vmem:[%s254 + $0xc] sm:$0xf]
        %v302 = vld [vmem:[%s254 + $0x10] sm:$0xf]
        %v303 = vld [vmem:[%s254 + $0x14] sm:$0xf]
        %v304 = vld [vmem:[%s254 + $0x18] sm:$0xf]
        %v305 = vld [vmem:[%s254 + $0x1c] sm:$0xf]
        %v306 = vld [vmem:[%s254 + $0x20] sm:$0xf]
        %v307 = vld [vmem:[%s254 + $0x24] sm:$0xf]
        %v308 = vld [vmem:[%s254 + $0x28] sm:$0xf]
        %v309 = vld [vmem:[%s254 + $0x2c] sm:$0xf]
        %v310 = vld [vmem:[%s254 + $0x30] sm:$0xf]
        %v311 = vld [vmem:[%s254 + $0x34] sm:$0xf]
        %v312 = vld [vmem:[%s254 + $0x38] sm:$0xf]
        %v313 = vld [vmem:[%s254 + $0x3c] sm:$0xf]
        %v314 = vld [vmem:[%s254 + $0x40] sm:$0xf]
        %v315 = vld [vmem:[%s254 + $0x44] sm:$0xf]
        %v316 = vld [vmem:[%s254 + $0x48] sm:$0xf]
        %v317 = vld [vmem:[%s254 + $0x4c] sm:$0xf]
        %v318 = vld [vmem:[%s254 + $0x50] sm:$0xf]
        %v319 = vld [vmem:[%s254 + $0x54] sm:$0xf]
        %v320 = vld [vmem:[%s254 + $0x58] sm:$0xf]
        %v321 = vld [vmem:[%s254 + $0x5c] sm:$0xf]
        %v322 = vld [vmem:[%s254 + $0x60] sm:$0xf]
        %v323 = vld [vmem:[%s254 + $0x64] sm:$0xf]
        %v324 = vld [vmem:[%s254 + $0x68] sm:$0xf]
        %v325 = vld [vmem:[%s254 + $0x6c] sm:$0xf]
        %v326 = vld [vmem:[%s254 + $0x70] sm:$0xf]
        %v327 = vld [vmem:[%s254 + $0x74] sm:$0xf]
        %v328 = vld [vmem:[%s254 + $0x78] sm:$0xf]
        %v329 = vld [vmem:[%s254 + $0x7c] sm:$0xf]
        %v330 = vld [vmem:[#allocation6] sm:$0xf]
        %v331 = vld [vmem:[#allocation6 + $0x4] sm:$0xf]
        %v332 = vld [vmem:[#allocation6 + $0x8] sm:$0xf]
        %v333 = vld [vmem:[#allocation6 + $0xc] sm:$0xf]
        %v334 = vld [vmem:[#allocation6 + $0x10] sm:$0xf]
        %v335 = vld [vmem:[#allocation6 + $0x14] sm:$0xf]
        %v336 = vld [vmem:[#allocation6 + $0x18] sm:$0xf]
        %v337 = vld [vmem:[#allocation6 + $0x1c] sm:$0xf]
        %v338 = vld [vmem:[#allocation6 + $0x20] sm:$0xf]
        %v339 = vld [vmem:[#allocation6 + $0x24] sm:$0xf]
        %v340 = vld [vmem:[#allocation6 + $0x28] sm:$0xf]
        %v341 = vld [vmem:[#allocation6 + $0x2c] sm:$0xf]
        %v342 = vld [vmem:[#allocation6 + $0x30] sm:$0xf]
        %v343 = vld [vmem:[#allocation6 + $0x34] sm:$0xf]
        %v344 = vld [vmem:[#allocation6 + $0x38] sm:$0xf]
        %v345 = vld [vmem:[#allocation6 + $0x3c] sm:$0xf]
        %v346 = vld [vmem:[#allocation8] sm:$0x1]
        %v348 = vlaneseq
        %v349 = vshrl.u32 %v348, 7
        %v350 = vsub.s32 0, %v349
        %v351 = vrot.slane %v346, %v350
        %v385 = vunpack.c.l.b16 %v298
        %v386 = vunpack.c.l.b16 %v299
        %v387 = vunpack.c.l.b16 %v300
        %v388 = vunpack.c.l.b16 %v301
        %v389 = vunpack.c.l.b16 %v302
        %v390 = vunpack.c.l.b16 %v303
        %v391 = vunpack.c.l.b16 %v304
        %v392 = vunpack.c.l.b16 %v305
        %v393 = vunpack.c.l.b16 %v306
        %v394 = vunpack.c.l.b16 %v307
        %v395 = vunpack.c.l.b16 %v308
        %v396 = vunpack.c.l.b16 %v309
        %v397 = vunpack.c.l.b16 %v310
        %v398 = vunpack.c.l.b16 %v311
        %v399 = vunpack.c.l.b16 %v312
        %v400 = vunpack.c.l.b16 %v313
        %v401 = vunpack.c.l.b16 %v314
        %v402 = vunpack.c.l.b16 %v315
        %v403 = vunpack.c.l.b16 %v316
        %v404 = vunpack.c.l.b16 %v317
        %v405 = vunpack.c.l.b16 %v318
        %v406 = vunpack.c.l.b16 %v319
        %v407 = vunpack.c.l.b16 %v320
        %v408 = vunpack.c.l.b16 %v321
        %v409 = vunpack.c.l.b16 %v322
        %v410 = vunpack.c.l.b16 %v323
        %v411 = vunpack.c.l.b16 %v324
        %v412 = vunpack.c.l.b16 %v325
        %v413 = vunpack.c.l.b16 %v326
        %v414 = vunpack.c.l.b16 %v327
        %v415 = vunpack.c.l.b16 %v328
        %v416 = vunpack.c.l.b16 %v329
        %v417 = vpack.c.b16 %v386, %v385
        %v418 = vpack.c.b16 %v388, %v387
        %v419 = vpack.c.b16 %v390, %v389
        %v420 = vpack.c.b16 %v392, %v391
        %v421 = vpack.c.b16 %v394, %v393
        %v422 = vpack.c.b16 %v396, %v395
        %v423 = vpack.c.b16 %v398, %v397
        %v424 = vpack.c.b16 %v400, %v399
        %v425 = vpack.c.b16 %v402, %v401
        %v426 = vpack.c.b16 %v404, %v403
        %v427 = vpack.c.b16 %v406, %v405
        %v428 = vpack.c.b16 %v408, %v407
        %v429 = vpack.c.b16 %v410, %v409
        %v430 = vpack.c.b16 %v412, %v411
        %v431 = vpack.c.b16 %v414, %v413
        %v432 = vpack.c.b16 %v416, %v415
        %v465 = vunpack.c.l.b16 %v330
        %v466 = vunpack.c.l.b16 %v331
        %v467 = vunpack.c.l.b16 %v332
        %v468 = vunpack.c.l.b16 %v333
        %v469 = vunpack.c.l.b16 %v334
        %v470 = vunpack.c.l.b16 %v335
        %v471 = vunpack.c.l.b16 %v336
        %v472 = vunpack.c.l.b16 %v337
        %v473 = vunpack.c.l.b16 %v338
        %v474 = vunpack.c.l.b16 %v339
        %v475 = vunpack.c.l.b16 %v340
        %v476 = vunpack.c.l.b16 %v341
        %v477 = vunpack.c.l.b16 %v342
        %v478 = vunpack.c.l.b16 %v343
        %v479 = vunpack.c.l.b16 %v344
        %v480 = vunpack.c.l.b16 %v345
        %v481 = vpack.c.b16 %v466, %v465
        %v482 = vpack.c.b16 %v468, %v467
        %v483 = vpack.c.b16 %v470, %v469
        %v484 = vpack.c.b16 %v472, %v471
        %v485 = vpack.c.b16 %v474, %v473
        %v486 = vpack.c.b16 %v476, %v475
        %v487 = vpack.c.b16 %v478, %v477
        %v488 = vpack.c.b16 %v480, %v479
        %497 = vmatprep.subr.bf16.mxu0 0
        %498 = vmatpush1.bf16.msra.mxu0 %v481
        %499 = vmatprep.subr.bf16.mxu0 0
        %500 = vmatpush1.bf16.msra.mxu0 %v482
        %501 = vmatprep.subr.bf16.mxu0 0
        %502 = vmatpush1.bf16.msra.mxu0 %v483
        %503 = vmatprep.subr.bf16.mxu0 0
        %504 = vmatpush1.bf16.msra.mxu0 %v484
        %505 = vmatprep.subr.bf16.mxu0 0
        %506 = vmatpush1.bf16.msra.mxu0 %v485
        %507 = vmatprep.subr.bf16.mxu0 0
        %508 = vmatpush1.bf16.msra.mxu0 %v486
        %509 = vmatprep.subr.bf16.mxu0 0
        %510 = vmatpush1.bf16.msra.mxu0 %v487
        %511 = vmatprep.subr.bf16.mxu0 0
        %512 = vmatpush1.bf16.msra.mxu0 %v488
        %513 = vmatprep.subr.bf16.mxu0 0
        %514 = vmatpush1.bf16.msra.mxu0 0
        %515 = vmatprep.subr.bf16.mxu0 0
        %516 = vmatpush1.bf16.msra.mxu0 0
        %517 = vmatprep.subr.bf16.mxu0 0
        %518 = vmatpush1.bf16.msra.mxu0 0
        %519 = vmatprep.subr.bf16.mxu0 0
        %520 = vmatpush1.bf16.msra.mxu0 0
        %521 = vmatprep.subr.bf16.mxu0 0
        %522 = vmatpush1.bf16.msra.mxu0 0
        %523 = vmatprep.subr.bf16.mxu0 0
        %524 = vmatpush1.bf16.msra.mxu0 0
        %525 = vmatprep.subr.bf16.mxu0 0
        %526 = vmatpush1.bf16.msra.mxu0 0
        %527 = vmatprep.subr.bf16.mxu0 0
        %528 = vmatpush1.bf16.msra.mxu0 0
        %529 = vmatprep.mubr.bf16.mxu0 0
        %530 = vmatmul.mubr.bf16.gmra.mrb[0].mxu0 %v417
        %v531 = vpop.f32.mrb[0].mxu0
        %v532 = vadd.f32 %v351, %v531
        %v533 = vpop.f32.mrb[0].mxu0
        %v534 = vpop.f32.mrb[0].mxu0
        %v535 = vadd.f32 %v351, %v534
        %v536 = vpop.f32.mrb[0].mxu0
        %537 = vmatprep.mubr.bf16.mxu0 0
        %538 = vmatmul.mubr.bf16.gmra.mrb[0].mxu0 %v418
        %v539 = vpop.f32.mrb[0].mxu0
        %v540 = vadd.f32 %v351, %v539
        %v541 = vpop.f32.mrb[0].mxu0
        %v542 = vpop.f32.mrb[0].mxu0
        %v543 = vadd.f32 %v351, %v542
        %v544 = vpop.f32.mrb[0].mxu0
        %545 = vmatprep.mubr.bf16.mxu0 0
        %546 = vmatmul.mubr.bf16.gmra.mrb[0].mxu0 %v419
        %v547 = vpop.f32.mrb[0].mxu0
        %v548 = vadd.f32 %v351, %v547
        %v549 = vpop.f32.mrb[0].mxu0
        %v550 = vpop.f32.mrb[0].mxu0
        %v551 = vadd.f32 %v351, %v550
        %v552 = vpop.f32.mrb[0].mxu0
        %553 = vmatprep.mubr.bf16.mxu0 0
        %554 = vmatmul.mubr.bf16.gmra.mrb[0].mxu0 %v420
        %v555 = vpop.f32.mrb[0].mxu0
        %v556 = vadd.f32 %v351, %v555
        %v557 = vpop.f32.mrb[0].mxu0
        %v558 = vpop.f32.mrb[0].mxu0
        %v559 = vadd.f32 %v351, %v558
        %v560 = vpop.f32.mrb[0].mxu0
        %561 = vmatprep.mubr.bf16.mxu0 0
        %562 = vmatmul.mubr.bf16.gmra.mrb[0].mxu0 %v421
        %v563 = vpop.f32.mrb[0].mxu0
        %v564 = vadd.f32 %v351, %v563
        %v565 = vpop.f32.mrb[0].mxu0
        %v566 = vpop.f32.mrb[0].mxu0
        %v567 = vadd.f32 %v351, %v566
        %v568 = vpop.f32.mrb[0].mxu0
        %569 = vmatprep.mubr.bf16.mxu0 0
        %570 = vmatmul.mubr.bf16.gmra.mrb[0].mxu0 %v422
        %v571 = vpop.f32.mrb[0].mxu0
        %v572 = vadd.f32 %v351, %v571
        %v573 = vpop.f32.mrb[0].mxu0
        %v574 = vpop.f32.mrb[0].mxu0
        %v575 = vadd.f32 %v351, %v574
        %v576 = vpop.f32.mrb[0].mxu0
        %577 = vmatprep.mubr.bf16.mxu0 0
        %578 = vmatmul.mubr.bf16.gmra.mrb[0].mxu0 %v423
        %v579 = vpop.f32.mrb[0].mxu0
        %v580 = vadd.f32 %v351, %v579
        %v581 = vpop.f32.mrb[0].mxu0
        %v582 = vpop.f32.mrb[0].mxu0
        %v583 = vadd.f32 %v351, %v582
        %v584 = vpop.f32.mrb[0].mxu0
        %585 = vmatprep.mubr.bf16.mxu0 0
        %586 = vmatmul.mubr.bf16.gmra.mrb[0].mxu0 %v424
        %v587 = vpop.f32.mrb[0].mxu0
        %v588 = vadd.f32 %v351, %v587
        %v589 = vpop.f32.mrb[0].mxu0
        %v590 = vpop.f32.mrb[0].mxu0
        %v591 = vadd.f32 %v351, %v590
        %v592 = vpop.f32.mrb[0].mxu0
        %593 = vmatprep.mubr.bf16.mxu0 0
        %594 = vmatmul.mubr.bf16.gmra.mrb[0].mxu0 %v425
        %v595 = vpop.f32.mrb[0].mxu0
        %v596 = vadd.f32 %v351, %v595
        %v597 = vpop.f32.mrb[0].mxu0
        %v598 = vpop.f32.mrb[0].mxu0
        %v599 = vadd.f32 %v351, %v598
        %v600 = vpop.f32.mrb[0].mxu0
        %601 = vmatprep.mubr.bf16.mxu0 0
        %602 = vmatmul.mubr.bf16.gmra.mrb[0].mxu0 %v426
        %v603 = vpop.f32.mrb[0].mxu0
        %v604 = vadd.f32 %v351, %v603
        %v605 = vpop.f32.mrb[0].mxu0
        %v606 = vpop.f32.mrb[0].mxu0
        %v607 = vadd.f32 %v351, %v606
        %v608 = vpop.f32.mrb[0].mxu0
        %609 = vmatprep.mubr.bf16.mxu0 0
        %610 = vmatmul.mubr.bf16.gmra.mrb[0].mxu0 %v427
        %v611 = vpop.f32.mrb[0].mxu0
        %v612 = vadd.f32 %v351, %v611
        %v613 = vpop.f32.mrb[0].mxu0
        %v614 = vpop.f32.mrb[0].mxu0
        %v615 = vadd.f32 %v351, %v614
        %v616 = vpop.f32.mrb[0].mxu0
        %617 = vmatprep.mubr.bf16.mxu0 0
        %618 = vmatmul.mubr.bf16.gmra.mrb[0].mxu0 %v428
        %v619 = vpop.f32.mrb[0].mxu0
        %v620 = vadd.f32 %v351, %v619
        %v621 = vpop.f32.mrb[0].mxu0
        %v622 = vpop.f32.mrb[0].mxu0
        %v623 = vadd.f32 %v351, %v622
        %v624 = vpop.f32.mrb[0].mxu0
        %625 = vmatprep.mubr.bf16.mxu0 0
        %626 = vmatmul.mubr.bf16.gmra.mrb[0].mxu0 %v429
        %v627 = vpop.f32.mrb[0].mxu0
        %v628 = vadd.f32 %v351, %v627
        %v629 = vpop.f32.mrb[0].mxu0
        %v630 = vpop.f32.mrb[0].mxu0
        %v631 = vadd.f32 %v351, %v630
        %v632 = vpop.f32.mrb[0].mxu0
        %633 = vmatprep.mubr.bf16.mxu0 0
        %634 = vmatmul.mubr.bf16.gmra.mrb[0].mxu0 %v430
        %v635 = vpop.f32.mrb[0].mxu0
        %v636 = vadd.f32 %v351, %v635
        %v637 = vpop.f32.mrb[0].mxu0
        %v638 = vpop.f32.mrb[0].mxu0
        %v639 = vadd.f32 %v351, %v638
        %v640 = vpop.f32.mrb[0].mxu0
        %641 = vmatprep.mubr.bf16.mxu0 0
        %642 = vmatmul.mubr.bf16.gmra.mrb[0].mxu0 %v431
        %v643 = vpop.f32.mrb[0].mxu0
        %v644 = vadd.f32 %v351, %v643
        %v645 = vpop.f32.mrb[0].mxu0
        %v646 = vpop.f32.mrb[0].mxu0
        %v647 = vadd.f32 %v351, %v646
        %v648 = vpop.f32.mrb[0].mxu0
        %649 = vmatprep.mubr.bf16.mxu0 0
        %650 = vmatmul.mubr.bf16.gmra.mrb[0].mxu0 %v432
        %v651 = vpop.f32.mrb[0].mxu0
        %v652 = vadd.f32 %v351, %v651
        %v653 = vpop.f32.mrb[0].mxu0
        %v654 = vpop.f32.mrb[0].mxu0
        %v655 = vadd.f32 %v351, %v654
        %v656 = vpop.f32.mrb[0].mxu0
        %657 = vdwg.mxu0
        %v658 = vxor.u32 %v532, 2147483648
        %v659 = vxor.u32 %v535, 2147483648
        %v660 = vxor.u32 %v540, 2147483648
        %v661 = vxor.u32 %v543, 2147483648
        %v662 = vxor.u32 %v548, 2147483648
        %v663 = vxor.u32 %v551, 2147483648
        %v664 = vxor.u32 %v556, 2147483648
        %v665 = vxor.u32 %v559, 2147483648
        %v666 = vxor.u32 %v564, 2147483648
        %v667 = vxor.u32 %v567, 2147483648
        %v668 = vxor.u32 %v572, 2147483648
        %v669 = vxor.u32 %v575, 2147483648
        %v670 = vxor.u32 %v580, 2147483648
        %v671 = vxor.u32 %v583, 2147483648
        %v672 = vxor.u32 %v588, 2147483648
        %v673 = vxor.u32 %v591, 2147483648
        %v674 = vxor.u32 %v596, 2147483648
        %v675 = vxor.u32 %v599, 2147483648
        %v676 = vxor.u32 %v604, 2147483648
        %v677 = vxor.u32 %v607, 2147483648
        %v678 = vxor.u32 %v612, 2147483648
        %v679 = vxor.u32 %v615, 2147483648
        %v680 = vxor.u32 %v620, 2147483648
        %v681 = vxor.u32 %v623, 2147483648
        %v682 = vxor.u32 %v628, 2147483648
        %v683 = vxor.u32 %v631, 2147483648
        %v684 = vxor.u32 %v636, 2147483648
        %v685 = vxor.u32 %v639, 2147483648
        %v686 = vxor.u32 %v644, 2147483648
        %v687 = vxor.u32 %v647, 2147483648
        %v688 = vxor.u32 %v652, 2147483648
        %v689 = vxor.u32 %v655, 2147483648
        %v690 = vmul.f32 %v658, 1.442695
        %v691 = vpow.pop %v690
        %v692 = vmul.f32 %v659, 1.442695
        %v693 = vpow.pop %v692
        %v694 = vmul.f32 %v660, 1.442695
        %v695 = vpow.pop %v694
        %v696 = vmul.f32 %v661, 1.442695
        %v697 = vpow.pop %v696
        %v698 = vmul.f32 %v662, 1.442695
        %v699 = vpow.pop %v698
        %v700 = vmul.f32 %v663, 1.442695
        %v701 = vpow.pop %v700
        %v702 = vmul.f32 %v664, 1.442695
        %v703 = vpow.pop %v702
        %v704 = vmul.f32 %v665, 1.442695
        %v705 = vpow.pop %v704
        %v706 = vmul.f32 %v666, 1.442695
        %v707 = vpow.pop %v706
        %v708 = vmul.f32 %v667, 1.442695
        %v709 = vpow.pop %v708
        %v710 = vmul.f32 %v668, 1.442695
        %v711 = vpow.pop %v710
        %v712 = vmul.f32 %v669, 1.442695
        %v713 = vpow.pop %v712
        %v714 = vmul.f32 %v670, 1.442695
        %v715 = vpow.pop %v714
        %v716 = vmul.f32 %v671, 1.442695
        %v717 = vpow.pop %v716
        %v718 = vmul.f32 %v672, 1.442695
        %v719 = vpow.pop %v718
        %v720 = vmul.f32 %v673, 1.442695
        %v721 = vpow.pop %v720
        %v722 = vmul.f32 %v674, 1.442695
        %v723 = vpow.pop %v722
        %v724 = vmul.f32 %v675, 1.442695
        %v725 = vpow.pop %v724
        %v726 = vmul.f32 %v676, 1.442695
        %v727 = vpow.pop %v726
        %v728 = vmul.f32 %v677, 1.442695
        %v729 = vpow.pop %v728
        %v730 = vmul.f32 %v678, 1.442695
        %v731 = vpow.pop %v730
        %v732 = vmul.f32 %v679, 1.442695
        %v733 = vpow.pop %v732
        %v734 = vmul.f32 %v680, 1.442695
        %v735 = vpow.pop %v734
        %v736 = vmul.f32 %v681, 1.442695
        %v737 = vpow.pop %v736
        %v738 = vmul.f32 %v682, 1.442695
        %v739 = vpow.pop %v738
        %v740 = vmul.f32 %v683, 1.442695
        %v741 = vpow.pop %v740
        %v742 = vmul.f32 %v684, 1.442695
        %v743 = vpow.pop %v742
        %v744 = vmul.f32 %v685, 1.442695
        %v745 = vpow.pop %v744
        %v746 = vmul.f32 %v686, 1.442695
        %v747 = vpow.pop %v746
        %v748 = vmul.f32 %v687, 1.442695
        %v749 = vpow.pop %v748
        %v750 = vmul.f32 %v688, 1.442695
        %v751 = vpow.pop %v750
        %v752 = vmul.f32 %v689, 1.442695
        %v753 = vpow.pop %v752
        %v754 = vadd.f32 %v691, 1.0
        %v755 = vadd.f32 %v693, 1.0
        %v756 = vadd.f32 %v695, 1.0
        %v757 = vadd.f32 %v697, 1.0
        %v758 = vadd.f32 %v699, 1.0
        %v759 = vadd.f32 %v701, 1.0
        %v760 = vadd.f32 %v703, 1.0
        %v761 = vadd.f32 %v705, 1.0
        %v762 = vadd.f32 %v707, 1.0
        %v763 = vadd.f32 %v709, 1.0
        %v764 = vadd.f32 %v711, 1.0
        %v765 = vadd.f32 %v713, 1.0
        %v766 = vadd.f32 %v715, 1.0
        %v767 = vadd.f32 %v717, 1.0
        %v768 = vadd.f32 %v719, 1.0
        %v769 = vadd.f32 %v721, 1.0
        %v770 = vadd.f32 %v723, 1.0
        %v771 = vadd.f32 %v725, 1.0
        %v772 = vadd.f32 %v727, 1.0
        %v773 = vadd.f32 %v729, 1.0
        %v774 = vadd.f32 %v731, 1.0
        %v775 = vadd.f32 %v733, 1.0
        %v776 = vadd.f32 %v735, 1.0
        %v777 = vadd.f32 %v737, 1.0
        %v778 = vadd.f32 %v739, 1.0
        %v779 = vadd.f32 %v741, 1.0
        %v780 = vadd.f32 %v743, 1.0
        %v781 = vadd.f32 %v745, 1.0
        %v782 = vadd.f32 %v747, 1.0
        %v783 = vadd.f32 %v749, 1.0
        %v784 = vadd.f32 %v751, 1.0
        %v785 = vadd.f32 %v753, 1.0
        %v786 = vrcp.pop %v754
        %v787 = vmul.f32 1.0, %v786
        %v788 = vrcp.pop %v755
        %v789 = vmul.f32 1.0, %v788
        %v790 = vrcp.pop %v756
        %v791 = vmul.f32 1.0, %v790
        %v792 = vrcp.pop %v757
        %v793 = vmul.f32 1.0, %v792
        %v794 = vrcp.pop %v758
        %v795 = vmul.f32 1.0, %v794
        %v796 = vrcp.pop %v759
        %v797 = vmul.f32 1.0, %v796
        %v798 = vrcp.pop %v760
        %v799 = vmul.f32 1.0, %v798
        %v800 = vrcp.pop %v761
        %v801 = vmul.f32 1.0, %v800
        %v802 = vrcp.pop %v762
        %v803 = vmul.f32 1.0, %v802
        %v804 = vrcp.pop %v763
        %v805 = vmul.f32 1.0, %v804
        %v806 = vrcp.pop %v764
        %v807 = vmul.f32 1.0, %v806
        %v808 = vrcp.pop %v765
        %v809 = vmul.f32 1.0, %v808
        %v810 = vrcp.pop %v766
        %v811 = vmul.f32 1.0, %v810
        %v812 = vrcp.pop %v767
        %v813 = vmul.f32 1.0, %v812
        %v814 = vrcp.pop %v768
        %v815 = vmul.f32 1.0, %v814
        %v816 = vrcp.pop %v769
        %v817 = vmul.f32 1.0, %v816
        %v818 = vrcp.pop %v770
        %v819 = vmul.f32 1.0, %v818
        %v820 = vrcp.pop %v771
        %v821 = vmul.f32 1.0, %v820
        %v822 = vrcp.pop %v772
        %v823 = vmul.f32 1.0, %v822
        %v824 = vrcp.pop %v773
        %v825 = vmul.f32 1.0, %v824
        %v826 = vrcp.pop %v774
        %v827 = vmul.f32 1.0, %v826
        %v828 = vrcp.pop %v775
        %v829 = vmul.f32 1.0, %v828
        %v830 = vrcp.pop %v776
        %v831 = vmul.f32 1.0, %v830
        %v832 = vrcp.pop %v777
        %v833 = vmul.f32 1.0, %v832
        %v834 = vrcp.pop %v778
        %v835 = vmul.f32 1.0, %v834
        %v836 = vrcp.pop %v779
        %v837 = vmul.f32 1.0, %v836
        %v838 = vrcp.pop %v780
        %v839 = vmul.f32 1.0, %v838
        %v840 = vrcp.pop %v781
        %v841 = vmul.f32 1.0, %v840
        %v842 = vrcp.pop %v782
        %v843 = vmul.f32 1.0, %v842
        %v844 = vrcp.pop %v783
        %v845 = vmul.f32 1.0, %v844
        %v846 = vrcp.pop %v784
        %v847 = vmul.f32 1.0, %v846
        %v848 = vrcp.pop %v785
        %v849 = vmul.f32 1.0, %v848
        %v850 = vmul.f32 %v532, %v787
        %v851 = vmul.f32 %v535, %v789
        %v852 = vmul.f32 %v540, %v791
        %v853 = vmul.f32 %v543, %v793
        %v854 = vmul.f32 %v548, %v795
        %v855 = vmul.f32 %v551, %v797
        %v856 = vmul.f32 %v556, %v799
        %v857 = vmul.f32 %v559, %v801
        %v858 = vmul.f32 %v564, %v803
        %v859 = vmul.f32 %v567, %v805
        %v860 = vmul.f32 %v572, %v807
        %v861 = vmul.f32 %v575, %v809
        %v862 = vmul.f32 %v580, %v811
        %v863 = vmul.f32 %v583, %v813
        %v864 = vmul.f32 %v588, %v815
        %v865 = vmul.f32 %v591, %v817
        %v866 = vmul.f32 %v596, %v819
        %v867 = vmul.f32 %v599, %v821
        %v868 = vmul.f32 %v604, %v823
        %v869 = vmul.f32 %v607, %v825
        %v870 = vmul.f32 %v612, %v827
        %v871 = vmul.f32 %v615, %v829
        %v872 = vmul.f32 %v620, %v831
        %v873 = vmul.f32 %v623, %v833
        %v874 = vmul.f32 %v628, %v835
        %v875 = vmul.f32 %v631, %v837
        %v876 = vmul.f32 %v636, %v839
        %v877 = vmul.f32 %v639, %v841
        %v878 = vmul.f32 %v644, %v843
        %v879 = vmul.f32 %v647, %v845
        %v880 = vmul.f32 %v652, %v847
        %v881 = vmul.f32 %v655, %v849
        %vm914 = vcmask 1040384
        %v915 = vrot.slane %v850, 7
        %v916 = vrot.slane %v851, 7
        %v917 = vsel %vm914, %v915, %v916
        %v918 = vrot.slane %v852, 7
        %v919 = vrot.slane %v853, 7
        %v920 = vsel %vm914, %v918, %v919
        %v921 = vrot.slane %v854, 7
        %v922 = vrot.slane %v855, 7
        %v923 = vsel %vm914, %v921, %v922
        %v924 = vrot.slane %v856, 7
        %v925 = vrot.slane %v857, 7
        %v926 = vsel %vm914, %v924, %v925
        %v927 = vrot.slane %v858, 7
        %v928 = vrot.slane %v859, 7
        %v929 = vsel %vm914, %v927, %v928
        %v930 = vrot.slane %v860, 7
        %v931 = vrot.slane %v861, 7
        %v932 = vsel %vm914, %v930, %v931
        %v933 = vrot.slane %v862, 7
        %v934 = vrot.slane %v863, 7
        %v935 = vsel %vm914, %v933, %v934
        %v936 = vrot.slane %v864, 7
        %v937 = vrot.slane %v865, 7
        %v938 = vsel %vm914, %v936, %v937
        %v939 = vrot.slane %v866, 7
        %v940 = vrot.slane %v867, 7
        %v941 = vsel %vm914, %v939, %v940
        %v942 = vrot.slane %v868, 7
        %v943 = vrot.slane %v869, 7
        %v944 = vsel %vm914, %v942, %v943
        %v945 = vrot.slane %v870, 7
        %v946 = vrot.slane %v871, 7
        %v947 = vsel %vm914, %v945, %v946
        %v948 = vrot.slane %v872, 7
        %v949 = vrot.slane %v873, 7
        %v950 = vsel %vm914, %v948, %v949
        %v951 = vrot.slane %v874, 7
        %v952 = vrot.slane %v875, 7
        %v953 = vsel %vm914, %v951, %v952
        %v954 = vrot.slane %v876, 7
        %v955 = vrot.slane %v877, 7
        %v956 = vsel %vm914, %v954, %v955
        %v957 = vrot.slane %v878, 7
        %v958 = vrot.slane %v879, 7
        %v959 = vsel %vm914, %v957, %v958
        %v960 = vrot.slane %v880, 7
        %v961 = vrot.slane %v881, 7
        %v962 = vsel %vm914, %v960, %v961
        %v995 = vsel %vm914, 0.0, %v915
        %v996 = vsel %vm914, 0.0, %v918
        %v997 = vsel %vm914, 0.0, %v921
        %v998 = vsel %vm914, 0.0, %v924
        %v999 = vsel %vm914, 0.0, %v927
        %v1000 = vsel %vm914, 0.0, %v930
        %v1001 = vsel %vm914, 0.0, %v933
        %v1002 = vsel %vm914, 0.0, %v936
        %v1003 = vsel %vm914, 0.0, %v939
        %v1004 = vsel %vm914, 0.0, %v942
        %v1005 = vsel %vm914, 0.0, %v945
        %v1006 = vsel %vm914, 0.0, %v948
        %v1007 = vsel %vm914, 0.0, %v951
        %v1008 = vsel %vm914, 0.0, %v954
        %v1009 = vsel %vm914, 0.0, %v957
        %v1010 = vsel %vm914, 0.0, %v960
        %vm1011 = vcmask 1046528
        %v1012 = vrot.slane %v850, 1
        %v1013 = vrot.slane %v851, 1
        %v1014 = vsel %vm1011, %v1012, %v1013
        %v1015 = vrot.slane %v852, 1
        %v1016 = vrot.slane %v853, 1
        %v1017 = vsel %vm1011, %v1015, %v1016
        %v1018 = vrot.slane %v854, 1
        %v1019 = vrot.slane %v855, 1
        %v1020 = vsel %vm1011, %v1018, %v1019
        %v1021 = vrot.slane %v856, 1
        %v1022 = vrot.slane %v857, 1
        %v1023 = vsel %vm1011, %v1021, %v1022
        %v1024 = vrot.slane %v858, 1
        %v1025 = vrot.slane %v859, 1
        %v1026 = vsel %vm1011, %v1024, %v1025
        %v1027 = vrot.slane %v860, 1
        %v1028 = vrot.slane %v861, 1
        %v1029 = vsel %vm1011, %v1027, %v1028
        %v1030 = vrot.slane %v862, 1
        %v1031 = vrot.slane %v863, 1
        %v1032 = vsel %vm1011, %v1030, %v1031
        %v1033 = vrot.slane %v864, 1
        %v1034 = vrot.slane %v865, 1
        %v1035 = vsel %vm1011, %v1033, %v1034
        %v1036 = vrot.slane %v866, 1
        %v1037 = vrot.slane %v867, 1
        %v1038 = vsel %vm1011, %v1036, %v1037
        %v1039 = vrot.slane %v868, 1
        %v1040 = vrot.slane %v869, 1
        %v1041 = vsel %vm1011, %v1039, %v1040
        %v1042 = vrot.slane %v870, 1
        %v1043 = vrot.slane %v871, 1
        %v1044 = vsel %vm1011, %v1042, %v1043
        %v1045 = vrot.slane %v872, 1
        %v1046 = vrot.slane %v873, 1
        %v1047 = vsel %vm1011, %v1045, %v1046
        %v1048 = vrot.slane %v874, 1
        %v1049 = vrot.slane %v875, 1
        %v1050 = vsel %vm1011, %v1048, %v1049
        %v1051 = vrot.slane %v876, 1
        %v1052 = vrot.slane %v877, 1
        %v1053 = vsel %vm1011, %v1051, %v1052
        %v1054 = vrot.slane %v878, 1
        %v1055 = vrot.slane %v879, 1
        %v1056 = vsel %vm1011, %v1054, %v1055
        %v1057 = vrot.slane %v880, 1
        %v1058 = vrot.slane %v881, 1
        %v1059 = vsel %vm1011, %v1057, %v1058
        %v1092 = vsel %vm1011, %v1013, 0.0
        %v1093 = vsel %vm1011, %v1016, 0.0
        %v1094 = vsel %vm1011, %v1019, 0.0
        %v1095 = vsel %vm1011, %v1022, 0.0
        %v1096 = vsel %vm1011, %v1025, 0.0
        %v1097 = vsel %vm1011, %v1028, 0.0
        %v1098 = vsel %vm1011, %v1031, 0.0
        %v1099 = vsel %vm1011, %v1034, 0.0
        %v1100 = vsel %vm1011, %v1037, 0.0
        %v1101 = vsel %vm1011, %v1040, 0.0
        %v1102 = vsel %vm1011, %v1043, 0.0
        %v1103 = vsel %vm1011, %v1046, 0.0
        %v1104 = vsel %vm1011, %v1049, 0.0
        %v1105 = vsel %vm1011, %v1052, 0.0
        %v1106 = vsel %vm1011, %v1055, 0.0
        %v1107 = vsel %vm1011, %v1058, 0.0
        %v1108 = vpack.c.bf16 %v917, %v995
        %v1109 = vpack.c.bf16 %v851, %v850
        %v1110 = vpack.c.bf16 %v1092, %v1014
        %v1111 = vpack.c.bf16 %v920, %v996
        %v1112 = vpack.c.bf16 %v853, %v852
        %v1113 = vpack.c.bf16 %v1093, %v1017
        %v1114 = vpack.c.bf16 %v923, %v997
        %v1115 = vpack.c.bf16 %v855, %v854
        %v1116 = vpack.c.bf16 %v1094, %v1020
        %v1117 = vpack.c.bf16 %v926, %v998
        %v1118 = vpack.c.bf16 %v857, %v856
        %v1119 = vpack.c.bf16 %v1095, %v1023
        %v1120 = vpack.c.bf16 %v929, %v999
        %v1121 = vpack.c.bf16 %v859, %v858
        %v1122 = vpack.c.bf16 %v1096, %v1026
        %v1123 = vpack.c.bf16 %v932, %v1000
        %v1124 = vpack.c.bf16 %v861, %v860
        %v1125 = vpack.c.bf16 %v1097, %v1029
        %v1126 = vpack.c.bf16 %v935, %v1001
        %v1127 = vpack.c.bf16 %v863, %v862
        %v1128 = vpack.c.bf16 %v1098, %v1032
        %v1129 = vpack.c.bf16 %v938, %v1002
        %v1130 = vpack.c.bf16 %v865, %v864
        %v1131 = vpack.c.bf16 %v1099, %v1035
        %v1132 = vpack.c.bf16 %v941, %v1003
        %v1133 = vpack.c.bf16 %v867, %v866
        %v1134 = vpack.c.bf16 %v1100, %v1038
        %v1135 = vpack.c.bf16 %v944, %v1004
        %v1136 = vpack.c.bf16 %v869, %v868
        %v1137 = vpack.c.bf16 %v1101, %v1041
        %v1138 = vpack.c.bf16 %v947, %v1005
        %v1139 = vpack.c.bf16 %v871, %v870
        %v1140 = vpack.c.bf16 %v1102, %v1044
        %v1141 = vpack.c.bf16 %v950, %v1006
        %v1142 = vpack.c.bf16 %v873, %v872
        %v1143 = vpack.c.bf16 %v1103, %v1047
        %v1144 = vpack.c.bf16 %v953, %v1007
        %v1145 = vpack.c.bf16 %v875, %v874
        %v1146 = vpack.c.bf16 %v1104, %v1050
        %v1147 = vpack.c.bf16 %v956, %v1008
        %v1148 = vpack.c.bf16 %v877, %v876
        %v1149 = vpack.c.bf16 %v1105, %v1053
        %v1150 = vpack.c.bf16 %v959, %v1009
        %v1151 = vpack.c.bf16 %v879, %v878
        %v1152 = vpack.c.bf16 %v1106, %v1056
        %v1153 = vpack.c.bf16 %v962, %v1010
        %v1154 = vpack.c.bf16 %v881, %v880
        %v1155 = vpack.c.bf16 %v1107, %v1059
        %1156 = vst [vmem:[#allocation2] sm:$0xff] 0
        %1157 = vst [vmem:[#allocation2 + $0x8] sm:$0xff] 0
        %1158 = vst [vmem:[#allocation2 + $0x10] sm:$0xff] 0
        %s1159 = scalar_lea.vmem [#allocation2], 408
        %1160 = vst [vmem:[%s1159] sm:$0xff] 0
        %1161 = vst [vmem:[%s1159 + $0x8] sm:$0xff] 0
        %1162 = vst [vmem:[%s1159 + $0x10] sm:$0xff] 0
        %s1163 = scalar_lea.vmem [#allocation2], 24
        %1164 = vst [vmem:[%s1163] sm:$0xff] %v1108
        %1165 = vst [vmem:[%s1163 + $0x8] sm:$0xff] %v1109
        %1166 = vst [vmem:[%s1163 + $0x10] sm:$0xff] %v1110
        %1167 = vst [vmem:[%s1163 + $0x18] sm:$0xff] %v1111
        %1168 = vst [vmem:[%s1163 + $0x20] sm:$0xff] %v1112
        %1169 = vst [vmem:[%s1163 + $0x28] sm:$0xff] %v1113
        %1170 = vst [vmem:[%s1163 + $0x30] sm:$0xff] %v1114
        %1171 = vst [vmem:[%s1163 + $0x38] sm:$0xff] %v1115
        %1172 = vst [vmem:[%s1163 + $0x40] sm:$0xff] %v1116
        %1173 = vst [vmem:[%s1163 + $0x48] sm:$0xff] %v1117
        %1174 = vst [vmem:[%s1163 + $0x50] sm:$0xff] %v1118
        %1175 = vst [vmem:[%s1163 + $0x58] sm:$0xff] %v1119
        %1176 = vst [vmem:[%s1163 + $0x60] sm:$0xff] %v1120
        %1177 = vst [vmem:[%s1163 + $0x68] sm:$0xff] %v1121
        %1178 = vst [vmem:[%s1163 + $0x70] sm:$0xff] %v1122
        %1179 = vst [vmem:[%s1163 + $0x78] sm:$0xff] %v1123
        %1180 = vst [vmem:[%s1163 + $0x80] sm:$0xff] %v1124
        %1181 = vst [vmem:[%s1163 + $0x88] sm:$0xff] %v1125
        %1182 = vst [vmem:[%s1163 + $0x90] sm:$0xff] %v1126
        %1183 = vst [vmem:[%s1163 + $0x98] sm:$0xff] %v1127
        %1184 = vst [vmem:[%s1163 + $0xa0] sm:$0xff] %v1128
        %1185 = vst [vmem:[%s1163 + $0xa8] sm:$0xff] %v1129
        %1186 = vst [vmem:[%s1163 + $0xb0] sm:$0xff] %v1130
        %1187 = vst [vmem:[%s1163 + $0xb8] sm:$0xff] %v1131
        %1188 = vst [vmem:[%s1163 + $0xc0] sm:$0xff] %v1132
        %1189 = vst [vmem:[%s1163 + $0xc8] sm:$0xff] %v1133
        %1190 = vst [vmem:[%s1163 + $0xd0] sm:$0xff] %v1134
        %1191 = vst [vmem:[%s1163 + $0xd8] sm:$0xff] %v1135
        %1192 = vst [vmem:[%s1163 + $0xe0] sm:$0xff] %v1136
        %1193 = vst [vmem:[%s1163 + $0xe8] sm:$0xff] %v1137
        %1194 = vst [vmem:[%s1163 + $0xf0] sm:$0xff] %v1138
        %1195 = vst [vmem:[%s1163 + $0xf8] sm:$0xff] %v1139
        %1196 = vst [vmem:[%s1163 + $0x100] sm:$0xff] %v1140
        %1197 = vst [vmem:[%s1163 + $0x108] sm:$0xff] %v1141
        %1198 = vst [vmem:[%s1163 + $0x110] sm:$0xff] %v1142
        %1199 = vst [vmem:[%s1163 + $0x118] sm:$0xff] %v1143
        %1200 = vst [vmem:[%s1163 + $0x120] sm:$0xff] %v1144
        %1201 = vst [vmem:[%s1163 + $0x128] sm:$0xff] %v1145
        %1202 = vst [vmem:[%s1163 + $0x130] sm:$0xff] %v1146
        %1203 = vst [vmem:[%s1163 + $0x138] sm:$0xff] %v1147
        %1204 = vst [vmem:[%s1163 + $0x140] sm:$0xff] %v1148
        %1205 = vst [vmem:[%s1163 + $0x148] sm:$0xff] %v1149
        %1206 = vst [vmem:[%s1163 + $0x150] sm:$0xff] %v1150
        %1207 = vst [vmem:[%s1163 + $0x158] sm:$0xff] %v1151
        %1208 = vst [vmem:[%s1163 + $0x160] sm:$0xff] %v1152
        %1209 = vst [vmem:[%s1163 + $0x168] sm:$0xff] %v1153
        %1210 = vst [vmem:[%s1163 + $0x170] sm:$0xff] %v1154
        %1211 = vst [vmem:[%s1163 + $0x178] sm:$0xff] %v1155
        %v1212 = vld [vmem:[#allocation2] sm:$0xff]
        %v1213 = vld [vmem:[#allocation2 + $0x8] sm:$0xff]
        %v1214 = vld [vmem:[#allocation2 + $0x10] sm:$0xff]
        %v1215 = vld [vmem:[#allocation2 + $0x18] sm:$0xff]
        %v1216 = vld [vmem:[#allocation2 + $0x20] sm:$0xff]
        %v1217 = vld [vmem:[#allocation2 + $0x28] sm:$0xff]
        %v1218 = vld [vmem:[#allocation2 + $0x30] sm:$0xff]
        %v1219 = vld [vmem:[#allocation2 + $0x38] sm:$0xff]
        %v1220 = vld [vmem:[#allocation2 + $0x40] sm:$0xff]
        %v1221 = vld [vmem:[#allocation2 + $0x48] sm:$0xff]
        %v1222 = vld [vmem:[#allocation2 + $0x50] sm:$0xff]
        %v1223 = vld [vmem:[#allocation2 + $0x58] sm:$0xff]
        %v1224 = vld [vmem:[#allocation2 + $0x60] sm:$0xff]
        %v1225 = vld [vmem:[#allocation2 + $0x68] sm:$0xff]
        %v1226 = vld [vmem:[#allocation2 + $0x70] sm:$0xff]
        %v1227 = vld [vmem:[#allocation2 + $0x78] sm:$0xff]
        %v1228 = vld [vmem:[#allocation2 + $0x80] sm:$0xff]
        %v1229 = vld [vmem:[#allocation2 + $0x88] sm:$0xff]
        %v1230 = vld [vmem:[#allocation2 + $0x90] sm:$0xff]
        %v1231 = vld [vmem:[#allocation2 + $0x98] sm:$0xff]
        %v1232 = vld [vmem:[#allocation2 + $0xa0] sm:$0xff]
        %v1233 = vld [vmem:[#allocation2 + $0xa8] sm:$0xff]
        %v1234 = vld [vmem:[#allocation2 + $0xb0] sm:$0xff]
        %v1235 = vld [vmem:[#allocation2 + $0xb8] sm:$0xff]
        %v1236 = vld [vmem:[#allocation2 + $0xc0] sm:$0xff]
        %v1237 = vld [vmem:[#allocation2 + $0xc8] sm:$0xff]
        %v1238 = vld [vmem:[#allocation2 + $0xd0] sm:$0xff]
        %v1239 = vld [vmem:[#allocation2 + $0xd8] sm:$0xff]
        %v1240 = vld [vmem:[#allocation2 + $0xe0] sm:$0xff]
        %v1241 = vld [vmem:[#allocation2 + $0xe8] sm:$0xff]
        %v1242 = vld [vmem:[#allocation2 + $0xf0] sm:$0xff]
        %v1243 = vld [vmem:[#allocation2 + $0xf8] sm:$0xff]
        %v1244 = vld [vmem:[#allocation2 + $0x100] sm:$0xff]
        %v1245 = vld [vmem:[#allocation2 + $0x108] sm:$0xff]
        %v1246 = vld [vmem:[#allocation2 + $0x110] sm:$0xff]
        %v1247 = vld [vmem:[#allocation2 + $0x118] sm:$0xff]
        %v1248 = vld [vmem:[#allocation2 + $0x120] sm:$0xff]
        %v1249 = vld [vmem:[#allocation2 + $0x128] sm:$0xff]
        %v1250 = vld [vmem:[#allocation2 + $0x130] sm:$0xff]
        %v1251 = vld [vmem:[#allocation2 + $0x138] sm:$0xff]
        %v1252 = vld [vmem:[#allocation2 + $0x140] sm:$0xff]
        %v1253 = vld [vmem:[#allocation2 + $0x148] sm:$0xff]
        %v1254 = vld [vmem:[#allocation2 + $0x150] sm:$0xff]
        %v1255 = vld [vmem:[#allocation2 + $0x158] sm:$0xff]
        %v1256 = vld [vmem:[#allocation2 + $0x160] sm:$0xff]
        %v1257 = vld [vmem:[#allocation2 + $0x168] sm:$0xff]
        %v1258 = vld [vmem:[#allocation2 + $0x170] sm:$0xff]
        %v1259 = vld [vmem:[#allocation2 + $0x178] sm:$0xff]
        %v1260 = vld [vmem:[#allocation9] sm:$0xf]
        %v1261 = vld [vmem:[#allocation9 + $0x4] sm:$0xf]
        %v1262 = vld [vmem:[#allocation9 + $0x8] sm:$0xf]
        %v1263 = vld [vmem:[#allocation9 + $0xc] sm:$0xf]
        %v1264 = vld [vmem:[#allocation9 + $0x10] sm:$0xf]
        %v1265 = vld [vmem:[#allocation9 + $0x14] sm:$0xf]
        %v1266 = vld [vmem:[#allocation9 + $0x18] sm:$0xf]
        %v1267 = vld [vmem:[#allocation9 + $0x1c] sm:$0xf]
        %v1268 = vld [vmem:[#allocation9 + $0x20] sm:$0xf]
        %v1269 = vld [vmem:[#allocation9 + $0x24] sm:$0xf]
        %v1270 = vld [vmem:[#allocation9 + $0x28] sm:$0xf]
        %v1271 = vld [vmem:[#allocation9 + $0x2c] sm:$0xf]
        %v1272 = vld [vmem:[#allocation9 + $0x30] sm:$0xf]
        %v1273 = vld [vmem:[#allocation9 + $0x34] sm:$0xf]
        %v1274 = vld [vmem:[#allocation9 + $0x38] sm:$0xf]
        %v1275 = vld [vmem:[#allocation9 + $0x3c] sm:$0xf]
        %v1276 = vld [vmem:[#allocation9 + $0x40] sm:$0xf]
        %v1277 = vld [vmem:[#allocation9 + $0x44] sm:$0xf]
        %v1278 = vld [vmem:[#allocation9 + $0x48] sm:$0xf]
        %v1279 = vld [vmem:[#allocation9 + $0x4c] sm:$0xf]
        %v1280 = vld [vmem:[#allocation9 + $0x50] sm:$0xf]
        %v1281 = vld [vmem:[#allocation9 + $0x54] sm:$0xf]
        %v1282 = vld [vmem:[#allocation9 + $0x58] sm:$0xf]
        %v1283 = vld [vmem:[#allocation9 + $0x5c] sm:$0xf]
        %v1284 = vld [vmem:[#allocation9 + $0x60] sm:$0xf]
        %v1285 = vld [vmem:[#allocation9 + $0x64] sm:$0xf]
        %v1286 = vld [vmem:[#allocation9 + $0x68] sm:$0xf]
        %v1287 = vld [vmem:[#allocation9 + $0x6c] sm:$0xf]
        %v1288 = vld [vmem:[#allocation9 + $0x70] sm:$0xf]
        %v1289 = vld [vmem:[#allocation9 + $0x74] sm:$0xf]
        %v1290 = vld [vmem:[#allocation9 + $0x78] sm:$0xf]
        %v1291 = vld [vmem:[#allocation9 + $0x7c] sm:$0xf]
        %v1292 = vld [vmem:[#allocation9 + $0x80] sm:$0xf]
        %v1293 = vld [vmem:[#allocation9 + $0x84] sm:$0xf]
        %v1294 = vld [vmem:[#allocation9 + $0x88] sm:$0xf]
        %v1295 = vld [vmem:[#allocation9 + $0x8c] sm:$0xf]
        %v1296 = vld [vmem:[#allocation9 + $0x90] sm:$0xf]
        %v1297 = vld [vmem:[#allocation9 + $0x94] sm:$0xf]
        %v1298 = vld [vmem:[#allocation9 + $0x98] sm:$0xf]
        %v1299 = vld [vmem:[#allocation9 + $0x9c] sm:$0xf]
        %v1300 = vld [vmem:[#allocation9 + $0xa0] sm:$0xf]
        %v1301 = vld [vmem:[#allocation9 + $0xa4] sm:$0xf]
        %v1302 = vld [vmem:[#allocation9 + $0xa8] sm:$0xf]
        %v1303 = vld [vmem:[#allocation9 + $0xac] sm:$0xf]
        %v1304 = vld [vmem:[#allocation9 + $0xb0] sm:$0xf]
        %v1305 = vld [vmem:[#allocation9 + $0xb4] sm:$0xf]
        %v1306 = vld [vmem:[#allocation9 + $0xb8] sm:$0xf]
        %v1307 = vld [vmem:[#allocation9 + $0xbc] sm:$0xf]
        %v1308 = vld [vmem:[%s1163] sm:$0xff]
        %v1309 = vld [vmem:[%s1163 + $0x8] sm:$0xff]
        %v1310 = vld [vmem:[%s1163 + $0x10] sm:$0xff]
        %v1311 = vld [vmem:[%s1163 + $0x18] sm:$0xff]
        %v1312 = vld [vmem:[%s1163 + $0x20] sm:$0xff]
        %v1313 = vld [vmem:[%s1163 + $0x28] sm:$0xff]
        %v1314 = vld [vmem:[%s1163 + $0x30] sm:$0xff]
        %v1315 = vld [vmem:[%s1163 + $0x38] sm:$0xff]
        %v1316 = vld [vmem:[%s1163 + $0x40] sm:$0xff]
        %v1317 = vld [vmem:[%s1163 + $0x48] sm:$0xff]
        %v1318 = vld [vmem:[%s1163 + $0x50] sm:$0xff]
        %v1319 = vld [vmem:[%s1163 + $0x58] sm:$0xff]
        %v1320 = vld [vmem:[%s1163 + $0x60] sm:$0xff]
        %v1321 = vld [vmem:[%s1163 + $0x68] sm:$0xff]
        %v1322 = vld [vmem:[%s1163 + $0x70] sm:$0xff]
        %v1323 = vld [vmem:[%s1163 + $0x78] sm:$0xff]
        %v1324 = vld [vmem:[%s1163 + $0x80] sm:$0xff]
        %v1325 = vld [vmem:[%s1163 + $0x88] sm:$0xff]
        %v1326 = vld [vmem:[%s1163 + $0x90] sm:$0xff]
        %v1327 = vld [vmem:[%s1163 + $0x98] sm:$0xff]
        %v1328 = vld [vmem:[%s1163 + $0xa0] sm:$0xff]
        %v1329 = vld [vmem:[%s1163 + $0xa8] sm:$0xff]
        %v1330 = vld [vmem:[%s1163 + $0xb0] sm:$0xff]
        %v1331 = vld [vmem:[%s1163 + $0xb8] sm:$0xff]
        %v1332 = vld [vmem:[%s1163 + $0xc0] sm:$0xff]
        %v1333 = vld [vmem:[%s1163 + $0xc8] sm:$0xff]
        %v1334 = vld [vmem:[%s1163 + $0xd0] sm:$0xff]
        %v1335 = vld [vmem:[%s1163 + $0xd8] sm:$0xff]
        %v1336 = vld [vmem:[%s1163 + $0xe0] sm:$0xff]
        %v1337 = vld [vmem:[%s1163 + $0xe8] sm:$0xff]
        %v1338 = vld [vmem:[%s1163 + $0xf0] sm:$0xff]
        %v1339 = vld [vmem:[%s1163 + $0xf8] sm:$0xff]
        %v1340 = vld [vmem:[%s1163 + $0x100] sm:$0xff]
        %v1341 = vld [vmem:[%s1163 + $0x108] sm:$0xff]
        %v1342 = vld [vmem:[%s1163 + $0x110] sm:$0xff]
        %v1343 = vld [vmem:[%s1163 + $0x118] sm:$0xff]
        %v1344 = vld [vmem:[%s1163 + $0x120] sm:$0xff]
        %v1345 = vld [vmem:[%s1163 + $0x128] sm:$0xff]
        %v1346 = vld [vmem:[%s1163 + $0x130] sm:$0xff]
        %v1347 = vld [vmem:[%s1163 + $0x138] sm:$0xff]
        %v1348 = vld [vmem:[%s1163 + $0x140] sm:$0xff]
        %v1349 = vld [vmem:[%s1163 + $0x148] sm:$0xff]
        %v1350 = vld [vmem:[%s1163 + $0x150] sm:$0xff]
        %v1351 = vld [vmem:[%s1163 + $0x158] sm:$0xff]
        %v1352 = vld [vmem:[%s1163 + $0x160] sm:$0xff]
        %v1353 = vld [vmem:[%s1163 + $0x168] sm:$0xff]
        %v1354 = vld [vmem:[%s1163 + $0x170] sm:$0xff]
        %v1355 = vld [vmem:[%s1163 + $0x178] sm:$0xff]
        %s1356 = scalar_lea.vmem [#allocation9], 192
        %v1357 = vld [vmem:[%s1356] sm:$0xf]
        %v1358 = vld [vmem:[%s1356 + $0x4] sm:$0xf]
        %v1359 = vld [vmem:[%s1356 + $0x8] sm:$0xf]
        %v1360 = vld [vmem:[%s1356 + $0xc] sm:$0xf]
        %v1361 = vld [vmem:[%s1356 + $0x10] sm:$0xf]
        %v1362 = vld [vmem:[%s1356 + $0x14] sm:$0xf]
        %v1363 = vld [vmem:[%s1356 + $0x18] sm:$0xf]
        %v1364 = vld [vmem:[%s1356 + $0x1c] sm:$0xf]
        %v1365 = vld [vmem:[%s1356 + $0x20] sm:$0xf]
        %v1366 = vld [vmem:[%s1356 + $0x24] sm:$0xf]
        %v1367 = vld [vmem:[%s1356 + $0x28] sm:$0xf]
        %v1368 = vld [vmem:[%s1356 + $0x2c] sm:$0xf]
        %v1369 = vld [vmem:[%s1356 + $0x30] sm:$0xf]
        %v1370 = vld [vmem:[%s1356 + $0x34] sm:$0xf]
        %v1371 = vld [vmem:[%s1356 + $0x38] sm:$0xf]
        %v1372 = vld [vmem:[%s1356 + $0x3c] sm:$0xf]
        %v1373 = vld [vmem:[%s1356 + $0x40] sm:$0xf]
        %v1374 = vld [vmem:[%s1356 + $0x44] sm:$0xf]
        %v1375 = vld [vmem:[%s1356 + $0x48] sm:$0xf]
        %v1376 = vld [vmem:[%s1356 + $0x4c] sm:$0xf]
        %v1377 = vld [vmem:[%s1356 + $0x50] sm:$0xf]
        %v1378 = vld [vmem:[%s1356 + $0x54] sm:$0xf]
        %v1379 = vld [vmem:[%s1356 + $0x58] sm:$0xf]
        %v1380 = vld [vmem:[%s1356 + $0x5c] sm:$0xf]
        %v1381 = vld [vmem:[%s1356 + $0x60] sm:$0xf]
        %v1382 = vld [vmem:[%s1356 + $0x64] sm:$0xf]
        %v1383 = vld [vmem:[%s1356 + $0x68] sm:$0xf]
        %v1384 = vld [vmem:[%s1356 + $0x6c] sm:$0xf]
        %v1385 = vld [vmem:[%s1356 + $0x70] sm:$0xf]
        %v1386 = vld [vmem:[%s1356 + $0x74] sm:$0xf]
        %v1387 = vld [vmem:[%s1356 + $0x78] sm:$0xf]
        %v1388 = vld [vmem:[%s1356 + $0x7c] sm:$0xf]
        %v1389 = vld [vmem:[%s1356 + $0x80] sm:$0xf]
        %v1390 = vld [vmem:[%s1356 + $0x84] sm:$0xf]
        %v1391 = vld [vmem:[%s1356 + $0x88] sm:$0xf]
        %v1392 = vld [vmem:[%s1356 + $0x8c] sm:$0xf]
        %v1393 = vld [vmem:[%s1356 + $0x90] sm:$0xf]
        %v1394 = vld [vmem:[%s1356 + $0x94] sm:$0xf]
        %v1395 = vld [vmem:[%s1356 + $0x98] sm:$0xf]
        %v1396 = vld [vmem:[%s1356 + $0x9c] sm:$0xf]
        %v1397 = vld [vmem:[%s1356 + $0xa0] sm:$0xf]
        %v1398 = vld [vmem:[%s1356 + $0xa4] sm:$0xf]
        %v1399 = vld [vmem:[%s1356 + $0xa8] sm:$0xf]
        %v1400 = vld [vmem:[%s1356 + $0xac] sm:$0xf]
        %v1401 = vld [vmem:[%s1356 + $0xb0] sm:$0xf]
        %v1402 = vld [vmem:[%s1356 + $0xb4] sm:$0xf]
        %v1403 = vld [vmem:[%s1356 + $0xb8] sm:$0xf]
        %v1404 = vld [vmem:[%s1356 + $0xbc] sm:$0xf]
        %v1453 = vunpack.c.l.b16 %v1357
        %v1454 = vunpack.c.l.b16 %v1358
        %v1455 = vunpack.c.l.b16 %v1359
        %v1456 = vunpack.c.l.b16 %v1360
        %v1457 = vunpack.c.l.b16 %v1361
        %v1458 = vunpack.c.l.b16 %v1362
        %v1459 = vunpack.c.l.b16 %v1363
        %v1460 = vunpack.c.l.b16 %v1364
        %v1461 = vunpack.c.l.b16 %v1365
        %v1462 = vunpack.c.l.b16 %v1366
        %v1463 = vunpack.c.l.b16 %v1367
        %v1464 = vunpack.c.l.b16 %v1368
        %v1465 = vunpack.c.l.b16 %v1369
        %v1466 = vunpack.c.l.b16 %v1370
        %v1467 = vunpack.c.l.b16 %v1371
        %v1468 = vunpack.c.l.b16 %v1372
        %v1469 = vunpack.c.l.b16 %v1373
        %v1470 = vunpack.c.l.b16 %v1374
        %v1471 = vunpack.c.l.b16 %v1375
        %v1472 = vunpack.c.l.b16 %v1376
        %v1473 = vunpack.c.l.b16 %v1377
        %v1474 = vunpack.c.l.b16 %v1378
        %v1475 = vunpack.c.l.b16 %v1379
        %v1476 = vunpack.c.l.b16 %v1380
        %v1477 = vunpack.c.l.b16 %v1381
        %v1478 = vunpack.c.l.b16 %v1382
        %v1479 = vunpack.c.l.b16 %v1383
        %v1480 = vunpack.c.l.b16 %v1384
        %v1481 = vunpack.c.l.b16 %v1385
        %v1482 = vunpack.c.l.b16 %v1386
        %v1483 = vunpack.c.l.b16 %v1387
        %v1484 = vunpack.c.l.b16 %v1388
        %v1485 = vunpack.c.l.b16 %v1389
        %v1486 = vunpack.c.l.b16 %v1390
        %v1487 = vunpack.c.l.b16 %v1391
        %v1488 = vunpack.c.l.b16 %v1392
        %v1489 = vunpack.c.l.b16 %v1393
        %v1490 = vunpack.c.l.b16 %v1394
        %v1491 = vunpack.c.l.b16 %v1395
        %v1492 = vunpack.c.l.b16 %v1396
        %v1493 = vunpack.c.l.b16 %v1397
        %v1494 = vunpack.c.l.b16 %v1398
        %v1495 = vunpack.c.l.b16 %v1399
        %v1496 = vunpack.c.l.b16 %v1400
        %v1497 = vunpack.c.l.b16 %v1401
        %v1498 = vunpack.c.l.b16 %v1402
        %v1499 = vunpack.c.l.b16 %v1403
        %v1500 = vunpack.c.l.b16 %v1404
        %v1501 = vpack.c.b16 %v1454, %v1453
        %v1502 = vpack.c.b16 %v1456, %v1455
        %v1503 = vpack.c.b16 %v1458, %v1457
        %v1504 = vpack.c.b16 %v1460, %v1459
        %v1505 = vpack.c.b16 %v1462, %v1461
        %v1506 = vpack.c.b16 %v1464, %v1463
        %v1507 = vpack.c.b16 %v1466, %v1465
        %v1508 = vpack.c.b16 %v1468, %v1467
        %v1509 = vpack.c.b16 %v1470, %v1469
        %v1510 = vpack.c.b16 %v1472, %v1471
        %v1511 = vpack.c.b16 %v1474, %v1473
        %v1512 = vpack.c.b16 %v1476, %v1475
        %v1513 = vpack.c.b16 %v1478, %v1477
        %v1514 = vpack.c.b16 %v1480, %v1479
        %v1515 = vpack.c.b16 %v1482, %v1481
        %v1516 = vpack.c.b16 %v1484, %v1483
        %v1517 = vpack.c.b16 %v1486, %v1485
        %v1518 = vpack.c.b16 %v1488, %v1487
        %v1519 = vpack.c.b16 %v1490, %v1489
        %v1520 = vpack.c.b16 %v1492, %v1491
        %v1521 = vpack.c.b16 %v1494, %v1493
        %v1522 = vpack.c.b16 %v1496, %v1495
        %v1523 = vpack.c.b16 %v1498, %v1497
        %v1524 = vpack.c.b16 %v1500, %v1499
        %1549 = vmatprep.subr.bf16.mxu0 0
        %1550 = vmatpush1.bf16.msra.mxu0 %v1501
        %1551 = vmatprep.subr.bf16.mxu0 0
        %1552 = vmatpush1.bf16.msra.mxu0 %v1502
        %1553 = vmatprep.subr.bf16.mxu0 0
        %1554 = vmatpush1.bf16.msra.mxu0 %v1503
        %1555 = vmatprep.subr.bf16.mxu0 0
        %1556 = vmatpush1.bf16.msra.mxu0 %v1504
        %1557 = vmatprep.subr.bf16.mxu0 0
        %1558 = vmatpush1.bf16.msra.mxu0 %v1505
        %1559 = vmatprep.subr.bf16.mxu0 0
        %1560 = vmatpush1.bf16.msra.mxu0 %v1506
        %1561 = vmatprep.subr.bf16.mxu0 0
        %1562 = vmatpush1.bf16.msra.mxu0 %v1507
        %1563 = vmatprep.subr.bf16.mxu0 0
        %1564 = vmatpush1.bf16.msra.mxu0 %v1508
        %1565 = vmatprep.subr.bf16.mxu0 0
        %1566 = vmatpush1.bf16.msra.mxu0 %v1509
        %1567 = vmatprep.subr.bf16.mxu0 0
        %1568 = vmatpush1.bf16.msra.mxu0 %v1510
        %1569 = vmatprep.subr.bf16.mxu0 0
        %1570 = vmatpush1.bf16.msra.mxu0 %v1511
        %1571 = vmatprep.subr.bf16.mxu0 0
        %1572 = vmatpush1.bf16.msra.mxu0 %v1512
        %1573 = vmatprep.subr.bf16.mxu0 0
        %1574 = vmatpush1.bf16.msra.mxu0 %v1513
        %1575 = vmatprep.subr.bf16.mxu0 0
        %1576 = vmatpush1.bf16.msra.mxu0 %v1514
        %1577 = vmatprep.subr.bf16.mxu0 0
        %1578 = vmatpush1.bf16.msra.mxu0 %v1515
        %1579 = vmatprep.subr.bf16.mxu0 0
        %1580 = vmatpush1.bf16.msra.mxu0 %v1516
        %1581 = vmatprep.mubr.bf16.mxu0 %v1309
        %1582 = vmatmul.mubr.bf16.gmra.mrb[0].mxu0 %v1308
        %v1583 = vpop.f32.mrb[0].mxu0
        %v1584 = vadd.f32 0.0, %v1583
        %v1585 = vpop.f32.mrb[0].mxu0
        %v1586 = vpop.f32.mrb[0].mxu0
        %v1587 = vadd.f32 0.0, %v1586
        %v1588 = vpop.f32.mrb[0].mxu0
        %1589 = vmatprep.mubr.bf16.mxu0 %v1312
        %1590 = vmatmul.mubr.bf16.gmra.mrb[0].mxu0 %v1311
        %v1591 = vpop.f32.mrb[0].mxu0
        %v1592 = vadd.f32 0.0, %v1591
        %v1593 = vpop.f32.mrb[0].mxu0
        %v1594 = vpop.f32.mrb[0].mxu0
        %v1595 = vadd.f32 0.0, %v1594
        %v1596 = vpop.f32.mrb[0].mxu0
        %1597 = vmatprep.mubr.bf16.mxu0 %v1315
        %1598 = vmatmul.mubr.bf16.gmra.mrb[0].mxu0 %v1314
        %v1599 = vpop.f32.mrb[0].mxu0
        %v1600 = vadd.f32 0.0, %v1599
        %v1601 = vpop.f32.mrb[0].mxu0
        %v1602 = vpop.f32.mrb[0].mxu0
        %v1603 = vadd.f32 0.0, %v1602
        %v1604 = vpop.f32.mrb[0].mxu0
        %1605 = vmatprep.mubr.bf16.mxu0 %v1318
        %1606 = vmatmul.mubr.bf16.gmra.mrb[0].mxu0 %v1317
        %v1607 = vpop.f32.mrb[0].mxu0
        %v1608 = vadd.f32 0.0, %v1607
        %v1609 = vpop.f32.mrb[0].mxu0
        %v1610 = vpop.f32.mrb[0].mxu0
        %v1611 = vadd.f32 0.0, %v1610
        %v1612 = vpop.f32.mrb[0].mxu0
        %1613 = vmatprep.mubr.bf16.mxu0 %v1321
        %1614 = vmatmul.mubr.bf16.gmra.mrb[0].mxu0 %v1320
        %v1615 = vpop.f32.mrb[0].mxu0
        %v1616 = vadd.f32 0.0, %v1615
        %v1617 = vpop.f32.mrb[0].mxu0
        %v1618 = vpop.f32.mrb[0].mxu0
        %v1619 = vadd.f32 0.0, %v1618
        %v1620 = vpop.f32.mrb[0].mxu0
        %1621 = vmatprep.mubr.bf16.mxu0 %v1324
        %1622 = vmatmul.mubr.bf16.gmra.mrb[0].mxu0 %v1323
        %v1623 = vpop.f32.mrb[0].mxu0
        %v1624 = vadd.f32 0.0, %v1623
        %v1625 = vpop.f32.mrb[0].mxu0
        %v1626 = vpop.f32.mrb[0].mxu0
        %v1627 = vadd.f32 0.0, %v1626
        %v1628 = vpop.f32.mrb[0].mxu0
        %1629 = vmatprep.mubr.bf16.mxu0 %v1327
        %1630 = vmatmul.mubr.bf16.gmra.mrb[0].mxu0 %v1326
        %v1631 = vpop.f32.mrb[0].mxu0
        %v1632 = vadd.f32 0.0, %v1631
        %v1633 = vpop.f32.mrb[0].mxu0
        %v1634 = vpop.f32.mrb[0].mxu0
        %v1635 = vadd.f32 0.0, %v1634
        %v1636 = vpop.f32.mrb[0].mxu0
        %1637 = vmatprep.mubr.bf16.mxu0 %v1330
        %1638 = vmatmul.mubr.bf16.gmra.mrb[0].mxu0 %v1329
        %v1639 = vpop.f32.mrb[0].mxu0
        %v1640 = vadd.f32 0.0, %v1639
        %v1641 = vpop.f32.mrb[0].mxu0
        %v1642 = vpop.f32.mrb[0].mxu0
        %v1643 = vadd.f32 0.0, %v1642
        %v1644 = vpop.f32.mrb[0].mxu0
        %1645 = vmatprep.mubr.bf16.mxu0 %v1333
        %1646 = vmatmul.mubr.bf16.gmra.mrb[0].mxu0 %v1332
        %v1647 = vpop.f32.mrb[0].mxu0
        %v1648 = vadd.f32 0.0, %v1647
        %v1649 = vpop.f32.mrb[0].mxu0
        %v1650 = vpop.f32.mrb[0].mxu0
        %v1651 = vadd.f32 0.0, %v1650
        %v1652 = vpop.f32.mrb[0].mxu0
        %1653 = vmatprep.mubr.bf16.mxu0 %v1336
        %1654 = vmatmul.mubr.bf16.gmra.mrb[0].mxu0 %v1335
        %v1655 = vpop.f32.mrb[0].mxu0
        %v1656 = vadd.f32 0.0, %v1655
        %v1657 = vpop.f32.mrb[0].mxu0
        %v1658 = vpop.f32.mrb[0].mxu0
        %v1659 = vadd.f32 0.0, %v1658
        %v1660 = vpop.f32.mrb[0].mxu0
        %1661 = vmatprep.mubr.bf16.mxu0 %v1339
        %1662 = vmatmul.mubr.bf16.gmra.mrb[0].mxu0 %v1338
        %v1663 = vpop.f32.mrb[0].mxu0
        %v1664 = vadd.f32 0.0, %v1663
        %v1665 = vpop.f32.mrb[0].mxu0
        %v1666 = vpop.f32.mrb[0].mxu0
        %v1667 = vadd.f32 0.0, %v1666
        %v1668 = vpop.f32.mrb[0].mxu0
        %1669 = vmatprep.mubr.bf16.mxu0 %v1342
        %1670 = vmatmul.mubr.bf16.gmra.mrb[0].mxu0 %v1341
        %v1671 = vpop.f32.mrb[0].mxu0
        %v1672 = vadd.f32 0.0, %v1671
        %v1673 = vpop.f32.mrb[0].mxu0
        %v1674 = vpop.f32.mrb[0].mxu0
        %v1675 = vadd.f32 0.0, %v1674
        %v1676 = vpop.f32.mrb[0].mxu0
        %1677 = vmatprep.mubr.bf16.mxu0 %v1345
        %1678 = vmatmul.mubr.bf16.gmra.mrb[0].mxu0 %v1344
        %v1679 = vpop.f32.mrb[0].mxu0
        %v1680 = vadd.f32 0.0, %v1679
        %v1681 = vpop.f32.mrb[0].mxu0
        %v1682 = vpop.f32.mrb[0].mxu0
        %v1683 = vadd.f32 0.0, %v1682
        %v1684 = vpop.f32.mrb[0].mxu0
        %1685 = vmatprep.mubr.bf16.mxu0 %v1348
        %1686 = vmatmul.mubr.bf16.gmra.mrb[0].mxu0 %v1347
        %v1687 = vpop.f32.mrb[0].mxu0
        %v1688 = vadd.f32 0.0, %v1687
        %v1689 = vpop.f32.mrb[0].mxu0
        %v1690 = vpop.f32.mrb[0].mxu0
        %v1691 = vadd.f32 0.0, %v1690
        %v1692 = vpop.f32.mrb[0].mxu0
        %1693 = vmatprep.mubr.bf16.mxu0 %v1351
        %1694 = vmatmul.mubr.bf16.gmra.mrb[0].mxu0 %v1350
        %v1695 = vpop.f32.mrb[0].mxu0
        %v1696 = vadd.f32 0.0, %v1695
        %v1697 = vpop.f32.mrb[0].mxu0
        %v1698 = vpop.f32.mrb[0].mxu0
        %v1699 = vadd.f32 0.0, %v1698
        %v1700 = vpop.f32.mrb[0].mxu0
        %1701 = vmatprep.mubr.bf16.mxu0 %v1354
        %1702 = vmatmul.mubr.bf16.gmra.mrb[0].mxu0 %v1353
        %v1703 = vpop.f32.mrb[0].mxu0
        %v1704 = vadd.f32 0.0, %v1703
        %v1705 = vpop.f32.mrb[0].mxu0
        %v1706 = vpop.f32.mrb[0].mxu0
        %v1707 = vadd.f32 0.0, %v1706
        %v1708 = vpop.f32.mrb[0].mxu0
        %1709 = vdwg.mxu0
        %1710 = vmatprep.subr.bf16.mxu0 0
        %1711 = vmatpush1.bf16.msra.mxu0 %v1517
        %1712 = vmatprep.subr.bf16.mxu0 0
        %1713 = vmatpush1.bf16.msra.mxu0 %v1518
        %1714 = vmatprep.subr.bf16.mxu0 0
        %1715 = vmatpush1.bf16.msra.mxu0 %v1519
        %1716 = vmatprep.subr.bf16.mxu0 0
        %1717 = vmatpush1.bf16.msra.mxu0 %v1520
        %1718 = vmatprep.subr.bf16.mxu0 0
        %1719 = vmatpush1.bf16.msra.mxu0 %v1521
        %1720 = vmatprep.subr.bf16.mxu0 0
        %1721 = vmatpush1.bf16.msra.mxu0 %v1522
        %1722 = vmatprep.subr.bf16.mxu0 0
        %1723 = vmatpush1.bf16.msra.mxu0 %v1523
        %1724 = vmatprep.subr.bf16.mxu0 0
        %1725 = vmatpush1.bf16.msra.mxu0 %v1524
        %1726 = vmatprep.subr.bf16.mxu0 0
        %1727 = vmatpush1.bf16.msra.mxu0 0
        %1728 = vmatprep.subr.bf16.mxu0 0
        %1729 = vmatpush1.bf16.msra.mxu0 0
        %1730 = vmatprep.subr.bf16.mxu0 0
        %1731 = vmatpush1.bf16.msra.mxu0 0
        %1732 = vmatprep.subr.bf16.mxu0 0
        %1733 = vmatpush1.bf16.msra.mxu0 0
        %1734 = vmatprep.subr.bf16.mxu0 0
        %1735 = vmatpush1.bf16.msra.mxu0 0
        %1736 = vmatprep.subr.bf16.mxu0 0
        %1737 = vmatpush1.bf16.msra.mxu0 0
        %1738 = vmatprep.subr.bf16.mxu0 0
        %1739 = vmatpush1.bf16.msra.mxu0 0
        %1740 = vmatprep.subr.bf16.mxu0 0
        %1741 = vmatpush1.bf16.msra.mxu0 0
        %1742 = vmatprep.mubr.bf16.mxu0 0
        %1743 = vmatmul.mubr.bf16.gmra.mrb[0].mxu0 %v1310
        %v1744 = vpop.f32.mrb[0].mxu0
        %v1745 = vadd.f32 %v1584, %v1744
        %v1746 = vpop.f32.mrb[0].mxu0
        %v1747 = vpop.f32.mrb[0].mxu0
        %v1748 = vadd.f32 %v1587, %v1747
        %v1749 = vpop.f32.mrb[0].mxu0
        %1750 = vmatprep.mubr.bf16.mxu0 0
        %1751 = vmatmul.mubr.bf16.gmra.mrb[0].mxu0 %v1313
        %v1752 = vpop.f32.mrb[0].mxu0
        %v1753 = vadd.f32 %v1592, %v1752
        %v1754 = vpop.f32.mrb[0].mxu0
        %v1755 = vpop.f32.mrb[0].mxu0
        %v1756 = vadd.f32 %v1595, %v1755
        %v1757 = vpop.f32.mrb[0].mxu0
        %1758 = vmatprep.mubr.bf16.mxu0 0
        %1759 = vmatmul.mubr.bf16.gmra.mrb[0].mxu0 %v1316
        %v1760 = vpop.f32.mrb[0].mxu0
        %v1761 = vadd.f32 %v1600, %v1760
        %v1762 = vpop.f32.mrb[0].mxu0
        %v1763 = vpop.f32.mrb[0].mxu0
        %v1764 = vadd.f32 %v1603, %v1763
        %v1765 = vpop.f32.mrb[0].mxu0
        %1766 = vmatprep.mubr.bf16.mxu0 0
        %1767 = vmatmul.mubr.bf16.gmra.mrb[0].mxu0 %v1319
        %v1768 = vpop.f32.mrb[0].mxu0
        %v1769 = vadd.f32 %v1608, %v1768
        %v1770 = vpop.f32.mrb[0].mxu0
        %v1771 = vpop.f32.mrb[0].mxu0
        %v1772 = vadd.f32 %v1611, %v1771
        %v1773 = vpop.f32.mrb[0].mxu0
        %1774 = vmatprep.mubr.bf16.mxu0 0
        %1775 = vmatmul.mubr.bf16.gmra.mrb[0].mxu0 %v1322
        %v1776 = vpop.f32.mrb[0].mxu0
        %v1777 = vadd.f32 %v1616, %v1776
        %v1778 = vpop.f32.mrb[0].mxu0
        %v1779 = vpop.f32.mrb[0].mxu0
        %v1780 = vadd.f32 %v1619, %v1779
        %v1781 = vpop.f32.mrb[0].mxu0
        %1782 = vmatprep.mubr.bf16.mxu0 0
        %1783 = vmatmul.mubr.bf16.gmra.mrb[0].mxu0 %v1325
        %v1784 = vpop.f32.mrb[0].mxu0
        %v1785 = vadd.f32 %v1624, %v1784
        %v1786 = vpop.f32.mrb[0].mxu0
        %v1787 = vpop.f32.mrb[0].mxu0
        %v1788 = vadd.f32 %v1627, %v1787
        %v1789 = vpop.f32.mrb[0].mxu0
        %1790 = vmatprep.mubr.bf16.mxu0 0
        %1791 = vmatmul.mubr.bf16.gmra.mrb[0].mxu0 %v1328
        %v1792 = vpop.f32.mrb[0].mxu0
        %v1793 = vadd.f32 %v1632, %v1792
        %v1794 = vpop.f32.mrb[0].mxu0
        %v1795 = vpop.f32.mrb[0].mxu0
        %v1796 = vadd.f32 %v1635, %v1795
        %v1797 = vpop.f32.mrb[0].mxu0
        %1798 = vmatprep.mubr.bf16.mxu0 0
        %1799 = vmatmul.mubr.bf16.gmra.mrb[0].mxu0 %v1331
        %v1800 = vpop.f32.mrb[0].mxu0
        %v1801 = vadd.f32 %v1640, %v1800
        %v1802 = vpop.f32.mrb[0].mxu0
        %v1803 = vpop.f32.mrb[0].mxu0
        %v1804 = vadd.f32 %v1643, %v1803
        %v1805 = vpop.f32.mrb[0].mxu0
        %1806 = vmatprep.mubr.bf16.mxu0 0
        %1807 = vmatmul.mubr.bf16.gmra.mrb[0].mxu0 %v1334
        %v1808 = vpop.f32.mrb[0].mxu0
        %v1809 = vadd.f32 %v1648, %v1808
        %v1810 = vpop.f32.mrb[0].mxu0
        %v1811 = vpop.f32.mrb[0].mxu0
        %v1812 = vadd.f32 %v1651, %v1811
        %v1813 = vpop.f32.mrb[0].mxu0
        %1814 = vmatprep.mubr.bf16.mxu0 0
        %1815 = vmatmul.mubr.bf16.gmra.mrb[0].mxu0 %v1337
        %v1816 = vpop.f32.mrb[0].mxu0
        %v1817 = vadd.f32 %v1656, %v1816
        %v1818 = vpop.f32.mrb[0].mxu0
        %v1819 = vpop.f32.mrb[0].mxu0
        %v1820 = vadd.f32 %v1659, %v1819
        %v1821 = vpop.f32.mrb[0].mxu0
        %1822 = vmatprep.mubr.bf16.mxu0 0
        %1823 = vmatmul.mubr.bf16.gmra.mrb[0].mxu0 %v1340
        %v1824 = vpop.f32.mrb[0].mxu0
        %v1825 = vadd.f32 %v1664, %v1824
        %v1826 = vpop.f32.mrb[0].mxu0
        %v1827 = vpop.f32.mrb[0].mxu0
        %v1828 = vadd.f32 %v1667, %v1827
        %v1829 = vpop.f32.mrb[0].mxu0
        %1830 = vmatprep.mubr.bf16.mxu0 0
        %1831 = vmatmul.mubr.bf16.gmra.mrb[0].mxu0 %v1343
        %v1832 = vpop.f32.mrb[0].mxu0
        %v1833 = vadd.f32 %v1672, %v1832
        %v1834 = vpop.f32.mrb[0].mxu0
        %v1835 = vpop.f32.mrb[0].mxu0
        %v1836 = vadd.f32 %v1675, %v1835
        %v1837 = vpop.f32.mrb[0].mxu0
        %1838 = vmatprep.mubr.bf16.mxu0 0
        %1839 = vmatmul.mubr.bf16.gmra.mrb[0].mxu0 %v1346
        %v1840 = vpop.f32.mrb[0].mxu0
        %v1841 = vadd.f32 %v1680, %v1840
        %v1842 = vpop.f32.mrb[0].mxu0
        %v1843 = vpop.f32.mrb[0].mxu0
        %v1844 = vadd.f32 %v1683, %v1843
        %v1845 = vpop.f32.mrb[0].mxu0
        %1846 = vmatprep.mubr.bf16.mxu0 0
        %1847 = vmatmul.mubr.bf16.gmra.mrb[0].mxu0 %v1349
        %v1848 = vpop.f32.mrb[0].mxu0
        %v1849 = vadd.f32 %v1688, %v1848
        %v1850 = vpop.f32.mrb[0].mxu0
        %v1851 = vpop.f32.mrb[0].mxu0
        %v1852 = vadd.f32 %v1691, %v1851
        %v1853 = vpop.f32.mrb[0].mxu0
        %1854 = vmatprep.mubr.bf16.mxu0 0
        %1855 = vmatmul.mubr.bf16.gmra.mrb[0].mxu0 %v1352
        %v1856 = vpop.f32.mrb[0].mxu0
        %v1857 = vadd.f32 %v1696, %v1856
        %v1858 = vpop.f32.mrb[0].mxu0
        %v1859 = vpop.f32.mrb[0].mxu0
        %v1860 = vadd.f32 %v1699, %v1859
        %v1861 = vpop.f32.mrb[0].mxu0
        %1862 = vmatprep.mubr.bf16.mxu0 0
        %1863 = vmatmul.mubr.bf16.gmra.mrb[0].mxu0 %v1355
        %v1864 = vpop.f32.mrb[0].mxu0
        %v1865 = vadd.f32 %v1704, %v1864
        %v1866 = vpop.f32.mrb[0].mxu0
        %v1867 = vpop.f32.mrb[0].mxu0
        %v1868 = vadd.f32 %v1707, %v1867
        %v1869 = vpop.f32.mrb[0].mxu0
        %1870 = vdwg.mxu0
        %v1919 = vunpack.c.l.b16 %v1260
        %v1920 = vunpack.c.l.b16 %v1261
        %v1921 = vunpack.c.l.b16 %v1262
        %v1922 = vunpack.c.l.b16 %v1263
        %v1923 = vunpack.c.l.b16 %v1264
        %v1924 = vunpack.c.l.b16 %v1265
        %v1925 = vunpack.c.l.b16 %v1266
        %v1926 = vunpack.c.l.b16 %v1267
        %v1927 = vunpack.c.l.b16 %v1268
        %v1928 = vunpack.c.l.b16 %v1269
        %v1929 = vunpack.c.l.b16 %v1270
        %v1930 = vunpack.c.l.b16 %v1271
        %v1931 = vunpack.c.l.b16 %v1272
        %v1932 = vunpack.c.l.b16 %v1273
        %v1933 = vunpack.c.l.b16 %v1274
        %v1934 = vunpack.c.l.b16 %v1275
        %v1935 = vunpack.c.l.b16 %v1276
        %v1936 = vunpack.c.l.b16 %v1277
        %v1937 = vunpack.c.l.b16 %v1278
        %v1938 = vunpack.c.l.b16 %v1279
        %v1939 = vunpack.c.l.b16 %v1280
        %v1940 = vunpack.c.l.b16 %v1281
        %v1941 = vunpack.c.l.b16 %v1282
        %v1942 = vunpack.c.l.b16 %v1283
        %v1943 = vunpack.c.l.b16 %v1284
        %v1944 = vunpack.c.l.b16 %v1285
        %v1945 = vunpack.c.l.b16 %v1286
        %v1946 = vunpack.c.l.b16 %v1287
        %v1947 = vunpack.c.l.b16 %v1288
        %v1948 = vunpack.c.l.b16 %v1289
        %v1949 = vunpack.c.l.b16 %v1290
        %v1950 = vunpack.c.l.b16 %v1291
        %v1951 = vunpack.c.l.b16 %v1292
        %v1952 = vunpack.c.l.b16 %v1293
        %v1953 = vunpack.c.l.b16 %v1294
        %v1954 = vunpack.c.l.b16 %v1295
        %v1955 = vunpack.c.l.b16 %v1296
        %v1956 = vunpack.c.l.b16 %v1297
        %v1957 = vunpack.c.l.b16 %v1298
        %v1958 = vunpack.c.l.b16 %v1299
        %v1959 = vunpack.c.l.b16 %v1300
        %v1960 = vunpack.c.l.b16 %v1301
        %v1961 = vunpack.c.l.b16 %v1302
        %v1962 = vunpack.c.l.b16 %v1303
        %v1963 = vunpack.c.l.b16 %v1304
        %v1964 = vunpack.c.l.b16 %v1305
        %v1965 = vunpack.c.l.b16 %v1306
        %v1966 = vunpack.c.l.b16 %v1307
        %v1967 = vpack.c.b16 %v1920, %v1919
        %v1968 = vpack.c.b16 %v1922, %v1921
        %v1969 = vpack.c.b16 %v1924, %v1923
        %v1970 = vpack.c.b16 %v1926, %v1925
        %v1971 = vpack.c.b16 %v1928, %v1927
        %v1972 = vpack.c.b16 %v1930, %v1929
        %v1973 = vpack.c.b16 %v1932, %v1931
        %v1974 = vpack.c.b16 %v1934, %v1933
        %v1975 = vpack.c.b16 %v1936, %v1935
        %v1976 = vpack.c.b16 %v1938, %v1937
        %v1977 = vpack.c.b16 %v1940, %v1939
        %v1978 = vpack.c.b16 %v1942, %v1941
        %v1979 = vpack.c.b16 %v1944, %v1943
        %v1980 = vpack.c.b16 %v1946, %v1945
        %v1981 = vpack.c.b16 %v1948, %v1947
        %v1982 = vpack.c.b16 %v1950, %v1949
        %v1983 = vpack.c.b16 %v1952, %v1951
        %v1984 = vpack.c.b16 %v1954, %v1953
        %v1985 = vpack.c.b16 %v1956, %v1955
        %v1986 = vpack.c.b16 %v1958, %v1957
        %v1987 = vpack.c.b16 %v1960, %v1959
        %v1988 = vpack.c.b16 %v1962, %v1961
        %v1989 = vpack.c.b16 %v1964, %v1963
        %v1990 = vpack.c.b16 %v1966, %v1965
        %2015 = vmatprep.subr.bf16.mxu0 0
        %2016 = vmatpush1.bf16.msra.mxu0 %v1967
        %2017 = vmatprep.subr.bf16.mxu0 0
        %2018 = vmatpush1.bf16.msra.mxu0 %v1968
        %2019 = vmatprep.subr.bf16.mxu0 0
        %2020 = vmatpush1.bf16.msra.mxu0 %v1969
        %2021 = vmatprep.subr.bf16.mxu0 0
        %2022 = vmatpush1.bf16.msra.mxu0 %v1970
        %2023 = vmatprep.subr.bf16.mxu0 0
        %2024 = vmatpush1.bf16.msra.mxu0 %v1971
        %2025 = vmatprep.subr.bf16.mxu0 0
        %2026 = vmatpush1.bf16.msra.mxu0 %v1972
        %2027 = vmatprep.subr.bf16.mxu0 0
        %2028 = vmatpush1.bf16.msra.mxu0 %v1973
        %2029 = vmatprep.subr.bf16.mxu0 0
        %2030 = vmatpush1.bf16.msra.mxu0 %v1974
        %2031 = vmatprep.subr.bf16.mxu0 0
        %2032 = vmatpush1.bf16.msra.mxu0 %v1975
        %2033 = vmatprep.subr.bf16.mxu0 0
        %2034 = vmatpush1.bf16.msra.mxu0 %v1976
        %2035 = vmatprep.subr.bf16.mxu0 0
        %2036 = vmatpush1.bf16.msra.mxu0 %v1977
        %2037 = vmatprep.subr.bf16.mxu0 0
        %2038 = vmatpush1.bf16.msra.mxu0 %v1978
        %2039 = vmatprep.subr.bf16.mxu0 0
        %2040 = vmatpush1.bf16.msra.mxu0 %v1979
        %2041 = vmatprep.subr.bf16.mxu0 0
        %2042 = vmatpush1.bf16.msra.mxu0 %v1980
        %2043 = vmatprep.subr.bf16.mxu0 0
        %2044 = vmatpush1.bf16.msra.mxu0 %v1981
        %2045 = vmatprep.subr.bf16.mxu0 0
        %2046 = vmatpush1.bf16.msra.mxu0 %v1982
        %2047 = vmatprep.mubr.bf16.mxu0 %v1213
        %2048 = vmatmul.mubr.bf16.gmra.mrb[0].mxu0 %v1212
        %v2049 = vpop.f32.mrb[0].mxu0
        %v2050 = vadd.f32 %v1745, %v2049
        %v2051 = vpop.f32.mrb[0].mxu0
        %v2052 = vpop.f32.mrb[0].mxu0
        %v2053 = vadd.f32 %v1748, %v2052
        %v2054 = vpop.f32.mrb[0].mxu0
        %2055 = vmatprep.mubr.bf16.mxu0 %v1216
        %2056 = vmatmul.mubr.bf16.gmra.mrb[0].mxu0 %v1215
        %v2057 = vpop.f32.mrb[0].mxu0
        %v2058 = vadd.f32 %v1753, %v2057
        %v2059 = vpop.f32.mrb[0].mxu0
        %v2060 = vpop.f32.mrb[0].mxu0
        %v2061 = vadd.f32 %v1756, %v2060
        %v2062 = vpop.f32.mrb[0].mxu0
        %2063 = vmatprep.mubr.bf16.mxu0 %v1219
        %2064 = vmatmul.mubr.bf16.gmra.mrb[0].mxu0 %v1218
        %v2065 = vpop.f32.mrb[0].mxu0
        %v2066 = vadd.f32 %v1761, %v2065
        %v2067 = vpop.f32.mrb[0].mxu0
        %v2068 = vpop.f32.mrb[0].mxu0
        %v2069 = vadd.f32 %v1764, %v2068
        %v2070 = vpop.f32.mrb[0].mxu0
        %2071 = vmatprep.mubr.bf16.mxu0 %v1222
        %2072 = vmatmul.mubr.bf16.gmra.mrb[0].mxu0 %v1221
        %v2073 = vpop.f32.mrb[0].mxu0
        %v2074 = vadd.f32 %v1769, %v2073
        %v2075 = vpop.f32.mrb[0].mxu0
        %v2076 = vpop.f32.mrb[0].mxu0
        %v2077 = vadd.f32 %v1772, %v2076
        %v2078 = vpop.f32.mrb[0].mxu0
        %2079 = vmatprep.mubr.bf16.mxu0 %v1225
        %2080 = vmatmul.mubr.bf16.gmra.mrb[0].mxu0 %v1224
        %v2081 = vpop.f32.mrb[0].mxu0
        %v2082 = vadd.f32 %v1777, %v2081
        %v2083 = vpop.f32.mrb[0].mxu0
        %v2084 = vpop.f32.mrb[0].mxu0
        %v2085 = vadd.f32 %v1780, %v2084
        %v2086 = vpop.f32.mrb[0].mxu0
        %2087 = vmatprep.mubr.bf16.mxu0 %v1228
        %2088 = vmatmul.mubr.bf16.gmra.mrb[0].mxu0 %v1227
        %v2089 = vpop.f32.mrb[0].mxu0
        %v2090 = vadd.f32 %v1785, %v2089
        %v2091 = vpop.f32.mrb[0].mxu0
        %v2092 = vpop.f32.mrb[0].mxu0
        %v2093 = vadd.f32 %v1788, %v2092
        %v2094 = vpop.f32.mrb[0].mxu0
        %2095 = vmatprep.mubr.bf16.mxu0 %v1231
        %2096 = vmatmul.mubr.bf16.gmra.mrb[0].mxu0 %v1230
        %v2097 = vpop.f32.mrb[0].mxu0
        %v2098 = vadd.f32 %v1793, %v2097
        %v2099 = vpop.f32.mrb[0].mxu0
        %v2100 = vpop.f32.mrb[0].mxu0
        %v2101 = vadd.f32 %v1796, %v2100
        %v2102 = vpop.f32.mrb[0].mxu0
        %2103 = vmatprep.mubr.bf16.mxu0 %v1234
        %2104 = vmatmul.mubr.bf16.gmra.mrb[0].mxu0 %v1233
        %v2105 = vpop.f32.mrb[0].mxu0
        %v2106 = vadd.f32 %v1801, %v2105
        %v2107 = vpop.f32.mrb[0].mxu0
        %v2108 = vpop.f32.mrb[0].mxu0
        %v2109 = vadd.f32 %v1804, %v2108
        %v2110 = vpop.f32.mrb[0].mxu0
        %2111 = vmatprep.mubr.bf16.mxu0 %v1237
        %2112 = vmatmul.mubr.bf16.gmra.mrb[0].mxu0 %v1236
        %v2113 = vpop.f32.mrb[0].mxu0
        %v2114 = vadd.f32 %v1809, %v2113
        %v2115 = vpop.f32.mrb[0].mxu0
        %v2116 = vpop.f32.mrb[0].mxu0
        %v2117 = vadd.f32 %v1812, %v2116
        %v2118 = vpop.f32.mrb[0].mxu0
        %2119 = vmatprep.mubr.bf16.mxu0 %v1240
        %2120 = vmatmul.mubr.bf16.gmra.mrb[0].mxu0 %v1239
        %v2121 = vpop.f32.mrb[0].mxu0
        %v2122 = vadd.f32 %v1817, %v2121
        %v2123 = vpop.f32.mrb[0].mxu0
        %v2124 = vpop.f32.mrb[0].mxu0
        %v2125 = vadd.f32 %v1820, %v2124
        %v2126 = vpop.f32.mrb[0].mxu0
        %2127 = vmatprep.mubr.bf16.mxu0 %v1243
        %2128 = vmatmul.mubr.bf16.gmra.mrb[0].mxu0 %v1242
        %v2129 = vpop.f32.mrb[0].mxu0
        %v2130 = vadd.f32 %v1825, %v2129
        %v2131 = vpop.f32.mrb[0].mxu0
        %v2132 = vpop.f32.mrb[0].mxu0
        %v2133 = vadd.f32 %v1828, %v2132
        %v2134 = vpop.f32.mrb[0].mxu0
        %2135 = vmatprep.mubr.bf16.mxu0 %v1246
        %2136 = vmatmul.mubr.bf16.gmra.mrb[0].mxu0 %v1245
        %v2137 = vpop.f32.mrb[0].mxu0
        %v2138 = vadd.f32 %v1833, %v2137
        %v2139 = vpop.f32.mrb[0].mxu0
        %v2140 = vpop.f32.mrb[0].mxu0
        %v2141 = vadd.f32 %v1836, %v2140
        %v2142 = vpop.f32.mrb[0].mxu0
        %2143 = vmatprep.mubr.bf16.mxu0 %v1249
        %2144 = vmatmul.mubr.bf16.gmra.mrb[0].mxu0 %v1248
        %v2145 = vpop.f32.mrb[0].mxu0
        %v2146 = vadd.f32 %v1841, %v2145
        %v2147 = vpop.f32.mrb[0].mxu0
        %v2148 = vpop.f32.mrb[0].mxu0
        %v2149 = vadd.f32 %v1844, %v2148
        %v2150 = vpop.f32.mrb[0].mxu0
        %2151 = vmatprep.mubr.bf16.mxu0 %v1252
        %2152 = vmatmul.mubr.bf16.gmra.mrb[0].mxu0 %v1251
        %v2153 = vpop.f32.mrb[0].mxu0
        %v2154 = vadd.f32 %v1849, %v2153
        %v2155 = vpop.f32.mrb[0].mxu0
        %v2156 = vpop.f32.mrb[0].mxu0
        %v2157 = vadd.f32 %v1852, %v2156
        %v2158 = vpop.f32.mrb[0].mxu0
        %2159 = vmatprep.mubr.bf16.mxu0 %v1255
        %2160 = vmatmul.mubr.bf16.gmra.mrb[0].mxu0 %v1254
        %v2161 = vpop.f32.mrb[0].mxu0
        %v2162 = vadd.f32 %v1857, %v2161
        %v2163 = vpop.f32.mrb[0].mxu0
        %v2164 = vpop.f32.mrb[0].mxu0
        %v2165 = vadd.f32 %v1860, %v2164
        %v2166 = vpop.f32.mrb[0].mxu0
        %2167 = vmatprep.mubr.bf16.mxu0 %v1258
        %2168 = vmatmul.mubr.bf16.gmra.mrb[0].mxu0 %v1257
        %v2169 = vpop.f32.mrb[0].mxu0
        %v2170 = vadd.f32 %v1865, %v2169
        %v2171 = vpop.f32.mrb[0].mxu0
        %v2172 = vpop.f32.mrb[0].mxu0
        %v2173 = vadd.f32 %v1868, %v2172
        %v2174 = vpop.f32.mrb[0].mxu0
        %2175 = vdwg.mxu0
        %2176 = vmatprep.subr.bf16.mxu0 0
        %2177 = vmatpush1.bf16.msra.mxu0 %v1983
        %2178 = vmatprep.subr.bf16.mxu0 0
        %2179 = vmatpush1.bf16.msra.mxu0 %v1984
        %2180 = vmatprep.subr.bf16.mxu0 0
        %2181 = vmatpush1.bf16.msra.mxu0 %v1985
        %2182 = vmatprep.subr.bf16.mxu0 0
        %2183 = vmatpush1.bf16.msra.mxu0 %v1986
        %2184 = vmatprep.subr.bf16.mxu0 0
        %2185 = vmatpush1.bf16.msra.mxu0 %v1987
        %2186 = vmatprep.subr.bf16.mxu0 0
        %2187 = vmatpush1.bf16.msra.mxu0 %v1988
        %2188 = vmatprep.subr.bf16.mxu0 0
        %2189 = vmatpush1.bf16.msra.mxu0 %v1989
        %2190 = vmatprep.subr.bf16.mxu0 0
        %2191 = vmatpush1.bf16.msra.mxu0 %v1990
        %2192 = vmatprep.subr.bf16.mxu0 0
        %2193 = vmatpush1.bf16.msra.mxu0 0
        %2194 = vmatprep.subr.bf16.mxu0 0
        %2195 = vmatpush1.bf16.msra.mxu0 0
        %2196 = vmatprep.subr.bf16.mxu0 0
        %2197 = vmatpush1.bf16.msra.mxu0 0
        %2198 = vmatprep.subr.bf16.mxu0 0
        %2199 = vmatpush1.bf16.msra.mxu0 0
        %2200 = vmatprep.subr.bf16.mxu0 0
        %2201 = vmatpush1.bf16.msra.mxu0 0
        %2202 = vmatprep.subr.bf16.mxu0 0
        %2203 = vmatpush1.bf16.msra.mxu0 0
        %2204 = vmatprep.subr.bf16.mxu0 0
        %2205 = vmatpush1.bf16.msra.mxu0 0
        %2206 = vmatprep.subr.bf16.mxu0 0
        %2207 = vmatpush1.bf16.msra.mxu0 0
        %2208 = vmatprep.mubr.bf16.mxu0 0
        %2209 = vmatmul.mubr.bf16.gmra.mrb[0].mxu0 %v1214
        %v2210 = vpop.f32.mrb[0].mxu0
        %v2211 = vadd.f32 %v2050, %v2210
        %v2212 = vpop.f32.mrb[0].mxu0
        %v2213 = vpop.f32.mrb[0].mxu0
        %v2214 = vadd.f32 %v2053, %v2213
        %v2215 = vpop.f32.mrb[0].mxu0
        %2216 = vmatprep.mubr.bf16.mxu0 0
        %2217 = vmatmul.mubr.bf16.gmra.mrb[0].mxu0 %v1217
        %v2218 = vpop.f32.mrb[0].mxu0
        %v2219 = vadd.f32 %v2058, %v2218
        %v2220 = vpop.f32.mrb[0].mxu0
        %v2221 = vpop.f32.mrb[0].mxu0
        %v2222 = vadd.f32 %v2061, %v2221
        %v2223 = vpop.f32.mrb[0].mxu0
        %2224 = vmatprep.mubr.bf16.mxu0 0
        %2225 = vmatmul.mubr.bf16.gmra.mrb[0].mxu0 %v1220
        %v2226 = vpop.f32.mrb[0].mxu0
        %v2227 = vadd.f32 %v2066, %v2226
        %v2228 = vpop.f32.mrb[0].mxu0
        %v2229 = vpop.f32.mrb[0].mxu0
        %v2230 = vadd.f32 %v2069, %v2229
        %v2231 = vpop.f32.mrb[0].mxu0
        %2232 = vmatprep.mubr.bf16.mxu0 0
        %2233 = vmatmul.mubr.bf16.gmra.mrb[0].mxu0 %v1223
        %v2234 = vpop.f32.mrb[0].mxu0
        %v2235 = vadd.f32 %v2074, %v2234
        %v2236 = vpop.f32.mrb[0].mxu0
        %v2237 = vpop.f32.mrb[0].mxu0
        %v2238 = vadd.f32 %v2077, %v2237
        %v2239 = vpop.f32.mrb[0].mxu0
        %2240 = vmatprep.mubr.bf16.mxu0 0
        %2241 = vmatmul.mubr.bf16.gmra.mrb[0].mxu0 %v1226
        %v2242 = vpop.f32.mrb[0].mxu0
        %v2243 = vadd.f32 %v2082, %v2242
        %v2244 = vpop.f32.mrb[0].mxu0
        %v2245 = vpop.f32.mrb[0].mxu0
        %v2246 = vadd.f32 %v2085, %v2245
        %v2247 = vpop.f32.mrb[0].mxu0
        %2248 = vmatprep.mubr.bf16.mxu0 0
        %2249 = vmatmul.mubr.bf16.gmra.mrb[0].mxu0 %v1229
        %v2250 = vpop.f32.mrb[0].mxu0
        %v2251 = vadd.f32 %v2090, %v2250
        %v2252 = vpop.f32.mrb[0].mxu0
        %v2253 = vpop.f32.mrb[0].mxu0
        %v2254 = vadd.f32 %v2093, %v2253
        %v2255 = vpop.f32.mrb[0].mxu0
        %2256 = vmatprep.mubr.bf16.mxu0 0
        %2257 = vmatmul.mubr.bf16.gmra.mrb[0].mxu0 %v1232
        %v2258 = vpop.f32.mrb[0].mxu0
        %v2259 = vadd.f32 %v2098, %v2258
        %v2260 = vpop.f32.mrb[0].mxu0
        %v2261 = vpop.f32.mrb[0].mxu0
        %v2262 = vadd.f32 %v2101, %v2261
        %v2263 = vpop.f32.mrb[0].mxu0
        %2264 = vmatprep.mubr.bf16.mxu0 0
        %2265 = vmatmul.mubr.bf16.gmra.mrb[0].mxu0 %v1235
        %v2266 = vpop.f32.mrb[0].mxu0
        %v2267 = vadd.f32 %v2106, %v2266
        %v2268 = vpop.f32.mrb[0].mxu0
        %v2269 = vpop.f32.mrb[0].mxu0
        %v2270 = vadd.f32 %v2109, %v2269
        %v2271 = vpop.f32.mrb[0].mxu0
        %2272 = vmatprep.mubr.bf16.mxu0 0
        %2273 = vmatmul.mubr.bf16.gmra.mrb[0].mxu0 %v1238
        %v2274 = vpop.f32.mrb[0].mxu0
        %v2275 = vadd.f32 %v2114, %v2274
        %v2276 = vpop.f32.mrb[0].mxu0
        %v2277 = vpop.f32.mrb[0].mxu0
        %v2278 = vadd.f32 %v2117, %v2277
        %v2279 = vpop.f32.mrb[0].mxu0
        %2280 = vmatprep.mubr.bf16.mxu0 0
        %2281 = vmatmul.mubr.bf16.gmra.mrb[0].mxu0 %v1241
        %v2282 = vpop.f32.mrb[0].mxu0
        %v2283 = vadd.f32 %v2122, %v2282
        %v2284 = vpop.f32.mrb[0].mxu0
        %v2285 = vpop.f32.mrb[0].mxu0
        %v2286 = vadd.f32 %v2125, %v2285
        %v2287 = vpop.f32.mrb[0].mxu0
        %2288 = vmatprep.mubr.bf16.mxu0 0
        %2289 = vmatmul.mubr.bf16.gmra.mrb[0].mxu0 %v1244
        %v2290 = vpop.f32.mrb[0].mxu0
        %v2291 = vadd.f32 %v2130, %v2290
        %v2292 = vpop.f32.mrb[0].mxu0
        %v2293 = vpop.f32.mrb[0].mxu0
        %v2294 = vadd.f32 %v2133, %v2293
        %v2295 = vpop.f32.mrb[0].mxu0
        %2296 = vmatprep.mubr.bf16.mxu0 0
        %2297 = vmatmul.mubr.bf16.gmra.mrb[0].mxu0 %v1247
        %v2298 = vpop.f32.mrb[0].mxu0
        %v2299 = vadd.f32 %v2138, %v2298
        %v2300 = vpop.f32.mrb[0].mxu0
        %v2301 = vpop.f32.mrb[0].mxu0
        %v2302 = vadd.f32 %v2141, %v2301
        %v2303 = vpop.f32.mrb[0].mxu0
        %2304 = vmatprep.mubr.bf16.mxu0 0
        %2305 = vmatmul.mubr.bf16.gmra.mrb[0].mxu0 %v1250
        %v2306 = vpop.f32.mrb[0].mxu0
        %v2307 = vadd.f32 %v2146, %v2306
        %v2308 = vpop.f32.mrb[0].mxu0
        %v2309 = vpop.f32.mrb[0].mxu0
        %v2310 = vadd.f32 %v2149, %v2309
        %v2311 = vpop.f32.mrb[0].mxu0
        %2312 = vmatprep.mubr.bf16.mxu0 0
        %2313 = vmatmul.mubr.bf16.gmra.mrb[0].mxu0 %v1253
        %v2314 = vpop.f32.mrb[0].mxu0
        %v2315 = vadd.f32 %v2154, %v2314
        %v2316 = vpop.f32.mrb[0].mxu0
        %v2317 = vpop.f32.mrb[0].mxu0
        %v2318 = vadd.f32 %v2157, %v2317
        %v2319 = vpop.f32.mrb[0].mxu0
        %2320 = vmatprep.mubr.bf16.mxu0 0
        %2321 = vmatmul.mubr.bf16.gmra.mrb[0].mxu0 %v1256
        %v2322 = vpop.f32.mrb[0].mxu0
        %v2323 = vadd.f32 %v2162, %v2322
        %v2324 = vpop.f32.mrb[0].mxu0
        %v2325 = vpop.f32.mrb[0].mxu0
        %v2326 = vadd.f32 %v2165, %v2325
        %v2327 = vpop.f32.mrb[0].mxu0
        %2328 = vmatprep.mubr.bf16.mxu0 0
        %2329 = vmatmul.mubr.bf16.gmra.mrb[0].mxu0 %v1259
        %v2330 = vpop.f32.mrb[0].mxu0
        %v2331 = vadd.f32 %v2170, %v2330
        %v2332 = vpop.f32.mrb[0].mxu0
        %v2333 = vpop.f32.mrb[0].mxu0
        %v2334 = vadd.f32 %v2173, %v2333
        %v2335 = vpop.f32.mrb[0].mxu0
        %2336 = vdwg.mxu0
        %s2337 = scalar_lea.vmem [#allocation2], 48
        %v2338 = vld [vmem:[%s2337] sm:$0xff]
        %v2339 = vld [vmem:[%s2337 + $0x8] sm:$0xff]
        %v2340 = vld [vmem:[%s2337 + $0x10] sm:$0xff]
        %v2341 = vld [vmem:[%s2337 + $0x18] sm:$0xff]
        %v2342 = vld [vmem:[%s2337 + $0x20] sm:$0xff]
        %v2343 = vld [vmem:[%s2337 + $0x28] sm:$0xff]
        %v2344 = vld [vmem:[%s2337 + $0x30] sm:$0xff]
        %v2345 = vld [vmem:[%s2337 + $0x38] sm:$0xff]
        %v2346 = vld [vmem:[%s2337 + $0x40] sm:$0xff]
        %v2347 = vld [vmem:[%s2337 + $0x48] sm:$0xff]
        %v2348 = vld [vmem:[%s2337 + $0x50] sm:$0xff]
        %v2349 = vld [vmem:[%s2337 + $0x58] sm:$0xff]
        %v2350 = vld [vmem:[%s2337 + $0x60] sm:$0xff]
        %v2351 = vld [vmem:[%s2337 + $0x68] sm:$0xff]
        %v2352 = vld [vmem:[%s2337 + $0x70] sm:$0xff]
        %v2353 = vld [vmem:[%s2337 + $0x78] sm:$0xff]
        %v2354 = vld [vmem:[%s2337 + $0x80] sm:$0xff]
        %v2355 = vld [vmem:[%s2337 + $0x88] sm:$0xff]
        %v2356 = vld [vmem:[%s2337 + $0x90] sm:$0xff]
        %v2357 = vld [vmem:[%s2337 + $0x98] sm:$0xff]
        %v2358 = vld [vmem:[%s2337 + $0xa0] sm:$0xff]
        %v2359 = vld [vmem:[%s2337 + $0xa8] sm:$0xff]
        %v2360 = vld [vmem:[%s2337 + $0xb0] sm:$0xff]
        %v2361 = vld [vmem:[%s2337 + $0xb8] sm:$0xff]
        %v2362 = vld [vmem:[%s2337 + $0xc0] sm:$0xff]
        %v2363 = vld [vmem:[%s2337 + $0xc8] sm:$0xff]
        %v2364 = vld [vmem:[%s2337 + $0xd0] sm:$0xff]
        %v2365 = vld [vmem:[%s2337 + $0xd8] sm:$0xff]
        %v2366 = vld [vmem:[%s2337 + $0xe0] sm:$0xff]
        %v2367 = vld [vmem:[%s2337 + $0xe8] sm:$0xff]
        %v2368 = vld [vmem:[%s2337 + $0xf0] sm:$0xff]
        %v2369 = vld [vmem:[%s2337 + $0xf8] sm:$0xff]
        %v2370 = vld [vmem:[%s2337 + $0x100] sm:$0xff]
        %v2371 = vld [vmem:[%s2337 + $0x108] sm:$0xff]
        %v2372 = vld [vmem:[%s2337 + $0x110] sm:$0xff]
        %v2373 = vld [vmem:[%s2337 + $0x118] sm:$0xff]
        %v2374 = vld [vmem:[%s2337 + $0x120] sm:$0xff]
        %v2375 = vld [vmem:[%s2337 + $0x128] sm:$0xff]
        %v2376 = vld [vmem:[%s2337 + $0x130] sm:$0xff]
        %v2377 = vld [vmem:[%s2337 + $0x138] sm:$0xff]
        %v2378 = vld [vmem:[%s2337 + $0x140] sm:$0xff]
        %v2379 = vld [vmem:[%s2337 + $0x148] sm:$0xff]
        %v2380 = vld [vmem:[%s2337 + $0x150] sm:$0xff]
        %v2381 = vld [vmem:[%s2337 + $0x158] sm:$0xff]
        %v2382 = vld [vmem:[%s2337 + $0x160] sm:$0xff]
        %v2383 = vld [vmem:[%s2337 + $0x168] sm:$0xff]
        %v2384 = vld [vmem:[%s2337 + $0x170] sm:$0xff]
        %v2385 = vld [vmem:[%s2337 + $0x178] sm:$0xff]
        %s2386 = scalar_lea.vmem [#allocation9], 384
        %v2387 = vld [vmem:[%s2386] sm:$0xf]
        %v2388 = vld [vmem:[%s2386 + $0x4] sm:$0xf]
        %v2389 = vld [vmem:[%s2386 + $0x8] sm:$0xf]
        %v2390 = vld [vmem:[%s2386 + $0xc] sm:$0xf]
        %v2391 = vld [vmem:[%s2386 + $0x10] sm:$0xf]
        %v2392 = vld [vmem:[%s2386 + $0x14] sm:$0xf]
        %v2393 = vld [vmem:[%s2386 + $0x18] sm:$0xf]
        %v2394 = vld [vmem:[%s2386 + $0x1c] sm:$0xf]
        %v2395 = vld [vmem:[%s2386 + $0x20] sm:$0xf]
        %v2396 = vld [vmem:[%s2386 + $0x24] sm:$0xf]
        %v2397 = vld [vmem:[%s2386 + $0x28] sm:$0xf]
        %v2398 = vld [vmem:[%s2386 + $0x2c] sm:$0xf]
        %v2399 = vld [vmem:[%s2386 + $0x30] sm:$0xf]
        %v2400 = vld [vmem:[%s2386 + $0x34] sm:$0xf]
        %v2401 = vld [vmem:[%s2386 + $0x38] sm:$0xf]
        %v2402 = vld [vmem:[%s2386 + $0x3c] sm:$0xf]
        %v2403 = vld [vmem:[%s2386 + $0x40] sm:$0xf]
        %v2404 = vld [vmem:[%s2386 + $0x44] sm:$0xf]
        %v2405 = vld [vmem:[%s2386 + $0x48] sm:$0xf]
        %v2406 = vld [vmem:[%s2386 + $0x4c] sm:$0xf]
        %v2407 = vld [vmem:[%s2386 + $0x50] sm:$0xf]
        %v2408 = vld [vmem:[%s2386 + $0x54] sm:$0xf]
        %v2409 = vld [vmem:[%s2386 + $0x58] sm:$0xf]
        %v2410 = vld [vmem:[%s2386 + $0x5c] sm:$0xf]
        %v2411 = vld [vmem:[%s2386 + $0x60] sm:$0xf]
        %v2412 = vld [vmem:[%s2386 + $0x64] sm:$0xf]
        %v2413 = vld [vmem:[%s2386 + $0x68] sm:$0xf]
        %v2414 = vld [vmem:[%s2386 + $0x6c] sm:$0xf]
        %v2415 = vld [vmem:[%s2386 + $0x70] sm:$0xf]
        %v2416 = vld [vmem:[%s2386 + $0x74] sm:$0xf]
        %v2417 = vld [vmem:[%s2386 + $0x78] sm:$0xf]
        %v2418 = vld [vmem:[%s2386 + $0x7c] sm:$0xf]
        %v2419 = vld [vmem:[%s2386 + $0x80] sm:$0xf]
        %v2420 = vld [vmem:[%s2386 + $0x84] sm:$0xf]
        %v2421 = vld [vmem:[%s2386 + $0x88] sm:$0xf]
        %v2422 = vld [vmem:[%s2386 + $0x8c] sm:$0xf]
        %v2423 = vld [vmem:[%s2386 + $0x90] sm:$0xf]
        %v2424 = vld [vmem:[%s2386 + $0x94] sm:$0xf]
        %v2425 = vld [vmem:[%s2386 + $0x98] sm:$0xf]
        %v2426 = vld [vmem:[%s2386 + $0x9c] sm:$0xf]
        %v2427 = vld [vmem:[%s2386 + $0xa0] sm:$0xf]
        %v2428 = vld [vmem:[%s2386 + $0xa4] sm:$0xf]
        %v2429 = vld [vmem:[%s2386 + $0xa8] sm:$0xf]
        %v2430 = vld [vmem:[%s2386 + $0xac] sm:$0xf]
        %v2431 = vld [vmem:[%s2386 + $0xb0] sm:$0xf]
        %v2432 = vld [vmem:[%s2386 + $0xb4] sm:$0xf]
        %v2433 = vld [vmem:[%s2386 + $0xb8] sm:$0xf]
        %v2434 = vld [vmem:[%s2386 + $0xbc] sm:$0xf]
        %v2483 = vunpack.c.l.b16 %v2387
        %v2484 = vunpack.c.l.b16 %v2388
        %v2485 = vunpack.c.l.b16 %v2389
        %v2486 = vunpack.c.l.b16 %v2390
        %v2487 = vunpack.c.l.b16 %v2391
        %v2488 = vunpack.c.l.b16 %v2392
        %v2489 = vunpack.c.l.b16 %v2393
        %v2490 = vunpack.c.l.b16 %v2394
        %v2491 = vunpack.c.l.b16 %v2395
        %v2492 = vunpack.c.l.b16 %v2396
        %v2493 = vunpack.c.l.b16 %v2397
        %v2494 = vunpack.c.l.b16 %v2398
        %v2495 = vunpack.c.l.b16 %v2399
        %v2496 = vunpack.c.l.b16 %v2400
        %v2497 = vunpack.c.l.b16 %v2401
        %v2498 = vunpack.c.l.b16 %v2402
        %v2499 = vunpack.c.l.b16 %v2403
        %v2500 = vunpack.c.l.b16 %v2404
        %v2501 = vunpack.c.l.b16 %v2405
        %v2502 = vunpack.c.l.b16 %v2406
        %v2503 = vunpack.c.l.b16 %v2407
        %v2504 = vunpack.c.l.b16 %v2408
        %v2505 = vunpack.c.l.b16 %v2409
        %v2506 = vunpack.c.l.b16 %v2410
        %v2507 = vunpack.c.l.b16 %v2411
        %v2508 = vunpack.c.l.b16 %v2412
        %v2509 = vunpack.c.l.b16 %v2413
        %v2510 = vunpack.c.l.b16 %v2414
        %v2511 = vunpack.c.l.b16 %v2415
        %v2512 = vunpack.c.l.b16 %v2416
        %v2513 = vunpack.c.l.b16 %v2417
        %v2514 = vunpack.c.l.b16 %v2418
        %v2515 = vunpack.c.l.b16 %v2419
        %v2516 = vunpack.c.l.b16 %v2420
        %v2517 = vunpack.c.l.b16 %v2421
        %v2518 = vunpack.c.l.b16 %v2422
        %v2519 = vunpack.c.l.b16 %v2423
        %v2520 = vunpack.c.l.b16 %v2424
        %v2521 = vunpack.c.l.b16 %v2425
        %v2522 = vunpack.c.l.b16 %v2426
        %v2523 = vunpack.c.l.b16 %v2427
        %v2524 = vunpack.c.l.b16 %v2428
        %v2525 = vunpack.c.l.b16 %v2429
        %v2526 = vunpack.c.l.b16 %v2430
        %v2527 = vunpack.c.l.b16 %v2431
        %v2528 = vunpack.c.l.b16 %v2432
        %v2529 = vunpack.c.l.b16 %v2433
        %v2530 = vunpack.c.l.b16 %v2434
        %v2531 = vpack.c.b16 %v2484, %v2483
        %v2532 = vpack.c.b16 %v2486, %v2485
        %v2533 = vpack.c.b16 %v2488, %v2487
        %v2534 = vpack.c.b16 %v2490, %v2489
        %v2535 = vpack.c.b16 %v2492, %v2491
        %v2536 = vpack.c.b16 %v2494, %v2493
        %v2537 = vpack.c.b16 %v2496, %v2495
        %v2538 = vpack.c.b16 %v2498, %v2497
        %v2539 = vpack.c.b16 %v2500, %v2499
        %v2540 = vpack.c.b16 %v2502, %v2501
        %v2541 = vpack.c.b16 %v2504, %v2503
        %v2542 = vpack.c.b16 %v2506, %v2505
        %v2543 = vpack.c.b16 %v2508, %v2507
        %v2544 = vpack.c.b16 %v2510, %v2509
        %v2545 = vpack.c.b16 %v2512, %v2511
        %v2546 = vpack.c.b16 %v2514, %v2513
        %v2547 = vpack.c.b16 %v2516, %v2515
        %v2548 = vpack.c.b16 %v2518, %v2517
        %v2549 = vpack.c.b16 %v2520, %v2519
        %v2550 = vpack.c.b16 %v2522, %v2521
        %v2551 = vpack.c.b16 %v2524, %v2523
        %v2552 = vpack.c.b16 %v2526, %v2525
        %v2553 = vpack.c.b16 %v2528, %v2527
        %v2554 = vpack.c.b16 %v2530, %v2529
        %2579 = vmatprep.subr.bf16.mxu0 0
        %2580 = vmatpush1.bf16.msra.mxu0 %v2531
        %2581 = vmatprep.subr.bf16.mxu0 0
        %2582 = vmatpush1.bf16.msra.mxu0 %v2532
        %2583 = vmatprep.subr.bf16.mxu0 0
        %2584 = vmatpush1.bf16.msra.mxu0 %v2533
        %2585 = vmatprep.subr.bf16.mxu0 0
        %2586 = vmatpush1.bf16.msra.mxu0 %v2534
        %2587 = vmatprep.subr.bf16.mxu0 0
        %2588 = vmatpush1.bf16.msra.mxu0 %v2535
        %2589 = vmatprep.subr.bf16.mxu0 0
        %2590 = vmatpush1.bf16.msra.mxu0 %v2536
        %2591 = vmatprep.subr.bf16.mxu0 0
        %2592 = vmatpush1.bf16.msra.mxu0 %v2537
        %2593 = vmatprep.subr.bf16.mxu0 0
        %2594 = vmatpush1.bf16.msra.mxu0 %v2538
        %2595 = vmatprep.subr.bf16.mxu0 0
        %2596 = vmatpush1.bf16.msra.mxu0 %v2539
        %2597 = vmatprep.subr.bf16.mxu0 0
        %2598 = vmatpush1.bf16.msra.mxu0 %v2540
        %2599 = vmatprep.subr.bf16.mxu0 0
        %2600 = vmatpush1.bf16.msra.mxu0 %v2541
        %2601 = vmatprep.subr.bf16.mxu0 0
        %2602 = vmatpush1.bf16.msra.mxu0 %v2542
        %2603 = vmatprep.subr.bf16.mxu0 0
        %2604 = vmatpush1.bf16.msra.mxu0 %v2543
        %2605 = vmatprep.subr.bf16.mxu0 0
        %2606 = vmatpush1.bf16.msra.mxu0 %v2544
        %2607 = vmatprep.subr.bf16.mxu0 0
        %2608 = vmatpush1.bf16.msra.mxu0 %v2545
        %2609 = vmatprep.subr.bf16.mxu0 0
        %2610 = vmatpush1.bf16.msra.mxu0 %v2546
        %2611 = vmatprep.mubr.bf16.mxu0 %v2339
        %2612 = vmatmul.mubr.bf16.gmra.mrb[0].mxu0 %v2338
        %v2613 = vpop.f32.mrb[0].mxu0
        %v2614 = vadd.f32 0.0, %v2613
        %v2615 = vpop.f32.mrb[0].mxu0
        %v2616 = vpop.f32.mrb[0].mxu0
        %v2617 = vadd.f32 0.0, %v2616
        %v2618 = vpop.f32.mrb[0].mxu0
        %2619 = vmatprep.mubr.bf16.mxu0 %v2342
        %2620 = vmatmul.mubr.bf16.gmra.mrb[0].mxu0 %v2341
        %v2621 = vpop.f32.mrb[0].mxu0
        %v2622 = vadd.f32 0.0, %v2621
        %v2623 = vpop.f32.mrb[0].mxu0
        %v2624 = vpop.f32.mrb[0].mxu0
        %v2625 = vadd.f32 0.0, %v2624
        %v2626 = vpop.f32.mrb[0].mxu0
        %2627 = vmatprep.mubr.bf16.mxu0 %v2345
        %2628 = vmatmul.mubr.bf16.gmra.mrb[0].mxu0 %v2344
        %v2629 = vpop.f32.mrb[0].mxu0
        %v2630 = vadd.f32 0.0, %v2629
        %v2631 = vpop.f32.mrb[0].mxu0
        %v2632 = vpop.f32.mrb[0].mxu0
        %v2633 = vadd.f32 0.0, %v2632
        %v2634 = vpop.f32.mrb[0].mxu0
        %2635 = vmatprep.mubr.bf16.mxu0 %v2348
        %2636 = vmatmul.mubr.bf16.gmra.mrb[0].mxu0 %v2347
        %v2637 = vpop.f32.mrb[0].mxu0
        %v2638 = vadd.f32 0.0, %v2637
        %v2639 = vpop.f32.mrb[0].mxu0
        %v2640 = vpop.f32.mrb[0].mxu0
        %v2641 = vadd.f32 0.0, %v2640
        %v2642 = vpop.f32.mrb[0].mxu0
        %2643 = vmatprep.mubr.bf16.mxu0 %v2351
        %2644 = vmatmul.mubr.bf16.gmra.mrb[0].mxu0 %v2350
        %v2645 = vpop.f32.mrb[0].mxu0
        %v2646 = vadd.f32 0.0, %v2645
        %v2647 = vpop.f32.mrb[0].mxu0
        %v2648 = vpop.f32.mrb[0].mxu0
        %v2649 = vadd.f32 0.0, %v2648
        %v2650 = vpop.f32.mrb[0].mxu0
        %2651 = vmatprep.mubr.bf16.mxu0 %v2354
        %2652 = vmatmul.mubr.bf16.gmra.mrb[0].mxu0 %v2353
        %v2653 = vpop.f32.mrb[0].mxu0
        %v2654 = vadd.f32 0.0, %v2653
        %v2655 = vpop.f32.mrb[0].mxu0
        %v2656 = vpop.f32.mrb[0].mxu0
        %v2657 = vadd.f32 0.0, %v2656
        %v2658 = vpop.f32.mrb[0].mxu0
        %2659 = vmatprep.mubr.bf16.mxu0 %v2357
        %2660 = vmatmul.mubr.bf16.gmra.mrb[0].mxu0 %v2356
        %v2661 = vpop.f32.mrb[0].mxu0
        %v2662 = vadd.f32 0.0, %v2661
        %v2663 = vpop.f32.mrb[0].mxu0
        %v2664 = vpop.f32.mrb[0].mxu0
        %v2665 = vadd.f32 0.0, %v2664
        %v2666 = vpop.f32.mrb[0].mxu0
        %2667 = vmatprep.mubr.bf16.mxu0 %v2360
        %2668 = vmatmul.mubr.bf16.gmra.mrb[0].mxu0 %v2359
        %v2669 = vpop.f32.mrb[0].mxu0
        %v2670 = vadd.f32 0.0, %v2669
        %v2671 = vpop.f32.mrb[0].mxu0
        %v2672 = vpop.f32.mrb[0].mxu0
        %v2673 = vadd.f32 0.0, %v2672
        %v2674 = vpop.f32.mrb[0].mxu0
        %2675 = vmatprep.mubr.bf16.mxu0 %v2363
        %2676 = vmatmul.mubr.bf16.gmra.mrb[0].mxu0 %v2362
        %v2677 = vpop.f32.mrb[0].mxu0
        %v2678 = vadd.f32 0.0, %v2677
        %v2679 = vpop.f32.mrb[0].mxu0
        %v2680 = vpop.f32.mrb[0].mxu0
        %v2681 = vadd.f32 0.0, %v2680
        %v2682 = vpop.f32.mrb[0].mxu0
        %2683 = vmatprep.mubr.bf16.mxu0 %v2366
        %2684 = vmatmul.mubr.bf16.gmra.mrb[0].mxu0 %v2365
        %v2685 = vpop.f32.mrb[0].mxu0
        %v2686 = vadd.f32 0.0, %v2685
        %v2687 = vpop.f32.mrb[0].mxu0
        %v2688 = vpop.f32.mrb[0].mxu0
        %v2689 = vadd.f32 0.0, %v2688
        %v2690 = vpop.f32.mrb[0].mxu0
        %2691 = vmatprep.mubr.bf16.mxu0 %v2369
        %2692 = vmatmul.mubr.bf16.gmra.mrb[0].mxu0 %v2368
        %v2693 = vpop.f32.mrb[0].mxu0
        %v2694 = vadd.f32 0.0, %v2693
        %v2695 = vpop.f32.mrb[0].mxu0
        %v2696 = vpop.f32.mrb[0].mxu0
        %v2697 = vadd.f32 0.0, %v2696
        %v2698 = vpop.f32.mrb[0].mxu0
        %2699 = vmatprep.mubr.bf16.mxu0 %v2372
        %2700 = vmatmul.mubr.bf16.gmra.mrb[0].mxu0 %v2371
        %v2701 = vpop.f32.mrb[0].mxu0
        %v2702 = vadd.f32 0.0, %v2701
        %v2703 = vpop.f32.mrb[0].mxu0
        %v2704 = vpop.f32.mrb[0].mxu0
        %v2705 = vadd.f32 0.0, %v2704
        %v2706 = vpop.f32.mrb[0].mxu0
        %2707 = vmatprep.mubr.bf16.mxu0 %v2375
        %2708 = vmatmul.mubr.bf16.gmra.mrb[0].mxu0 %v2374
        %v2709 = vpop.f32.mrb[0].mxu0
        %v2710 = vadd.f32 0.0, %v2709
        %v2711 = vpop.f32.mrb[0].mxu0
        %v2712 = vpop.f32.mrb[0].mxu0
        %v2713 = vadd.f32 0.0, %v2712
        %v2714 = vpop.f32.mrb[0].mxu0
        %2715 = vmatprep.mubr.bf16.mxu0 %v2378
        %2716 = vmatmul.mubr.bf16.gmra.mrb[0].mxu0 %v2377
        %v2717 = vpop.f32.mrb[0].mxu0
        %v2718 = vadd.f32 0.0, %v2717
        %v2719 = vpop.f32.mrb[0].mxu0
        %v2720 = vpop.f32.mrb[0].mxu0
        %v2721 = vadd.f32 0.0, %v2720
        %v2722 = vpop.f32.mrb[0].mxu0
        %2723 = vmatprep.mubr.bf16.mxu0 %v2381
        %2724 = vmatmul.mubr.bf16.gmra.mrb[0].mxu0 %v2380
        %v2725 = vpop.f32.mrb[0].mxu0
        %v2726 = vadd.f32 0.0, %v2725
        %v2727 = vpop.f32.mrb[0].mxu0
        %v2728 = vpop.f32.mrb[0].mxu0
        %v2729 = vadd.f32 0.0, %v2728
        %v2730 = vpop.f32.mrb[0].mxu0
        %2731 = vmatprep.mubr.bf16.mxu0 %v2384
        %2732 = vmatmul.mubr.bf16.gmra.mrb[0].mxu0 %v2383
        %v2733 = vpop.f32.mrb[0].mxu0
        %v2734 = vadd.f32 0.0, %v2733
        %v2735 = vpop.f32.mrb[0].mxu0
        %v2736 = vpop.f32.mrb[0].mxu0
        %v2737 = vadd.f32 0.0, %v2736
        %v2738 = vpop.f32.mrb[0].mxu0
        %2739 = vdwg.mxu0
        %2740 = vmatprep.subr.bf16.mxu0 0
        %2741 = vmatpush1.bf16.msra.mxu0 %v2547
        %2742 = vmatprep.subr.bf16.mxu0 0
        %2743 = vmatpush1.bf16.msra.mxu0 %v2548
        %2744 = vmatprep.subr.bf16.mxu0 0
        %2745 = vmatpush1.bf16.msra.mxu0 %v2549
        %2746 = vmatprep.subr.bf16.mxu0 0
        %2747 = vmatpush1.bf16.msra.mxu0 %v2550
        %2748 = vmatprep.subr.bf16.mxu0 0
        %2749 = vmatpush1.bf16.msra.mxu0 %v2551
        %2750 = vmatprep.subr.bf16.mxu0 0
        %2751 = vmatpush1.bf16.msra.mxu0 %v2552
        %2752 = vmatprep.subr.bf16.mxu0 0
        %2753 = vmatpush1.bf16.msra.mxu0 %v2553
        %2754 = vmatprep.subr.bf16.mxu0 0
        %2755 = vmatpush1.bf16.msra.mxu0 %v2554
        %2756 = vmatprep.subr.bf16.mxu0 0
        %2757 = vmatpush1.bf16.msra.mxu0 0
        %2758 = vmatprep.subr.bf16.mxu0 0
        %2759 = vmatpush1.bf16.msra.mxu0 0
        %2760 = vmatprep.subr.bf16.mxu0 0
        %2761 = vmatpush1.bf16.msra.mxu0 0
        %2762 = vmatprep.subr.bf16.mxu0 0
        %2763 = vmatpush1.bf16.msra.mxu0 0
        %2764 = vmatprep.subr.bf16.mxu0 0
        %2765 = vmatpush1.bf16.msra.mxu0 0
        %2766 = vmatprep.subr.bf16.mxu0 0
        %2767 = vmatpush1.bf16.msra.mxu0 0
        %2768 = vmatprep.subr.bf16.mxu0 0
        %2769 = vmatpush1.bf16.msra.mxu0 0
        %2770 = vmatprep.subr.bf16.mxu0 0
        %2771 = vmatpush1.bf16.msra.mxu0 0
        %2772 = vmatprep.mubr.bf16.mxu0 0
        %2773 = vmatmul.mubr.bf16.gmra.mrb[0].mxu0 %v2340
        %v2774 = vpop.f32.mrb[0].mxu0
        %v2775 = vadd.f32 %v2614, %v2774
        %v2776 = vpop.f32.mrb[0].mxu0
        %v2777 = vpop.f32.mrb[0].mxu0
        %v2778 = vadd.f32 %v2617, %v2777
        %v2779 = vpop.f32.mrb[0].mxu0
        %2780 = vmatprep.mubr.bf16.mxu0 0
        %2781 = vmatmul.mubr.bf16.gmra.mrb[0].mxu0 %v2343
        %v2782 = vpop.f32.mrb[0].mxu0
        %v2783 = vadd.f32 %v2622, %v2782
        %v2784 = vpop.f32.mrb[0].mxu0
        %v2785 = vpop.f32.mrb[0].mxu0
        %v2786 = vadd.f32 %v2625, %v2785
        %v2787 = vpop.f32.mrb[0].mxu0
        %2788 = vmatprep.mubr.bf16.mxu0 0
        %2789 = vmatmul.mubr.bf16.gmra.mrb[0].mxu0 %v2346
        %v2790 = vpop.f32.mrb[0].mxu0
        %v2791 = vadd.f32 %v2630, %v2790
        %v2792 = vpop.f32.mrb[0].mxu0
        %v2793 = vpop.f32.mrb[0].mxu0
        %v2794 = vadd.f32 %v2633, %v2793
        %v2795 = vpop.f32.mrb[0].mxu0
        %2796 = vmatprep.mubr.bf16.mxu0 0
        %2797 = vmatmul.mubr.bf16.gmra.mrb[0].mxu0 %v2349
        %v2798 = vpop.f32.mrb[0].mxu0
        %v2799 = vadd.f32 %v2638, %v2798
        %v2800 = vpop.f32.mrb[0].mxu0
        %v2801 = vpop.f32.mrb[0].mxu0
        %v2802 = vadd.f32 %v2641, %v2801
        %v2803 = vpop.f32.mrb[0].mxu0
        %2804 = vmatprep.mubr.bf16.mxu0 0
        %2805 = vmatmul.mubr.bf16.gmra.mrb[0].mxu0 %v2352
        %v2806 = vpop.f32.mrb[0].mxu0
        %v2807 = vadd.f32 %v2646, %v2806
        %v2808 = vpop.f32.mrb[0].mxu0
        %v2809 = vpop.f32.mrb[0].mxu0
        %v2810 = vadd.f32 %v2649, %v2809
        %v2811 = vpop.f32.mrb[0].mxu0
        %2812 = vmatprep.mubr.bf16.mxu0 0
        %2813 = vmatmul.mubr.bf16.gmra.mrb[0].mxu0 %v2355
        %v2814 = vpop.f32.mrb[0].mxu0
        %v2815 = vadd.f32 %v2654, %v2814
        %v2816 = vpop.f32.mrb[0].mxu0
        %v2817 = vpop.f32.mrb[0].mxu0
        %v2818 = vadd.f32 %v2657, %v2817
        %v2819 = vpop.f32.mrb[0].mxu0
        %2820 = vmatprep.mubr.bf16.mxu0 0
        %2821 = vmatmul.mubr.bf16.gmra.mrb[0].mxu0 %v2358
        %v2822 = vpop.f32.mrb[0].mxu0
        %v2823 = vadd.f32 %v2662, %v2822
        %v2824 = vpop.f32.mrb[0].mxu0
        %v2825 = vpop.f32.mrb[0].mxu0
        %v2826 = vadd.f32 %v2665, %v2825
        %v2827 = vpop.f32.mrb[0].mxu0
        %2828 = vmatprep.mubr.bf16.mxu0 0
        %2829 = vmatmul.mubr.bf16.gmra.mrb[0].mxu0 %v2361
        %v2830 = vpop.f32.mrb[0].mxu0
        %v2831 = vadd.f32 %v2670, %v2830
        %v2832 = vpop.f32.mrb[0].mxu0
        %v2833 = vpop.f32.mrb[0].mxu0
        %v2834 = vadd.f32 %v2673, %v2833
        %v2835 = vpop.f32.mrb[0].mxu0
        %2836 = vmatprep.mubr.bf16.mxu0 0
        %2837 = vmatmul.mubr.bf16.gmra.mrb[0].mxu0 %v2364
        %v2838 = vpop.f32.mrb[0].mxu0
        %v2839 = vadd.f32 %v2678, %v2838
        %v2840 = vpop.f32.mrb[0].mxu0
        %v2841 = vpop.f32.mrb[0].mxu0
        %v2842 = vadd.f32 %v2681, %v2841
        %v2843 = vpop.f32.mrb[0].mxu0
        %2844 = vmatprep.mubr.bf16.mxu0 0
        %2845 = vmatmul.mubr.bf16.gmra.mrb[0].mxu0 %v2367
        %v2846 = vpop.f32.mrb[0].mxu0
        %v2847 = vadd.f32 %v2686, %v2846
        %v2848 = vpop.f32.mrb[0].mxu0
        %v2849 = vpop.f32.mrb[0].mxu0
        %v2850 = vadd.f32 %v2689, %v2849
        %v2851 = vpop.f32.mrb[0].mxu0
        %2852 = vmatprep.mubr.bf16.mxu0 0
        %2853 = vmatmul.mubr.bf16.gmra.mrb[0].mxu0 %v2370
        %v2854 = vpop.f32.mrb[0].mxu0
        %v2855 = vadd.f32 %v2694, %v2854
        %v2856 = vpop.f32.mrb[0].mxu0
        %v2857 = vpop.f32.mrb[0].mxu0
        %v2858 = vadd.f32 %v2697, %v2857
        %v2859 = vpop.f32.mrb[0].mxu0
        %2860 = vmatprep.mubr.bf16.mxu0 0
        %2861 = vmatmul.mubr.bf16.gmra.mrb[0].mxu0 %v2373
        %v2862 = vpop.f32.mrb[0].mxu0
        %v2863 = vadd.f32 %v2702, %v2862
        %v2864 = vpop.f32.mrb[0].mxu0
        %v2865 = vpop.f32.mrb[0].mxu0
        %v2866 = vadd.f32 %v2705, %v2865
        %v2867 = vpop.f32.mrb[0].mxu0
        %2868 = vmatprep.mubr.bf16.mxu0 0
        %2869 = vmatmul.mubr.bf16.gmra.mrb[0].mxu0 %v2376
        %v2870 = vpop.f32.mrb[0].mxu0
        %v2871 = vadd.f32 %v2710, %v2870
        %v2872 = vpop.f32.mrb[0].mxu0
        %v2873 = vpop.f32.mrb[0].mxu0
        %v2874 = vadd.f32 %v2713, %v2873
        %v2875 = vpop.f32.mrb[0].mxu0
        %2876 = vmatprep.mubr.bf16.mxu0 0
        %2877 = vmatmul.mubr.bf16.gmra.mrb[0].mxu0 %v2379
        %v2878 = vpop.f32.mrb[0].mxu0
        %v2879 = vadd.f32 %v2718, %v2878
        %v2880 = vpop.f32.mrb[0].mxu0
        %v2881 = vpop.f32.mrb[0].mxu0
        %v2882 = vadd.f32 %v2721, %v2881
        %v2883 = vpop.f32.mrb[0].mxu0
        %2884 = vmatprep.mubr.bf16.mxu0 0
        %2885 = vmatmul.mubr.bf16.gmra.mrb[0].mxu0 %v2382
        %v2886 = vpop.f32.mrb[0].mxu0
        %v2887 = vadd.f32 %v2726, %v2886
        %v2888 = vpop.f32.mrb[0].mxu0
        %v2889 = vpop.f32.mrb[0].mxu0
        %v2890 = vadd.f32 %v2729, %v2889
        %v2891 = vpop.f32.mrb[0].mxu0
        %2892 = vmatprep.mubr.bf16.mxu0 0
        %2893 = vmatmul.mubr.bf16.gmra.mrb[0].mxu0 %v2385
        %v2894 = vpop.f32.mrb[0].mxu0
        %v2895 = vadd.f32 %v2734, %v2894
        %v2896 = vpop.f32.mrb[0].mxu0
        %v2897 = vpop.f32.mrb[0].mxu0
        %v2898 = vadd.f32 %v2737, %v2897
        %v2899 = vpop.f32.mrb[0].mxu0
        %2900 = vdwg.mxu0
        %v2901 = vadd.f32 %v2211, %v2775
        %v2902 = vadd.f32 %v2214, %v2778
        %v2903 = vadd.f32 %v2219, %v2783
        %v2904 = vadd.f32 %v2222, %v2786
        %v2905 = vadd.f32 %v2227, %v2791
        %v2906 = vadd.f32 %v2230, %v2794
        %v2907 = vadd.f32 %v2235, %v2799
        %v2908 = vadd.f32 %v2238, %v2802
        %v2909 = vadd.f32 %v2243, %v2807
        %v2910 = vadd.f32 %v2246, %v2810
        %v2911 = vadd.f32 %v2251, %v2815
        %v2912 = vadd.f32 %v2254, %v2818
        %v2913 = vadd.f32 %v2259, %v2823
        %v2914 = vadd.f32 %v2262, %v2826
        %v2915 = vadd.f32 %v2267, %v2831
        %v2916 = vadd.f32 %v2270, %v2834
        %v2917 = vadd.f32 %v2275, %v2839
        %v2918 = vadd.f32 %v2278, %v2842
        %v2919 = vadd.f32 %v2283, %v2847
        %v2920 = vadd.f32 %v2286, %v2850
        %v2921 = vadd.f32 %v2291, %v2855
        %v2922 = vadd.f32 %v2294, %v2858
        %v2923 = vadd.f32 %v2299, %v2863
        %v2924 = vadd.f32 %v2302, %v2866
        %v2925 = vadd.f32 %v2307, %v2871
        %v2926 = vadd.f32 %v2310, %v2874
        %v2927 = vadd.f32 %v2315, %v2879
        %v2928 = vadd.f32 %v2318, %v2882
        %v2929 = vadd.f32 %v2323, %v2887
        %v2930 = vadd.f32 %v2326, %v2890
        %v2931 = vadd.f32 %v2331, %v2895
        %v2932 = vadd.f32 %v2334, %v2898
        %v2933 = vld [vmem:[#allocation11] sm:$0x1]
        %v2935 = vlaneseq
        %v2936 = vshrl.u32 %v2935, 7
        %v2937 = vsub.s32 0, %v2936
        %v2938 = vrot.slane %v2933, %v2937
        %v2940 = vadd.f32 %v2901, %v2938
        %v2941 = vadd.f32 %v2902, %v2938
        %v2942 = vadd.f32 %v2903, %v2938
        %v2943 = vadd.f32 %v2904, %v2938
        %v2944 = vadd.f32 %v2905, %v2938
        %v2945 = vadd.f32 %v2906, %v2938
        %v2946 = vadd.f32 %v2907, %v2938
        %v2947 = vadd.f32 %v2908, %v2938
        %v2948 = vadd.f32 %v2909, %v2938
        %v2949 = vadd.f32 %v2910, %v2938
        %v2950 = vadd.f32 %v2911, %v2938
        %v2951 = vadd.f32 %v2912, %v2938
        %v2952 = vadd.f32 %v2913, %v2938
        %v2953 = vadd.f32 %v2914, %v2938
        %v2954 = vadd.f32 %v2915, %v2938
        %v2955 = vadd.f32 %v2916, %v2938
        %v2956 = vadd.f32 %v2917, %v2938
        %v2957 = vadd.f32 %v2918, %v2938
        %v2958 = vadd.f32 %v2919, %v2938
        %v2959 = vadd.f32 %v2920, %v2938
        %v2960 = vadd.f32 %v2921, %v2938
        %v2961 = vadd.f32 %v2922, %v2938
        %v2962 = vadd.f32 %v2923, %v2938
        %v2963 = vadd.f32 %v2924, %v2938
        %v2964 = vadd.f32 %v2925, %v2938
        %v2965 = vadd.f32 %v2926, %v2938
        %v2966 = vadd.f32 %v2927, %v2938
        %v2967 = vadd.f32 %v2928, %v2938
        %v2968 = vadd.f32 %v2929, %v2938
        %v2969 = vadd.f32 %v2930, %v2938
        %v2970 = vadd.f32 %v2931, %v2938
        %v2971 = vadd.f32 %v2932, %v2938
        %v2972 = vxor.u32 %v2940, 2147483648
        %v2973 = vxor.u32 %v2941, 2147483648
        %v2974 = vxor.u32 %v2942, 2147483648
        %v2975 = vxor.u32 %v2943, 2147483648
        %v2976 = vxor.u32 %v2944, 2147483648
        %v2977 = vxor.u32 %v2945, 2147483648
        %v2978 = vxor.u32 %v2946, 2147483648
        %v2979 = vxor.u32 %v2947, 2147483648
        %v2980 = vxor.u32 %v2948, 2147483648
        %v2981 = vxor.u32 %v2949, 2147483648
        %v2982 = vxor.u32 %v2950, 2147483648
        %v2983 = vxor.u32 %v2951, 2147483648
        %v2984 = vxor.u32 %v2952, 2147483648
        %v2985 = vxor.u32 %v2953, 2147483648
        %v2986 = vxor.u32 %v2954, 2147483648
        %v2987 = vxor.u32 %v2955, 2147483648
        %v2988 = vxor.u32 %v2956, 2147483648
        %v2989 = vxor.u32 %v2957, 2147483648
        %v2990 = vxor.u32 %v2958, 2147483648
        %v2991 = vxor.u32 %v2959, 2147483648
        %v2992 = vxor.u32 %v2960, 2147483648
        %v2993 = vxor.u32 %v2961, 2147483648
        %v2994 = vxor.u32 %v2962, 2147483648
        %v2995 = vxor.u32 %v2963, 2147483648
        %v2996 = vxor.u32 %v2964, 2147483648
        %v2997 = vxor.u32 %v2965, 2147483648
        %v2998 = vxor.u32 %v2966, 2147483648
        %v2999 = vxor.u32 %v2967, 2147483648
        %v3000 = vxor.u32 %v2968, 2147483648
        %v3001 = vxor.u32 %v2969, 2147483648
        %v3002 = vxor.u32 %v2970, 2147483648
        %v3003 = vxor.u32 %v2971, 2147483648
        %v3004 = vmul.f32 %v2972, 1.442695
        %v3005 = vpow.pop %v3004
        %v3006 = vmul.f32 %v2973, 1.442695
        %v3007 = vpow.pop %v3006
        %v3008 = vmul.f32 %v2974, 1.442695
        %v3009 = vpow.pop %v3008
        %v3010 = vmul.f32 %v2975, 1.442695
        %v3011 = vpow.pop %v3010
        %v3012 = vmul.f32 %v2976, 1.442695
        %v3013 = vpow.pop %v3012
        %v3014 = vmul.f32 %v2977, 1.442695
        %v3015 = vpow.pop %v3014
        %v3016 = vmul.f32 %v2978, 1.442695
        %v3017 = vpow.pop %v3016
        %v3018 = vmul.f32 %v2979, 1.442695
        %v3019 = vpow.pop %v3018
        %v3020 = vmul.f32 %v2980, 1.442695
        %v3021 = vpow.pop %v3020
        %v3022 = vmul.f32 %v2981, 1.442695
        %v3023 = vpow.pop %v3022
        %v3024 = vmul.f32 %v2982, 1.442695
        %v3025 = vpow.pop %v3024
        %v3026 = vmul.f32 %v2983, 1.442695
        %v3027 = vpow.pop %v3026
        %v3028 = vmul.f32 %v2984, 1.442695
        %v3029 = vpow.pop %v3028
        %v3030 = vmul.f32 %v2985, 1.442695
        %v3031 = vpow.pop %v3030
        %v3032 = vmul.f32 %v2986, 1.442695
        %v3033 = vpow.pop %v3032
        %v3034 = vmul.f32 %v2987, 1.442695
        %v3035 = vpow.pop %v3034
        %v3036 = vmul.f32 %v2988, 1.442695
        %v3037 = vpow.pop %v3036
        %v3038 = vmul.f32 %v2989, 1.442695
        %v3039 = vpow.pop %v3038
        %v3040 = vmul.f32 %v2990, 1.442695
        %v3041 = vpow.pop %v3040
        %v3042 = vmul.f32 %v2991, 1.442695
        %v3043 = vpow.pop %v3042
        %v3044 = vmul.f32 %v2992, 1.442695
        %v3045 = vpow.pop %v3044
        %v3046 = vmul.f32 %v2993, 1.442695
        %v3047 = vpow.pop %v3046
        %v3048 = vmul.f32 %v2994, 1.442695
        %v3049 = vpow.pop %v3048
        %v3050 = vmul.f32 %v2995, 1.442695
        %v3051 = vpow.pop %v3050
        %v3052 = vmul.f32 %v2996, 1.442695
        %v3053 = vpow.pop %v3052
        %v3054 = vmul.f32 %v2997, 1.442695
        %v3055 = vpow.pop %v3054
        %v3056 = vmul.f32 %v2998, 1.442695
        %v3057 = vpow.pop %v3056
        %v3058 = vmul.f32 %v2999, 1.442695
        %v3059 = vpow.pop %v3058
        %v3060 = vmul.f32 %v3000, 1.442695
        %v3061 = vpow.pop %v3060
        %v3062 = vmul.f32 %v3001, 1.442695
        %v3063 = vpow.pop %v3062
        %v3064 = vmul.f32 %v3002, 1.442695
        %v3065 = vpow.pop %v3064
        %v3066 = vmul.f32 %v3003, 1.442695
        %v3067 = vpow.pop %v3066
        %v3068 = vadd.f32 %v3005, 1.0
        %v3069 = vadd.f32 %v3007, 1.0
        %v3070 = vadd.f32 %v3009, 1.0
        %v3071 = vadd.f32 %v3011, 1.0
        %v3072 = vadd.f32 %v3013, 1.0
        %v3073 = vadd.f32 %v3015, 1.0
        %v3074 = vadd.f32 %v3017, 1.0
        %v3075 = vadd.f32 %v3019, 1.0
        %v3076 = vadd.f32 %v3021, 1.0
        %v3077 = vadd.f32 %v3023, 1.0
        %v3078 = vadd.f32 %v3025, 1.0
        %v3079 = vadd.f32 %v3027, 1.0
        %v3080 = vadd.f32 %v3029, 1.0
        %v3081 = vadd.f32 %v3031, 1.0
        %v3082 = vadd.f32 %v3033, 1.0
        %v3083 = vadd.f32 %v3035, 1.0
        %v3084 = vadd.f32 %v3037, 1.0
        %v3085 = vadd.f32 %v3039, 1.0
        %v3086 = vadd.f32 %v3041, 1.0
        %v3087 = vadd.f32 %v3043, 1.0
        %v3088 = vadd.f32 %v3045, 1.0
        %v3089 = vadd.f32 %v3047, 1.0
        %v3090 = vadd.f32 %v3049, 1.0
        %v3091 = vadd.f32 %v3051, 1.0
        %v3092 = vadd.f32 %v3053, 1.0
        %v3093 = vadd.f32 %v3055, 1.0
        %v3094 = vadd.f32 %v3057, 1.0
        %v3095 = vadd.f32 %v3059, 1.0
        %v3096 = vadd.f32 %v3061, 1.0
        %v3097 = vadd.f32 %v3063, 1.0
        %v3098 = vadd.f32 %v3065, 1.0
        %v3099 = vadd.f32 %v3067, 1.0
        %v3100 = vrcp.pop %v3068
        %v3101 = vmul.f32 1.0, %v3100
        %v3102 = vrcp.pop %v3069
        %v3103 = vmul.f32 1.0, %v3102
        %v3104 = vrcp.pop %v3070
        %v3105 = vmul.f32 1.0, %v3104
        %v3106 = vrcp.pop %v3071
        %v3107 = vmul.f32 1.0, %v3106
        %v3108 = vrcp.pop %v3072
        %v3109 = vmul.f32 1.0, %v3108
        %v3110 = vrcp.pop %v3073
        %v3111 = vmul.f32 1.0, %v3110
        %v3112 = vrcp.pop %v3074
        %v3113 = vmul.f32 1.0, %v3112
        %v3114 = vrcp.pop %v3075
        %v3115 = vmul.f32 1.0, %v3114
        %v3116 = vrcp.pop %v3076
        %v3117 = vmul.f32 1.0, %v3116
        %v3118 = vrcp.pop %v3077
        %v3119 = vmul.f32 1.0, %v3118
        %v3120 = vrcp.pop %v3078
        %v3121 = vmul.f32 1.0, %v3120
        %v3122 = vrcp.pop %v3079
        %v3123 = vmul.f32 1.0, %v3122
        %v3124 = vrcp.pop %v3080
        %v3125 = vmul.f32 1.0, %v3124
        %v3126 = vrcp.pop %v3081
        %v3127 = vmul.f32 1.0, %v3126
        %v3128 = vrcp.pop %v3082
        %v3129 = vmul.f32 1.0, %v3128
        %v3130 = vrcp.pop %v3083
        %v3131 = vmul.f32 1.0, %v3130
        %v3132 = vrcp.pop %v3084
        %v3133 = vmul.f32 1.0, %v3132
        %v3134 = vrcp.pop %v3085
        %v3135 = vmul.f32 1.0, %v3134
        %v3136 = vrcp.pop %v3086
        %v3137 = vmul.f32 1.0, %v3136
        %v3138 = vrcp.pop %v3087
        %v3139 = vmul.f32 1.0, %v3138
        %v3140 = vrcp.pop %v3088
        %v3141 = vmul.f32 1.0, %v3140
        %v3142 = vrcp.pop %v3089
        %v3143 = vmul.f32 1.0, %v3142
        %v3144 = vrcp.pop %v3090
        %v3145 = vmul.f32 1.0, %v3144
        %v3146 = vrcp.pop %v3091
        %v3147 = vmul.f32 1.0, %v3146
        %v3148 = vrcp.pop %v3092
        %v3149 = vmul.f32 1.0, %v3148
        %v3150 = vrcp.pop %v3093
        %v3151 = vmul.f32 1.0, %v3150
        %v3152 = vrcp.pop %v3094
        %v3153 = vmul.f32 1.0, %v3152
        %v3154 = vrcp.pop %v3095
        %v3155 = vmul.f32 1.0, %v3154
        %v3156 = vrcp.pop %v3096
        %v3157 = vmul.f32 1.0, %v3156
        %v3158 = vrcp.pop %v3097
        %v3159 = vmul.f32 1.0, %v3158
        %v3160 = vrcp.pop %v3098
        %v3161 = vmul.f32 1.0, %v3160
        %v3162 = vrcp.pop %v3099
        %v3163 = vmul.f32 1.0, %v3162
        %v3164 = vmul.f32 %v2940, %v3101
        %v3165 = vmul.f32 %v2941, %v3103
        %v3166 = vmul.f32 %v2942, %v3105
        %v3167 = vmul.f32 %v2943, %v3107
        %v3168 = vmul.f32 %v2944, %v3109
        %v3169 = vmul.f32 %v2945, %v3111
        %v3170 = vmul.f32 %v2946, %v3113
        %v3171 = vmul.f32 %v2947, %v3115
        %v3172 = vmul.f32 %v2948, %v3117
        %v3173 = vmul.f32 %v2949, %v3119
        %v3174 = vmul.f32 %v2950, %v3121
        %v3175 = vmul.f32 %v2951, %v3123
        %v3176 = vmul.f32 %v2952, %v3125
        %v3177 = vmul.f32 %v2953, %v3127
        %v3178 = vmul.f32 %v2954, %v3129
        %v3179 = vmul.f32 %v2955, %v3131
        %v3180 = vmul.f32 %v2956, %v3133
        %v3181 = vmul.f32 %v2957, %v3135
        %v3182 = vmul.f32 %v2958, %v3137
        %v3183 = vmul.f32 %v2959, %v3139
        %v3184 = vmul.f32 %v2960, %v3141
        %v3185 = vmul.f32 %v2961, %v3143
        %v3186 = vmul.f32 %v2962, %v3145
        %v3187 = vmul.f32 %v2963, %v3147
        %v3188 = vmul.f32 %v2964, %v3149
        %v3189 = vmul.f32 %v2965, %v3151
        %v3190 = vmul.f32 %v2966, %v3153
        %v3191 = vmul.f32 %v2967, %v3155
        %v3192 = vmul.f32 %v2968, %v3157
        %v3193 = vmul.f32 %v2969, %v3159
        %v3194 = vmul.f32 %v2970, %v3161
        %v3195 = vmul.f32 %v2971, %v3163
        %v3196 = vld [vmem:[%s254] sm:$0xf]
        %v3197 = vld [vmem:[%s254 + $0x4] sm:$0xf]
        %v3198 = vld [vmem:[%s254 + $0x8] sm:$0xf]
        %v3199 = vld [vmem:[%s254 + $0xc] sm:$0xf]
        %v3200 = vld [vmem:[%s254 + $0x10] sm:$0xf]
        %v3201 = vld [vmem:[%s254 + $0x14] sm:$0xf]
        %v3202 = vld [vmem:[%s254 + $0x18] sm:$0xf]
        %v3203 = vld [vmem:[%s254 + $0x1c] sm:$0xf]
        %v3204 = vld [vmem:[%s254 + $0x20] sm:$0xf]
        %v3205 = vld [vmem:[%s254 + $0x24] sm:$0xf]
        %v3206 = vld [vmem:[%s254 + $0x28] sm:$0xf]
        %v3207 = vld [vmem:[%s254 + $0x2c] sm:$0xf]
        %v3208 = vld [vmem:[%s254 + $0x30] sm:$0xf]
        %v3209 = vld [vmem:[%s254 + $0x34] sm:$0xf]
        %v3210 = vld [vmem:[%s254 + $0x38] sm:$0xf]
        %v3211 = vld [vmem:[%s254 + $0x3c] sm:$0xf]
        %v3212 = vld [vmem:[%s254 + $0x40] sm:$0xf]
        %v3213 = vld [vmem:[%s254 + $0x44] sm:$0xf]
        %v3214 = vld [vmem:[%s254 + $0x48] sm:$0xf]
        %v3215 = vld [vmem:[%s254 + $0x4c] sm:$0xf]
        %v3216 = vld [vmem:[%s254 + $0x50] sm:$0xf]
        %v3217 = vld [vmem:[%s254 + $0x54] sm:$0xf]
        %v3218 = vld [vmem:[%s254 + $0x58] sm:$0xf]
        %v3219 = vld [vmem:[%s254 + $0x5c] sm:$0xf]
        %v3220 = vld [vmem:[%s254 + $0x60] sm:$0xf]
        %v3221 = vld [vmem:[%s254 + $0x64] sm:$0xf]
        %v3222 = vld [vmem:[%s254 + $0x68] sm:$0xf]
        %v3223 = vld [vmem:[%s254 + $0x6c] sm:$0xf]
        %v3224 = vld [vmem:[%s254 + $0x70] sm:$0xf]
        %v3225 = vld [vmem:[%s254 + $0x74] sm:$0xf]
        %v3226 = vld [vmem:[%s254 + $0x78] sm:$0xf]
        %v3227 = vld [vmem:[%s254 + $0x7c] sm:$0xf]
        %v3228 = vunpack.c.l.bf16 %v3196
        %v3229 = vunpack.c.l.bf16 %v3197
        %v3230 = vunpack.c.l.bf16 %v3198
        %v3231 = vunpack.c.l.bf16 %v3199
        %v3232 = vunpack.c.l.bf16 %v3200
        %v3233 = vunpack.c.l.bf16 %v3201
        %v3234 = vunpack.c.l.bf16 %v3202
        %v3235 = vunpack.c.l.bf16 %v3203
        %v3236 = vunpack.c.l.bf16 %v3204
        %v3237 = vunpack.c.l.bf16 %v3205
        %v3238 = vunpack.c.l.bf16 %v3206
        %v3239 = vunpack.c.l.bf16 %v3207
        %v3240 = vunpack.c.l.bf16 %v3208
        %v3241 = vunpack.c.l.bf16 %v3209
        %v3242 = vunpack.c.l.bf16 %v3210
        %v3243 = vunpack.c.l.bf16 %v3211
        %v3244 = vunpack.c.l.bf16 %v3212
        %v3245 = vunpack.c.l.bf16 %v3213
        %v3246 = vunpack.c.l.bf16 %v3214
        %v3247 = vunpack.c.l.bf16 %v3215
        %v3248 = vunpack.c.l.bf16 %v3216
        %v3249 = vunpack.c.l.bf16 %v3217
        %v3250 = vunpack.c.l.bf16 %v3218
        %v3251 = vunpack.c.l.bf16 %v3219
        %v3252 = vunpack.c.l.bf16 %v3220
        %v3253 = vunpack.c.l.bf16 %v3221
        %v3254 = vunpack.c.l.bf16 %v3222
        %v3255 = vunpack.c.l.bf16 %v3223
        %v3256 = vunpack.c.l.bf16 %v3224
        %v3257 = vunpack.c.l.bf16 %v3225
        %v3258 = vunpack.c.l.bf16 %v3226
        %v3259 = vunpack.c.l.bf16 %v3227
        %v3260 = vadd.f32 %v3164, %v3228
        %v3261 = vadd.f32 %v3165, %v3229
        %v3262 = vadd.f32 %v3166, %v3230
        %v3263 = vadd.f32 %v3167, %v3231
        %v3264 = vadd.f32 %v3168, %v3232
        %v3265 = vadd.f32 %v3169, %v3233
        %v3266 = vadd.f32 %v3170, %v3234
        %v3267 = vadd.f32 %v3171, %v3235
        %v3268 = vadd.f32 %v3172, %v3236
        %v3269 = vadd.f32 %v3173, %v3237
        %v3270 = vadd.f32 %v3174, %v3238
        %v3271 = vadd.f32 %v3175, %v3239
        %v3272 = vadd.f32 %v3176, %v3240
        %v3273 = vadd.f32 %v3177, %v3241
        %v3274 = vadd.f32 %v3178, %v3242
        %v3275 = vadd.f32 %v3179, %v3243
        %v3276 = vadd.f32 %v3180, %v3244
        %v3277 = vadd.f32 %v3181, %v3245
        %v3278 = vadd.f32 %v3182, %v3246
        %v3279 = vadd.f32 %v3183, %v3247
        %v3280 = vadd.f32 %v3184, %v3248
        %v3281 = vadd.f32 %v3185, %v3249
        %v3282 = vadd.f32 %v3186, %v3250
        %v3283 = vadd.f32 %v3187, %v3251
        %v3284 = vadd.f32 %v3188, %v3252
        %v3285 = vadd.f32 %v3189, %v3253
        %v3286 = vadd.f32 %v3190, %v3254
        %v3287 = vadd.f32 %v3191, %v3255
        %v3288 = vadd.f32 %v3192, %v3256
        %v3289 = vadd.f32 %v3193, %v3257
        %v3290 = vadd.f32 %v3194, %v3258
        %v3291 = vadd.f32 %v3195, %v3259
        %3292 = vst [vmem:[%s296] sm:$0xff] %v3260
        %3293 = vst [vmem:[%s296 + $0x8] sm:$0xff] %v3261
        %3294 = vst [vmem:[%s296 + $0x10] sm:$0xff] %v3262
        %3295 = vst [vmem:[%s296 + $0x18] sm:$0xff] %v3263
        %3296 = vst [vmem:[%s296 + $0x20] sm:$0xff] %v3264
        %3297 = vst [vmem:[%s296 + $0x28] sm:$0xff] %v3265
        %3298 = vst [vmem:[%s296 + $0x30] sm:$0xff] %v3266
        %3299 = vst [vmem:[%s296 + $0x38] sm:$0xff] %v3267
        %3300 = vst [vmem:[%s296 + $0x40] sm:$0xff] %v3268
        %3301 = vst [vmem:[%s296 + $0x48] sm:$0xff] %v3269
        %3302 = vst [vmem:[%s296 + $0x50] sm:$0xff] %v3270
        %3303 = vst [vmem:[%s296 + $0x58] sm:$0xff] %v3271
        %3304 = vst [vmem:[%s296 + $0x60] sm:$0xff] %v3272
        %3305 = vst [vmem:[%s296 + $0x68] sm:$0xff] %v3273
        %3306 = vst [vmem:[%s296 + $0x70] sm:$0xff] %v3274
        %3307 = vst [vmem:[%s296 + $0x78] sm:$0xff] %v3275
        %3308 = vst [vmem:[%s296 + $0x80] sm:$0xff] %v3276
        %3309 = vst [vmem:[%s296 + $0x88] sm:$0xff] %v3277
        %3310 = vst [vmem:[%s296 + $0x90] sm:$0xff] %v3278
        %3311 = vst [vmem:[%s296 + $0x98] sm:$0xff] %v3279
        %3312 = vst [vmem:[%s296 + $0xa0] sm:$0xff] %v3280
        %3313 = vst [vmem:[%s296 + $0xa8] sm:$0xff] %v3281
        %3314 = vst [vmem:[%s296 + $0xb0] sm:$0xff] %v3282
        %3315 = vst [vmem:[%s296 + $0xb8] sm:$0xff] %v3283
        %3316 = vst [vmem:[%s296 + $0xc0] sm:$0xff] %v3284
        %3317 = vst [vmem:[%s296 + $0xc8] sm:$0xff] %v3285
        %3318 = vst [vmem:[%s296 + $0xd0] sm:$0xff] %v3286
        %3319 = vst [vmem:[%s296 + $0xd8] sm:$0xff] %v3287
        %3320 = vst [vmem:[%s296 + $0xe0] sm:$0xff] %v3288
        %3321 = vst [vmem:[%s296 + $0xe8] sm:$0xff] %v3289
        %3322 = vst [vmem:[%s296 + $0xf0] sm:$0xff] %v3290
        %3323 = vst [vmem:[%s296 + $0xf8] sm:$0xff] %v3291
        %s3324 = sand.u32 %s142, 1
        %s3325 = scalar_lea.sflag [#allocation5], %s3324
        %s3326 = sand.u32 %s142, 1
        %s3327 = smul.addr %s3326, 256
        %s3328 = scalar_lea.vmem [#allocation12], %s3327
        // Predicated region
        $region61: #{bottleneck_forward.1} parent=39 // pred_check
          %p3329 = pneg %p152
        $region62: #{bottleneck_forward.1} parent=39 // pred_check_branch
          %3331 = sbr.rel (%p3329) target = $region64
        $region63: #{bottleneck_forward.1} parent=39 // pred_region
          %s3333 = ssub.s32 4096, 4096
          %3334 = vsyncadd %s3325, %s3333
          %s3335 = smul.addr %s24, 32
          %s3336 = smul.addr %s3335, 128
          %s3337 = scalar_lea.hbm %s5, %s3336
          %s3338 = sshll.u32 %s3328, 4
          %s3339 = int_to_ptr.vmem [resolvable:$true] %s3338
          %3344 = dma.vmem_to_hbm [thread:$0]  %s3339, 4096, %s3337, %s3325, 128, 128, 8
        $region64: #{bottleneck_forward.1} parent=39 // pred_fallthru
          _
      $region40: #{bottleneck_forward.1} parent=5 // pred_fallthru
        _
      %p3345 = scmp.le.s32.totalorder 2, %s19
      // Predicated region
      $region65: #{bottleneck_forward.1} parent=5 // pred_check
        %p3346 = pneg %p3345
      $region66: #{bottleneck_forward.1} parent=5 // pred_check_branch
        %3348 = sbr.rel (%p3346) target = $region68
      $region67: #{bottleneck_forward.1} parent=5 // pred_region
        %s3349 = ssub.s32 %s19, 2
        // Predicated region
        $region69: #{bottleneck_forward.1} parent=67 // pred_check
          %p3350 = pneg %p158
        $region70: #{bottleneck_forward.1} parent=67 // pred_check_branch
          %3352 = sbr.rel (%p3350) target = $region72
        $region71: #{bottleneck_forward.1} parent=67 // pred_region
          %s3353 = sand.u32 %s143, 1
          %s3354 = scalar_lea.sflag [#allocation5], %s3353
          %s3355 = sand.u32 %s143, 1
          %s3356 = smul.addr %s3355, 256
          %s3357 = scalar_lea.vmem [#allocation12], %s3356
          %3358 = dma.done %s3354, 4096
        $region72: #{bottleneck_forward.1} parent=67 // pred_fallthru
          _
      $region68: #{bottleneck_forward.1} parent=5 // pred_fallthru
        _
    $region6: #{bottleneck_forward.1} parent=1 // loop_footer
      %s23 = sadd.s32 1, %s19
    $region7: #{bottleneck_forward.1} parent=1 // loop_footer_branch
      %18 = sbr.rel target = $region3
    $region8: #{bottleneck_forward.1} parent=1 // loop_exit
      _
    %3359 = vsyncpa [#allocation4], 1
    %s3360 = scalar_lea.sflag [#allocation4], 1
    %3361 = vsyncpa %s3360, 1
    %3362 = vsyncpa [#allocation7], 1
    %3363 = vsyncpa [#allocation10], 1
    %3364 = vsyncpa [#allocation5], 1
    %s3365 = scalar_lea.sflag [#allocation5], 1
    %3366 = vsyncpa %s3365, 1

</llo_original>
